<compile_context>
chip_gen: v7x
topology: tpu7x:2x2x1
jax: 0.10.0
libtpu: 0.0.40
codegen_flags: <defaults>
</compile_context>

<pallas_src>
import numpy as np
import jax
import jax.numpy as jnp
from jax.experimental import pallas as pl
from jax.experimental.pallas import tpu as pltpu

H, W = 6, 7
HW = H * W                  # 42
C0, C1, C2 = 3, 32, 64
D0 = C0 * HW                # 126
D1 = C1 * HW                # 1344
D2 = C2 * HW                # 2688
N_ACT = 7
HID = 128
FEAT = D2 + N_ACT           # 2695

NT = 896                    # conv2/fc1 weight chunk (2688 = 3 * 896, 896 % 128 == 0)
NN = D2 // NT               # 3


def _round_up(x, m):
    return (x + m - 1) // m * m


def _build_shift_matrices():
    """S[t] @ v == zero-padded spatial shift of the flattened (H, W) grid by tap t."""
    S = np.zeros((9, HW, HW), dtype=np.float32)
    for dy in range(3):
        for dx in range(3):
            t = dy * 3 + dx
            for h in range(H):
                for w in range(W):
                    hs, ws = h + dy - 1, w + dx - 1
                    if 0 <= hs < H and 0 <= ws < W:
                        S[t, h * W + w, hs * W + ws] = 1.0
    return S


# ----------------------------- fused Pallas kernel -----------------------------

def critic_kernel(x0_ref, act_ref, a1_ref, b1_ref, a2_ref, b2_ref,
                  wfc_ref, bfc_ref, wv_ref, bv_ref, out_ref,
                  h1_s, acc_s):
    """Grid = (batch tiles, conv2-output chunks). Activations stay in VMEM."""
    n = pl.program_id(1)

    @pl.when(n == 0)
    def _():
        # conv1 as one dense batch-stacked matmul: (BT,126) @ (126,1344)
        h1_s[...] = jnp.maximum(
            jnp.dot(x0_ref[...], a1_ref[...],
                    preferred_element_type=jnp.float32) + b1_ref[...], 0.0)
        # fc1 accumulator starts with the action row-gather term + bias.
        acc_s[...] = act_ref[...] + bfc_ref[...]

    # conv2 chunk: (BT,1344) @ (1344,NT), columns already in NCHW-flatten order
    h2 = jnp.maximum(
        jnp.dot(h1_s[...], a2_ref[...],
                preferred_element_type=jnp.float32) + b2_ref[...], 0.0)
    # partial fc1 contraction over this chunk: (BT,NT) @ (NT,128)
    acc_s[...] += jnp.dot(h2, wfc_ref[...], preferred_element_type=jnp.float32)

    @pl.when(n == pl.num_programs(1) - 1)
    def _():
        h3 = jnp.maximum(acc_s[...], 0.0)
        # value head (128 -> 1) as a lane reduction instead of an N=1 MXU pass
        out_ref[...] = (jnp.sum(h3 * wv_ref[...], axis=-1, keepdims=True)
                        + bv_ref[...])


# ----------------------------- wrapper -----------------------------

def critic_forward(state, action, params):
    B = state.shape[0]
    # One-hot + the (intentionally buggy, as in the torch code) channel view:
    # view(-1,3,6,7) followed by the NCHW flatten is exactly the row-major
    # flatten of the (6,7,3) one-hot, so no transpose is needed.
    one_hot = jax.nn.one_hot(state.astype(jnp.int32), 3, dtype=jnp.float32)
    x0 = one_hot.reshape(B, D0)                                    # (B, 126)
    act_term = params["w_act"][action.astype(jnp.int32)]           # (B, 128)

    BT = min(256, _round_up(B, 8))
    Bp = _round_up(B, BT)
    if Bp != B:
        x0 = jnp.pad(x0, ((0, Bp - B), (0, 0)))
        act_term = jnp.pad(act_term, ((0, Bp - B), (0, 0)))

    out = pl.pallas_call(
        critic_kernel,
        out_shape=jax.ShapeDtypeStruct((Bp, 1), jnp.float32),
        grid_spec=pltpu.PrefetchScalarGridSpec(
            num_scalar_prefetch=0,
            grid=(Bp // BT, NN),
            in_specs=[
                pl.BlockSpec((BT, D0), lambda b, n: (b, 0)),     # one-hot board
                pl.BlockSpec((BT, HID), lambda b, n: (b, 0)),    # action term
                pl.BlockSpec((D0, D1), lambda b, n: (0, 0)),     # A1 (resident)
                pl.BlockSpec((1, D1), lambda b, n: (0, 0)),      # conv1 bias
                pl.BlockSpec((D1, NT), lambda b, n: (0, n)),     # A2 chunk (streamed)
                pl.BlockSpec((1, NT), lambda b, n: (0, n)),      # conv2 bias chunk
                pl.BlockSpec((NT, HID), lambda b, n: (n, 0)),    # fc1 weight chunk
                pl.BlockSpec((1, HID), lambda b, n: (0, 0)),     # fc1 bias
                pl.BlockSpec((1, HID), lambda b, n: (0, 0)),     # value weight row
                pl.BlockSpec((1, 1), lambda b, n: (0, 0)),       # value bias
            ],
            out_specs=pl.BlockSpec((BT, 1), lambda b, n: (b, 0)),
            scratch_shapes=[
                pltpu.VMEM((BT, D1), jnp.float32),   # relu(conv1) for the batch tile
                pltpu.VMEM((BT, HID), jnp.float32),  # fc1 pre-activation accumulator
            ],
        ),
        compiler_params=pltpu.CompilerParams(
            dimension_semantics=("parallel", "arbitrary"),
            vmem_limit_bytes=40 * 1024 * 1024,
        ),
    )(x0, act_term,
      params["A1"], params["b1v"], params["A2"], params["b2v"],
      params["Wfc"], params["bfc"], params["wv"], params["bv"])
    return out[:B]


# ----------------------------- params + reference -----------------------------

def init_params(key):
    ks = jax.random.split(key, 8)
    w1 = jax.random.normal(ks[0], (C1, C0, 3, 3), jnp.float32) * 0.10
    b1 = jax.random.normal(ks[1], (C1,), jnp.float32) * 0.10
    w2 = jax.random.normal(ks[2], (C2, C1, 3, 3), jnp.float32) * 0.05
    b2 = jax.random.normal(ks[3], (C2,), jnp.float32) * 0.05
    fc1_w = jax.random.normal(ks[4], (HID, FEAT), jnp.float32) * 0.02
    fc1_b = jax.random.normal(ks[5], (HID,), jnp.float32) * 0.02
    fcv_w = jax.random.normal(ks[6], (1, HID), jnp.float32) * 0.05
    fcv_b = jax.random.normal(ks[7], (1,), jnp.float32) * 0.05

    # Fold each SAME-padded 3x3 conv into a dense per-sample linear operator
    # with row/column order = NCHW flatten (c*42 + h*7 + w), so conv2's output
    # is already in the order fc1 expects.
    S = jnp.asarray(_build_shift_matrices())                       # (9, 42, 42)
    w1_taps = jnp.transpose(w1, (2, 3, 1, 0)).reshape(9, C0, C1)   # [t, cin, cout]
    w2_taps = jnp.transpose(w2, (2, 3, 1, 0)).reshape(9, C1, C2)
    A1 = jnp.einsum('tqp,tio->ipoq', S, w1_taps).reshape(D0, D1)   # (126, 1344)
    A2 = jnp.einsum('tqp,tio->ipoq', S, w2_taps).reshape(D1, D2)   # (1344, 2688)
    b1v = jnp.repeat(b1, HW).reshape(1, D1)
    b2v = jnp.repeat(b2, HW).reshape(1, D2)

    return dict(
        w1=w1, b1=b1, w2=w2, b2=b2,
        fc1_w=fc1_w, fc1_b=fc1_b, fcv_w=fcv_w, fcv_b=fcv_b,
        A1=A1, b1v=b1v, A2=A2, b2v=b2v,
        Wfc=fc1_w[:, :D2].T,          # (2688, 128) conv part, lane-aligned K
        w_act=fc1_w[:, D2:].T,        # (7, 128) action one-hot columns
        bfc=fc1_b.reshape(1, HID),
        wv=fcv_w.reshape(1, HID),
        bv=fcv_b.reshape(1, 1),
    )


def reference_forward(state, action, params):
    B = state.shape[0]
    oh = jax.nn.one_hot(state.astype(jnp.int32), 3, dtype=jnp.float32)
    x = oh.reshape(B, 3, H, W)
    x = jax.lax.conv_general_dilated(
        x, params["w1"], (1, 1), "SAME",
        dimension_numbers=("NCHW", "OIHW", "NCHW")) + params["b1"][None, :, None, None]
    x = jnp.maximum(x, 0.0)
    x = jax.lax.conv_general_dilated(
        x, params["w2"], (1, 1), "SAME",
        dimension_numbers=("NCHW", "OIHW", "NCHW")) + params["b2"][None, :, None, None]
    x = jnp.maximum(x, 0.0)
    flat = x.reshape(B, -1)
    a_oh = jax.nn.one_hot(action.astype(jnp.int32), N_ACT, dtype=jnp.float32)
    feat = jnp.concatenate([flat, a_oh], axis=1)
    h = jnp.maximum(feat @ params["fc1_w"].T + params["fc1_b"], 0.0)
    return h @ params["fcv_w"].T + params["fcv_b"]


if __name__ == "__main__":
    key = jax.random.PRNGKey(0)
    pkey, skey, akey = jax.random.split(key, 3)
    params = init_params(pkey)

    B = 2
    state = jax.random.randint(skey, (B, H, W), 0, 3, dtype=jnp.int32)   # board cells {0,1,2}
    action = jax.random.randint(akey, (B,), 0, N_ACT, dtype=jnp.int32)   # column {0..6}

    value = critic_forward(state, action, params)
    value = jax.block_until_ready(value)

    ref = reference_forward(state, action, params)
    assert value.shape == (B, 1)
    assert np.allclose(np.asarray(value), np.asarray(ref), atol=1e-3, rtol=1e-3), (value, ref)
    print("KERNEL_OK")
</pallas_src>

<mosaic_0001>
module attributes {stable_mosaic.version = 11 : i64} {
  func.func @critic_kernel(%arg0: i32, %arg1: i32, %arg2: memref<8x126xf32, #tpu.memory_space<vmem>>, %arg3: memref<8x128xf32, #tpu.memory_space<vmem>>, %arg4: memref<126x1344xf32, #tpu.memory_space<vmem>>, %arg5: memref<1x1344xf32, #tpu.memory_space<vmem>>, %arg6: memref<1344x896xf32, #tpu.memory_space<vmem>>, %arg7: memref<1x896xf32, #tpu.memory_space<vmem>>, %arg8: memref<896x128xf32, #tpu.memory_space<vmem>>, %arg9: memref<1x128xf32, #tpu.memory_space<vmem>>, %arg10: memref<1x128xf32, #tpu.memory_space<vmem>>, %arg11: memref<1x1xf32, #tpu.memory_space<vmem>>, %arg12: memref<8x1xf32, #tpu.memory_space<vmem>>, %arg13: memref<8x1344xf32, #tpu.memory_space<vmem>>, %arg14: memref<8x128xf32, #tpu.memory_space<vmem>>) attributes {dimension_semantics = [#tpu.dimension_semantics<parallel>, #tpu.dimension_semantics<arbitrary>], iteration_bounds = array<i64: 1, 3>, scalar_prefetch = 0 : i64, scratch_operands = 2 : i64, tpu.core_type = #tpu.core_type<tc>, window_params = [{transform_indices = @transform_0, window_bounds = array<i64: 8, 126>}, {transform_indices = @transform_1, window_bounds = array<i64: 8, 128>}, {pipeline_mode = #tpu.pipeline_mode<synchronous>, transform_indices = @transform_2, window_bounds = array<i64: 126, 1344>}, {pipeline_mode = #tpu.pipeline_mode<synchronous>, transform_indices = @transform_3, window_bounds = array<i64: 1, 1344>}, {transform_indices = @transform_4, window_bounds = array<i64: 1344, 896>}, {transform_indices = @transform_5, window_bounds = array<i64: 1, 896>}, {transform_indices = @transform_6, window_bounds = array<i64: 896, 128>}, {pipeline_mode = #tpu.pipeline_mode<synchronous>, transform_indices = @transform_7, window_bounds = array<i64: 1, 128>}, {pipeline_mode = #tpu.pipeline_mode<synchronous>, transform_indices = @transform_8, window_bounds = array<i64: 1, 128>}, {pipeline_mode = #tpu.pipeline_mode<synchronous>, transform_indices = @transform_9, window_bounds = array<i64: 1, 1>}, {transform_indices = @transform_10, window_bounds = array<i64: 8, 1>}]} {
    %c0_i32 = arith.constant 0 : i32
    %0 = arith.cmpi eq, %arg1, %c0_i32 : i32
    %1 = arith.extui %0 : i1 to i32
    %c0_i32_0 = arith.constant 0 : i32
    %2 = arith.cmpi ne, %1, %c0_i32_0 : i32
    scf.if %2 {
      %c0_15 = arith.constant 0 : index
      %c0_16 = arith.constant 0 : index
      %19 = vector.load %arg2[%c0_15, %c0_16] : memref<8x126xf32, #tpu.memory_space<vmem>>, vector<8x126xf32>
      %c0_17 = arith.constant 0 : index
      %c0_18 = arith.constant 0 : index
      %20 = vector.load %arg4[%c0_17, %c0_18] : memref<126x1344xf32, #tpu.memory_space<vmem>>, vector<126x1344xf32>
      %cst_19 = arith.constant dense<0.000000e+00> : vector<8x1344xf32>
      %21 = tpu.matmul %19, %20, %cst_19 {dimension_numbers = #tpu.dot_dimension_numbers<[1], [0], [0], [1], [0, 0, 1, 1], [], []>} : vector<8x126xf32>, vector<126x1344xf32>, vector<8x1344xf32> -> vector<8x1344xf32>
      %c0_20 = arith.constant 0 : index
      %c0_21 = arith.constant 0 : index
      %22 = vector.load %arg5[%c0_20, %c0_21] : memref<1x1344xf32, #tpu.memory_space<vmem>>, vector<1x1344xf32>
      %23 = vector.broadcast %22 : vector<1x1344xf32> to vector<8x1344xf32>
      %24 = arith.addf %21, %23 : vector<8x1344xf32>
      %cst_22 = arith.constant 0.000000e+00 : f32
      %25 = vector.broadcast %cst_22 : f32 to vector<8x1344xf32>
      %26 = arith.maximumf %24, %25 : vector<8x1344xf32>
      %c0_23 = arith.constant 0 : index
      %c0_24 = arith.constant 0 : index
      %27 = vector.load %arg13[%c0_23, %c0_24] : memref<8x1344xf32, #tpu.memory_space<vmem>>, vector<8x1344xf32>
      tpu.vector_store %arg13[%c0_23, %c0_24], %26 {strides = array<i32>} : memref<8x1344xf32, #tpu.memory_space<vmem>>, vector<8x1344xf32>,
      %c0_25 = arith.constant 0 : index
      %c0_26 = arith.constant 0 : index
      %28 = vector.load %arg3[%c0_25, %c0_26] : memref<8x128xf32, #tpu.memory_space<vmem>>, vector<8x128xf32>
      %c0_27 = arith.constant 0 : index
      %c0_28 = arith.constant 0 : index
      %29 = vector.load %arg9[%c0_27, %c0_28] : memref<1x128xf32, #tpu.memory_space<vmem>>, vector<1x128xf32>
      %30 = vector.broadcast %29 : vector<1x128xf32> to vector<8x128xf32>
      %31 = arith.addf %28, %30 : vector<8x128xf32>
      %c0_29 = arith.constant 0 : index
      %c0_30 = arith.constant 0 : index
      %32 = vector.load %arg14[%c0_29, %c0_30] : memref<8x128xf32, #tpu.memory_space<vmem>>, vector<8x128xf32>
      tpu.vector_store %arg14[%c0_29, %c0_30], %31 {strides = array<i32>} : memref<8x128xf32, #tpu.memory_space<vmem>>, vector<8x128xf32>,
    } else {
    }
    %c0 = arith.constant 0 : index
    %c0_1 = arith.constant 0 : index
    %3 = vector.load %arg13[%c0, %c0_1] : memref<8x1344xf32, #tpu.memory_space<vmem>>, vector<8x1344xf32>
    %c0_2 = arith.constant 0 : index
    %c0_3 = arith.constant 0 : index
    %4 = vector.load %arg6[%c0_2, %c0_3] : memref<1344x896xf32, #tpu.memory_space<vmem>>, vector<1344x896xf32>
    %cst = arith.constant dense<0.000000e+00> : vector<8x896xf32>
    %5 = tpu.matmul %3, %4, %cst {dimension_numbers = #tpu.dot_dimension_numbers<[1], [0], [0], [1], [0, 0, 1, 1], [], []>} : vector<8x1344xf32>, vector<1344x896xf32>, vector<8x896xf32> -> vector<8x896xf32>
    %c0_4 = arith.constant 0 : index
    %c0_5 = arith.constant 0 : index
    %6 = vector.load %arg7[%c0_4, %c0_5] : memref<1x896xf32, #tpu.memory_space<vmem>>, vector<1x896xf32>
    %7 = vector.broadcast %6 : vector<1x896xf32> to vector<8x896xf32>
    %8 = arith.addf %5, %7 : vector<8x896xf32>
    %cst_6 = arith.constant 0.000000e+00 : f32
    %9 = vector.broadcast %cst_6 : f32 to vector<8x896xf32>
    %10 = arith.maximumf %8, %9 : vector<8x896xf32>
    %c0_7 = arith.constant 0 : index
    %c0_8 = arith.constant 0 : index
    %11 = vector.load %arg14[%c0_7, %c0_8] : memref<8x128xf32, #tpu.memory_space<vmem>>, vector<8x128xf32>
    %c0_9 = arith.constant 0 : index
    %c0_10 = arith.constant 0 : index
    %12 = vector.load %arg8[%c0_9, %c0_10] : memref<896x128xf32, #tpu.memory_space<vmem>>, vector<896x128xf32>
    %cst_11 = arith.constant dense<0.000000e+00> : vector<8x128xf32>
    %13 = tpu.matmul %10, %12, %cst_11 {dimension_numbers = #tpu.dot_dimension_numbers<[1], [0], [0], [1], [0, 0, 1, 1], [], []>} : vector<8x896xf32>, vector<896x128xf32>, vector<8x128xf32> -> vector<8x128xf32>
    %14 = arith.addf %11, %13 : vector<8x128xf32>
    %c0_12 = arith.constant 0 : index
    %c0_13 = arith.constant 0 : index
    %15 = vector.load %arg14[%c0_12, %c0_13] : memref<8x128xf32, #tpu.memory_space<vmem>>, vector<8x128xf32>
    tpu.vector_store %arg14[%c0_12, %c0_13], %14 {strides = array<i32>} : memref<8x128xf32, #tpu.memory_space<vmem>>, vector<8x128xf32>,
    %c2_i32 = arith.constant 2 : i32
    %16 = arith.cmpi eq, %arg1, %c2_i32 : i32
    %17 = arith.extui %16 : i1 to i32
    %c0_i32_14 = arith.constant 0 : i32
    %18 = arith.cmpi ne, %17, %c0_i32_14 : i32
    scf.if %18 {
      %c0_15 = arith.constant 0 : index
      %c0_16 = arith.constant 0 : index
      %19 = vector.load %arg14[%c0_15, %c0_16] : memref<8x128xf32, #tpu.memory_space<vmem>>, vector<8x128xf32>
      %cst_17 = arith.constant 0.000000e+00 : f32
      %20 = vector.broadcast %cst_17 : f32 to vector<8x128xf32>
      %21 = arith.maximumf %19, %20 : vector<8x128xf32>
      %c0_18 = arith.constant 0 : index
      %c0_19 = arith.constant 0 : index
      %22 = vector.load %arg10[%c0_18, %c0_19] : memref<1x128xf32, #tpu.memory_space<vmem>>, vector<1x128xf32>
      %23 = vector.broadcast %22 : vector<1x128xf32> to vector<8x128xf32>
      %24 = arith.mulf %21, %23 : vector<8x128xf32>
      %cst_20 = arith.constant dense<0.000000e+00> : vector<8xf32>
      %25 = vector.multi_reduction <add>, %24, %cst_20 [1] : vector<8x128xf32> to vector<8xf32>
      %26 = vector.shape_cast %25 : vector<8xf32> to vector<8x1xf32>
      %c0_21 = arith.constant 0 : index
      %c0_22 = arith.constant 0 : index
      %27 = vector.load %arg11[%c0_21, %c0_22] : memref<1x1xf32, #tpu.memory_space<vmem>>, vector<1x1xf32>
      %28 = vector.broadcast %27 : vector<1x1xf32> to vector<8x1xf32>
      %29 = arith.addf %26, %28 : vector<8x1xf32>
      %c0_23 = arith.constant 0 : index
      %c0_24 = arith.constant 0 : index
      %30 = vector.load %arg12[%c0_23, %c0_24] : memref<8x1xf32, #tpu.memory_space<vmem>>, vector<8x1xf32>
      tpu.vector_store %arg12[%c0_23, %c0_24], %29 {strides = array<i32>} : memref<8x1xf32, #tpu.memory_space<vmem>>, vector<8x1xf32>,
    } else {
    }
    return
  }
  func.func @transform_0(%arg0: i32, %arg1: i32) -> (i32, i32) {
    %c0_i32 = arith.constant 0 : i32
    %c0_i32_0 = arith.constant 0 : i32
    return %arg0, %c0_i32 : i32, i32
  }
  func.func @transform_1(%arg0: i32, %arg1: i32) -> (i32, i32) {
    %c0_i32 = arith.constant 0 : i32
    %c0_i32_0 = arith.constant 0 : i32
    return %arg0, %c0_i32 : i32, i32
  }
  func.func @transform_2(%arg0: i32, %arg1: i32) -> (i32, i32) {
    %c0_i32 = arith.constant 0 : i32
    %c0_i32_0 = arith.constant 0 : i32
    %c0_i32_1 = arith.constant 0 : i32
    return %c0_i32, %c0_i32_0 : i32, i32
  }
  func.func @transform_3(%arg0: i32, %arg1: i32) -> (i32, i32) {
    %c0_i32 = arith.constant 0 : i32
    %c0_i32_0 = arith.constant 0 : i32
    %c0_i32_1 = arith.constant 0 : i32
    return %c0_i32, %c0_i32_0 : i32, i32
  }
  func.func @transform_4(%arg0: i32, %arg1: i32) -> (i32, i32) {
    %c0_i32 = arith.constant 0 : i32
    %c0_i32_0 = arith.constant 0 : i32
    return %c0_i32, %arg1 : i32, i32
  }
  func.func @transform_5(%arg0: i32, %arg1: i32) -> (i32, i32) {
    %c0_i32 = arith.constant 0 : i32
    %c0_i32_0 = arith.constant 0 : i32
    return %c0_i32, %arg1 : i32, i32
  }
  func.func @transform_6(%arg0: i32, %arg1: i32) -> (i32, i32) {
    %c0_i32 = arith.constant 0 : i32
    %c0_i32_0 = arith.constant 0 : i32
    return %arg1, %c0_i32 : i32, i32
  }
  func.func @transform_7(%arg0: i32, %arg1: i32) -> (i32, i32) {
    %c0_i32 = arith.constant 0 : i32
    %c0_i32_0 = arith.constant 0 : i32
    %c0_i32_1 = arith.constant 0 : i32
    return %c0_i32, %c0_i32_0 : i32, i32
  }
  func.func @transform_8(%arg0: i32, %arg1: i32) -> (i32, i32) {
    %c0_i32 = arith.constant 0 : i32
    %c0_i32_0 = arith.constant 0 : i32
    %c0_i32_1 = arith.constant 0 : i32
    return %c0_i32, %c0_i32_0 : i32, i32
  }
  func.func @transform_9(%arg0: i32, %arg1: i32) -> (i32, i32) {
    %c0_i32 = arith.constant 0 : i32
    %c0_i32_0 = arith.constant 0 : i32
    %c0_i32_1 = arith.constant 0 : i32
    return %c0_i32, %c0_i32_0 : i32, i32
  }
  func.func @transform_10(%arg0: i32, %arg1: i32) -> (i32, i32) {
    %c0_i32 = arith.constant 0 : i32
    %c0_i32_0 = arith.constant 0 : i32
    return %arg0, %c0_i32 : i32, i32
  }
}

</mosaic_0001>

<llo_original>
// kernel: tpu_custom_call.1
$region0: #{tpu_custom_call.1}
  #allocation0 [shape = 'u32[]', space=smem, size = 0x4, offset = 0x4, fixed_abs, tag = 'smem constant byte address 0x4 - core index']
  #allocation1 [shape = 'u32[144,128]{1,0:T(1,128)}', space=vmem, size = 0x12000, scoped, tag = 'internal scratch']
  #allocation2 [shape = 'f32[8,1344]{1,0:T(8,128)}', space=vmem, size = 0xb000, scoped, tag = 'scratch operand']
  #allocation3 [shape = 'f32[8,128]{1,0:T(8,128)}', space=vmem, size = 0x1000, scoped, tag = 'scratch operand']
  #allocation4 [shape = 'f32[1,1]{1,0:T(1,128)S(1)}', space=vmem, size = 0x200, scoped, tag = 'scoped memory for tpu_custom_call.1']
  %s0 = inlined_call_operand.hbm [shape: f32[8,126], index: 0, kind: input, shape index: {}]
  %s1 = inlined_call_operand.hbm [shape: f32[8,128], index: 1, kind: input, shape index: {}]
  %s2 = inlined_call_operand.vmem [shape: f32[126,1344], index: 2, kind: input, shape index: {}]
  %s3 = inlined_call_operand.hbm [shape: f32[1,1344], index: 3, kind: input, shape index: {}]
  %s4 = inlined_call_operand.hbm [shape: f32[1344,2688], index: 4, kind: input, shape index: {}]
  %s5 = inlined_call_operand.hbm [shape: f32[1,2688], index: 5, kind: input, shape index: {}]
  %s6 = inlined_call_operand.hbm [shape: f32[2688,128], index: 6, kind: input, shape index: {}]
  %s7 = inlined_call_operand.hbm [shape: f32[1,128], index: 7, kind: input, shape index: {}]
  %s8 = inlined_call_operand.hbm [shape: f32[1,128], index: 8, kind: input, shape index: {}]
  %s9 = inlined_call_operand.<no memory space> [shape: f32[1,1], index: 9, kind: input, shape index: {}]
  %s10 = inlined_call_operand.vmem [shape: f32[8,1], index: 10, kind: output, shape index: {}]
  %s11 = sld [smem:[#allocation0]]
  $region113: #{tpu_custom_call.1} parent=0
    _
  %s13 = ssub.s32 1, %s11
  %s14 = scalar_select 0, %s13, %s11
  %v15 = vstv %s9
  %16 = vst [vmem:[#allocation4] sm:$0x1] %v15
  $region1: #{tpu_custom_call.1} parent=0
    #allocation5 [shape = 'u8[4096]{0}', space=vmem, size = 0x1000, scoped, tag = 'input window, operand 0, single buffered']
    #allocation6 [shape = 's32[2]{0}', space=sflag, size = 0x8, scoped, tag = 'scoped memory for tpu_custom_call.1']
    #allocation7 [shape = 'u8[4096]{0}', space=vmem, size = 0x1000, scoped, tag = 'input window, operand 1, single buffered']
    #allocation8 [shape = 's32[1]{0}', space=sflag, size = 0x4, scoped, tag = 'scoped memory for tpu_custom_call.1']
    #allocation9 [shape = 'u8[5632]{0}', space=vmem, size = 0x1800, scoped, tag = 'input window, operand 3, single buffered']
    #allocation10 [shape = 'u8[9633792]{0}', space=vmem, size = 0x930000, scoped, tag = 'input window, operand 4']
    #allocation11 [shape = 's32[2]{0}', space=sflag, size = 0x8, scoped, tag = 'scoped memory for tpu_custom_call.1']
    #allocation12 [shape = 'u8[7168]{0}', space=vmem, size = 0x1c00, scoped, tag = 'input window, operand 5']
    #allocation13 [shape = 'u8[917504]{0}', space=vmem, size = 0xe0000, scoped, tag = 'input window, operand 6']
    #allocation14 [shape = 's32[2]{0}', space=sflag, size = 0x8, scoped, tag = 'scoped memory for tpu_custom_call.1']
    #allocation15 [shape = 'u8[512]{0}', space=vmem, size = 0x400, scoped, tag = 'input window, operand 7, single buffered']
    #allocation16 [shape = 'u8[512]{0}', space=vmem, size = 0x400, scoped, tag = 'input window, operand 8, single buffered']
    #allocation17 [shape = 's32[1]{0}', space=sflag, size = 0x4, scoped, tag = 'scoped memory for tpu_custom_call.1']
    %17 = vsyncpa [#allocation6], 0
    %18 = vsyncpa [#allocation8], 0
    %19 = vsyncpa [#allocation11], 0
    %s20 = scalar_lea.sflag [#allocation11], 1
    %21 = vsyncpa %s20, 0
    %22 = vsyncpa [#allocation14], 0
    %s23 = scalar_lea.sflag [#allocation14], 1
    %24 = vsyncpa %s23, 0
    %25 = vsyncpa [#allocation17], 0
    loop: start=0, step=1, limit=5
    $region2: #{tpu_custom_call.1} parent=1 // loop_pre_header
      _
    $region3: #{tpu_custom_call.1} parent=1 // loop_header
      %s27 = sphi 0, %s31
      %p28 = scmp.ge.s32.totalorder %s27, 5
      %s34 = sphi 0, %s46
      %s35 = sphi 0, %s42
      %s36 = sphi 0, %s34
      %s37 = sphi 0, %s35
      %s38 = sphi 0, %s36
      %s39 = sphi 0, %s37
      %s49 = sphi 0, %s51
      %s52 = sphi 0, %s49
      %s53 = sphi 0, %s52
      %s69 = sphi 0, %s53
      %s75 = sphi 0, %s77
      %s78 = sphi 0, %s75
      %s79 = sphi 0, %s78
      %s95 = sphi 0, %s79
      %s99 = sphi 0, %s99
      %s101 = sphi 0, %s99
      %s102 = sphi 0, %s101
      %s116 = sphi 0, %s102
      %s120 = sphi 0, %s120
      %s122 = sphi 0, %s120
      %s123 = sphi 0, %s122
      %s137 = sphi 0, %s123
      %s143 = sphi 0, %s145
      %s146 = sphi 0, %s143
      %s147 = sphi 0, %s146
      %s163 = sphi 0, %s147
      %s169 = sphi 0, %s171
      %s172 = sphi 0, %s169
      %s173 = sphi 0, %s172
      %s189 = sphi 0, %s173
      %s195 = sphi 0, %s197
      %s198 = sphi 0, %s195
      %s199 = sphi 0, %s198
      %s215 = sphi 0, %s199
      %s219 = sphi 0, %s219
      %s221 = sphi 0, %s219
      %s222 = sphi 0, %s221
      %s236 = sphi 0, %s222
      %s240 = sphi 0, %s240
      %s242 = sphi 0, %s240
      %s243 = sphi 0, %s242
      %s257 = sphi 0, %s243
      %s261 = sphi 0, %s261
      %s263 = sphi 0, %s261
      %s264 = sphi 0, %s263
      %s278 = sphi 0, %s264
      %s284 = sphi 0, %s286
      %s287 = sphi 0, %s284
      %s288 = sphi 0, %s287
      %s304 = sphi 0, %s288
    $region4: #{tpu_custom_call.1} parent=1 // loop_header_branch
      %30 = sbr.rel (%p28) target = $region8
    $region5: #{tpu_custom_call.1} parent=1 // loop_body
      %s32 = ssub.s32 %s27, 1
      %s33 = ssub.s32 %s27, 2
      %s40 = sadd.s32 1, %s35
      %p41 = scmp.ge.s32.totalorder %s40, 3
      %s42 = scalar_select %p41, 0, %s40
      %s43 = sadd.s32 1, %s34
      %s44 = scalar_select %p41, %s43, %s34
      %p45 = scmp.ge.s32.totalorder %s44, 1
      %s46 = scalar_select %p45, 0, %s44
      %s47 = ssub.s32 %s34, %s46
      %p48 = scmp.eq.s32.totalorder %s47, 0
      %s50 = sadd.s32 %s49, 1
      %s51 = scalar_select %p48, %s49, %s50
      %p54 = pneg %p48
      %p55 = scmp.eq.s32.totalorder %s27, 2
      %p56 = por %p54, %p55
      %p57 = scmp.ne.s32.totalorder %s49, %s52
      %p58 = scmp.eq.s32.totalorder %s27, 0
      %p59 = por %p57, %p58
      %p60 = scmp.ne.s32.totalorder %s49, %s52
      %p61 = scmp.eq.s32.totalorder %s32, 2
      %p62 = por %p60, %p61
      %p63 = scmp.ne.s32.totalorder %s52, %s53
      %p64 = scmp.eq.s32.totalorder %s32, 0
      %p65 = por %p63, %p64
      %p66 = scmp.ne.s32.totalorder %s52, %s53
      %p67 = scmp.eq.s32.totalorder %s33, 2
      %p68 = por %p66, %p67
      %p70 = scmp.ne.s32.totalorder %s53, %s69
      %p71 = scmp.eq.s32.totalorder %s33, 0
      %p72 = por %p70, %p71
      %s73 = ssub.s32 %s34, %s46
      %p74 = scmp.eq.s32.totalorder %s73, 0
      %s76 = sadd.s32 %s75, 1
      %s77 = scalar_select %p74, %s75, %s76
      %p80 = pneg %p74
      %p81 = scmp.eq.s32.totalorder %s27, 2
      %p82 = por %p80, %p81
      %p83 = scmp.ne.s32.totalorder %s75, %s78
      %p84 = scmp.eq.s32.totalorder %s27, 0
      %p85 = por %p83, %p84
      %p86 = scmp.ne.s32.totalorder %s75, %s78
      %p87 = scmp.eq.s32.totalorder %s32, 2
      %p88 = por %p86, %p87
      %p89 = scmp.ne.s32.totalorder %s78, %s79
      %p90 = scmp.eq.s32.totalorder %s32, 0
      %p91 = por %p89, %p90
      %p92 = scmp.ne.s32.totalorder %s78, %s79
      %p93 = scmp.eq.s32.totalorder %s33, 2
      %p94 = por %p92, %p93
      %p96 = scmp.ne.s32.totalorder %s79, %s95
      %p97 = scmp.eq.s32.totalorder %s33, 0
      %p98 = por %p96, %p97
      %s100 = sadd.s32 %s99, 1
      %p103 = scmp.eq.s32.totalorder %s27, 2
      %p104 = scmp.ne.s32.totalorder %s99, %s101
      %p105 = scmp.eq.s32.totalorder %s27, 0
      %p106 = por %p104, %p105
      %p107 = scmp.ne.s32.totalorder %s99, %s101
      %p108 = scmp.eq.s32.totalorder %s32, 2
      %p109 = por %p107, %p108
      %p110 = scmp.ne.s32.totalorder %s101, %s102
      %p111 = scmp.eq.s32.totalorder %s32, 0
      %p112 = por %p110, %p111
      %p113 = scmp.ne.s32.totalorder %s101, %s102
      %p114 = scmp.eq.s32.totalorder %s33, 2
      %p115 = por %p113, %p114
      %p117 = scmp.ne.s32.totalorder %s102, %s116
      %p118 = scmp.eq.s32.totalorder %s33, 0
      %p119 = por %p117, %p118
      %s121 = sadd.s32 %s120, 1
      %p124 = scmp.eq.s32.totalorder %s27, 2
      %p125 = scmp.ne.s32.totalorder %s120, %s122
      %p126 = scmp.eq.s32.totalorder %s27, 0
      %p127 = por %p125, %p126
      %p128 = scmp.ne.s32.totalorder %s120, %s122
      %p129 = scmp.eq.s32.totalorder %s32, 2
      %p130 = por %p128, %p129
      %p131 = scmp.ne.s32.totalorder %s122, %s123
      %p132 = scmp.eq.s32.totalorder %s32, 0
      %p133 = por %p131, %p132
      %p134 = scmp.ne.s32.totalorder %s122, %s123
      %p135 = scmp.eq.s32.totalorder %s33, 2
      %p136 = por %p134, %p135
      %p138 = scmp.ne.s32.totalorder %s123, %s137
      %p139 = scmp.eq.s32.totalorder %s33, 0
      %p140 = por %p138, %p139
      %s141 = ssub.s32 %s35, %s42
      %p142 = scmp.eq.s32.totalorder %s141, 0
      %s144 = sadd.s32 %s143, 1
      %s145 = scalar_select %p142, %s143, %s144
      %p148 = pneg %p142
      %p149 = scmp.eq.s32.totalorder %s27, 2
      %p150 = por %p148, %p149
      %p151 = scmp.ne.s32.totalorder %s143, %s146
      %p152 = scmp.eq.s32.totalorder %s27, 0
      %p153 = por %p151, %p152
      %p154 = scmp.ne.s32.totalorder %s143, %s146
      %p155 = scmp.eq.s32.totalorder %s32, 2
      %p156 = por %p154, %p155
      %p157 = scmp.ne.s32.totalorder %s146, %s147
      %p158 = scmp.eq.s32.totalorder %s32, 0
      %p159 = por %p157, %p158
      %p160 = scmp.ne.s32.totalorder %s146, %s147
      %p161 = scmp.eq.s32.totalorder %s33, 2
      %p162 = por %p160, %p161
      %p164 = scmp.ne.s32.totalorder %s147, %s163
      %p165 = scmp.eq.s32.totalorder %s33, 0
      %p166 = por %p164, %p165
      %s167 = ssub.s32 %s35, %s42
      %p168 = scmp.eq.s32.totalorder %s167, 0
      %s170 = sadd.s32 %s169, 1
      %s171 = scalar_select %p168, %s169, %s170
      %p174 = pneg %p168
      %p175 = scmp.eq.s32.totalorder %s27, 2
      %p176 = por %p174, %p175
      %p177 = scmp.ne.s32.totalorder %s169, %s172
      %p178 = scmp.eq.s32.totalorder %s27, 0
      %p179 = por %p177, %p178
      %p180 = scmp.ne.s32.totalorder %s169, %s172
      %p181 = scmp.eq.s32.totalorder %s32, 2
      %p182 = por %p180, %p181
      %p183 = scmp.ne.s32.totalorder %s172, %s173
      %p184 = scmp.eq.s32.totalorder %s32, 0
      %p185 = por %p183, %p184
      %p186 = scmp.ne.s32.totalorder %s172, %s173
      %p187 = scmp.eq.s32.totalorder %s33, 2
      %p188 = por %p186, %p187
      %p190 = scmp.ne.s32.totalorder %s173, %s189
      %p191 = scmp.eq.s32.totalorder %s33, 0
      %p192 = por %p190, %p191
      %s193 = ssub.s32 %s35, %s42
      %p194 = scmp.eq.s32.totalorder %s193, 0
      %s196 = sadd.s32 %s195, 1
      %s197 = scalar_select %p194, %s195, %s196
      %p200 = pneg %p194
      %p201 = scmp.eq.s32.totalorder %s27, 2
      %p202 = por %p200, %p201
      %p203 = scmp.ne.s32.totalorder %s195, %s198
      %p204 = scmp.eq.s32.totalorder %s27, 0
      %p205 = por %p203, %p204
      %p206 = scmp.ne.s32.totalorder %s195, %s198
      %p207 = scmp.eq.s32.totalorder %s32, 2
      %p208 = por %p206, %p207
      %p209 = scmp.ne.s32.totalorder %s198, %s199
      %p210 = scmp.eq.s32.totalorder %s32, 0
      %p211 = por %p209, %p210
      %p212 = scmp.ne.s32.totalorder %s198, %s199
      %p213 = scmp.eq.s32.totalorder %s33, 2
      %p214 = por %p212, %p213
      %p216 = scmp.ne.s32.totalorder %s199, %s215
      %p217 = scmp.eq.s32.totalorder %s33, 0
      %p218 = por %p216, %p217
      %s220 = sadd.s32 %s219, 1
      %p223 = scmp.eq.s32.totalorder %s27, 2
      %p224 = scmp.ne.s32.totalorder %s219, %s221
      %p225 = scmp.eq.s32.totalorder %s27, 0
      %p226 = por %p224, %p225
      %p227 = scmp.ne.s32.totalorder %s219, %s221
      %p228 = scmp.eq.s32.totalorder %s32, 2
      %p229 = por %p227, %p228
      %p230 = scmp.ne.s32.totalorder %s221, %s222
      %p231 = scmp.eq.s32.totalorder %s32, 0
      %p232 = por %p230, %p231
      %p233 = scmp.ne.s32.totalorder %s221, %s222
      %p234 = scmp.eq.s32.totalorder %s33, 2
      %p235 = por %p233, %p234
      %p237 = scmp.ne.s32.totalorder %s222, %s236
      %p238 = scmp.eq.s32.totalorder %s33, 0
      %p239 = por %p237, %p238
      %s241 = sadd.s32 %s240, 1
      %p244 = scmp.eq.s32.totalorder %s27, 2
      %p245 = scmp.ne.s32.totalorder %s240, %s242
      %p246 = scmp.eq.s32.totalorder %s27, 0
      %p247 = por %p245, %p246
      %p248 = scmp.ne.s32.totalorder %s240, %s242
      %p249 = scmp.eq.s32.totalorder %s32, 2
      %p250 = por %p248, %p249
      %p251 = scmp.ne.s32.totalorder %s242, %s243
      %p252 = scmp.eq.s32.totalorder %s32, 0
      %p253 = por %p251, %p252
      %p254 = scmp.ne.s32.totalorder %s242, %s243
      %p255 = scmp.eq.s32.totalorder %s33, 2
      %p256 = por %p254, %p255
      %p258 = scmp.ne.s32.totalorder %s243, %s257
      %p259 = scmp.eq.s32.totalorder %s33, 0
      %p260 = por %p258, %p259
      %s262 = sadd.s32 %s261, 1
      %p265 = scmp.eq.s32.totalorder %s27, 2
      %p266 = scmp.ne.s32.totalorder %s261, %s263
      %p267 = scmp.eq.s32.totalorder %s27, 0
      %p268 = por %p266, %p267
      %p269 = scmp.ne.s32.totalorder %s261, %s263
      %p270 = scmp.eq.s32.totalorder %s32, 2
      %p271 = por %p269, %p270
      %p272 = scmp.ne.s32.totalorder %s263, %s264
      %p273 = scmp.eq.s32.totalorder %s32, 0
      %p274 = por %p272, %p273
      %p275 = scmp.ne.s32.totalorder %s263, %s264
      %p276 = scmp.eq.s32.totalorder %s33, 2
      %p277 = por %p275, %p276
      %p279 = scmp.ne.s32.totalorder %s264, %s278
      %p280 = scmp.eq.s32.totalorder %s33, 0
      %p281 = por %p279, %p280
      %s282 = ssub.s32 %s34, %s46
      %p283 = scmp.eq.s32.totalorder %s282, 0
      %s285 = sadd.s32 %s284, 1
      %s286 = scalar_select %p283, %s284, %s285
      %p289 = pneg %p283
      %p290 = scmp.eq.s32.totalorder %s27, 2
      %p291 = por %p289, %p290
      %p292 = scmp.ne.s32.totalorder %s284, %s287
      %p293 = scmp.eq.s32.totalorder %s27, 0
      %p294 = por %p292, %p293
      %p295 = scmp.ne.s32.totalorder %s284, %s287
      %p296 = scmp.eq.s32.totalorder %s32, 2
      %p297 = por %p295, %p296
      %p298 = scmp.ne.s32.totalorder %s287, %s288
      %p299 = scmp.eq.s32.totalorder %s32, 0
      %p300 = por %p298, %p299
      %p301 = scmp.ne.s32.totalorder %s287, %s288
      %p302 = scmp.eq.s32.totalorder %s33, 2
      %p303 = por %p301, %p302
      %p305 = scmp.ne.s32.totalorder %s288, %s304
      %p306 = scmp.eq.s32.totalorder %s33, 0
      %p307 = por %p305, %p306
      %p308 = scmp.le.s32.totalorder 1, %s27
      %p309 = scmp.lt.s32.totalorder %s27, 4
      %p310 = pnand %p308, %p309
      %p311 = pneg %p310
      // Predicated region
      $region9: #{tpu_custom_call.1} parent=5 // pred_check
        _
      $region10: #{tpu_custom_call.1} parent=5 // pred_check_branch
        %313 = sbr.rel (%p310) target = $region12
      $region11: #{tpu_custom_call.1} parent=5 // pred_region
        %s314 = ssub.s32 %s27, 1
        // Predicated region
        $region13: #{tpu_custom_call.1} parent=11 // pred_check
          %p315 = pneg %p65
        $region14: #{tpu_custom_call.1} parent=11 // pred_check_branch
          %317 = sbr.rel (%p315) target = $region16
        $region15: #{tpu_custom_call.1} parent=11 // pred_region
          %s319 = ssub.s32 128, 128
          %320 = vsyncadd [#allocation6], %s319
          %s321 = smul.addr %s36, 128
          %s322 = scalar_lea.hbm %s0, %s321
          %s324 = sshll.u32 [#allocation5], 4
          %s325 = int_to_ptr.vmem [resolvable:$true] %s324
          %327 = dma.hbm_to_vmem [thread:$0]  %s322, 128, %s325, [#allocation6]
        $region16: #{tpu_custom_call.1} parent=11 // pred_fallthru
          _
        // Predicated region
        $region17: #{tpu_custom_call.1} parent=11 // pred_check
          %p328 = pneg %p91
        $region18: #{tpu_custom_call.1} parent=11 // pred_check_branch
          %330 = sbr.rel (%p328) target = $region20
        $region19: #{tpu_custom_call.1} parent=11 // pred_region
          %s332 = ssub.s32 128, 128
          %333 = vsyncadd [#allocation8], %s332
          %s334 = smul.addr %s36, 128
          %s335 = scalar_lea.hbm %s1, %s334
          %s337 = sshll.u32 [#allocation7], 4
          %s338 = int_to_ptr.vmem [resolvable:$true] %s337
          %340 = dma.hbm_to_vmem [thread:$0]  %s335, 128, %s338, [#allocation8]
        $region20: #{tpu_custom_call.1} parent=11 // pred_fallthru
          _
        // Predicated region
        $region21: #{tpu_custom_call.1} parent=11 // pred_check
          %p341 = pneg %p112
        $region22: #{tpu_custom_call.1} parent=11 // pred_check_branch
          %343 = sbr.rel (%p341) target = $region24
        $region23: #{tpu_custom_call.1} parent=11 // pred_region
          _
        $region24: #{tpu_custom_call.1} parent=11 // pred_fallthru
          _
        // Predicated region
        $region25: #{tpu_custom_call.1} parent=11 // pred_check
          %p344 = pneg %p133
        $region26: #{tpu_custom_call.1} parent=11 // pred_check_branch
          %346 = sbr.rel (%p344) target = $region28
        $region27: #{tpu_custom_call.1} parent=11 // pred_region
          %s348 = ssub.s32 176, 176
          %349 = vsyncadd [#allocation8], %s348
          %s351 = sshll.u32 [#allocation9], 4
          %s352 = int_to_ptr.vmem [resolvable:$true] %s351
          %354 = dma.hbm_to_vmem [thread:$0]  %s3, 176, %s352, [#allocation8]
        $region28: #{tpu_custom_call.1} parent=11 // pred_fallthru
          _
        // Predicated region
        $region29: #{tpu_custom_call.1} parent=11 // pred_check
          %p355 = pneg %p232
        $region30: #{tpu_custom_call.1} parent=11 // pred_check_branch
          %357 = sbr.rel (%p355) target = $region32
        $region31: #{tpu_custom_call.1} parent=11 // pred_region
          %s359 = ssub.s32 16, 16
          %360 = vsyncadd [#allocation14], %s359
          %s362 = sshll.u32 [#allocation15], 4
          %s363 = int_to_ptr.vmem [resolvable:$true] %s362
          %365 = dma.hbm_to_vmem [thread:$0]  %s7, 16, %s363, [#allocation14]
        $region32: #{tpu_custom_call.1} parent=11 // pred_fallthru
          _
        // Predicated region
        $region33: #{tpu_custom_call.1} parent=11 // pred_check
          %p366 = pneg %p253
        $region34: #{tpu_custom_call.1} parent=11 // pred_check_branch
          %368 = sbr.rel (%p366) target = $region36
        $region35: #{tpu_custom_call.1} parent=11 // pred_region
          %s370 = ssub.s32 16, 16
          %371 = vsyncadd [#allocation17], %s370
          %s373 = sshll.u32 [#allocation16], 4
          %s374 = int_to_ptr.vmem [resolvable:$true] %s373
          %376 = dma.hbm_to_vmem [thread:$0]  %s8, 16, %s374, [#allocation17]
        $region36: #{tpu_custom_call.1} parent=11 // pred_fallthru
          _
        // Predicated region
        $region37: #{tpu_custom_call.1} parent=11 // pred_check
          %p377 = pneg %p274
        $region38: #{tpu_custom_call.1} parent=11 // pred_check_branch
          %379 = sbr.rel (%p377) target = $region40
        $region39: #{tpu_custom_call.1} parent=11 // pred_region
          _
        $region40: #{tpu_custom_call.1} parent=11 // pred_fallthru
          _
      $region12: #{tpu_custom_call.1} parent=5 // pred_fallthru
        _
      %p380 = scmp.lt.s32.totalorder %s27, 3
      // Predicated region
      $region41: #{tpu_custom_call.1} parent=5 // pred_check
        %p381 = pneg %p380
      $region42: #{tpu_custom_call.1} parent=5 // pred_check_branch
        %383 = sbr.rel (%p381) target = $region44
      $region43: #{tpu_custom_call.1} parent=5 // pred_region
        // Predicated region
        $region45: #{tpu_custom_call.1} parent=43 // pred_check
          %p384 = pneg %p153
        $region46: #{tpu_custom_call.1} parent=43 // pred_check_branch
          %386 = sbr.rel (%p384) target = $region48
        $region47: #{tpu_custom_call.1} parent=43 // pred_region
          %s387 = sand.u32 %s27, 1
          %s388 = scalar_lea.sflag [#allocation11], %s387
          %s389 = sand.u32 %s143, 1
          %s390 = smul.addr %s389, 9408
          %s391 = scalar_lea.vmem [#allocation10], %s390
          %s392 = smul.u32 7, %s35
          %s394 = ssub.s32 150528, 150528
          %395 = vsyncadd %s388, %s394
          %s396 = smul.addr %s392, 128
          %s397 = scalar_lea.hbm %s4, %s396
          %s398 = sshll.u32 %s391, 4
          %s399 = int_to_ptr.vmem [resolvable:$true] %s398
          %404 = dma.hbm_to_vmem [thread:$0]  %s397, 150528, %s399, %s388, 2688, 896, 56
        $region48: #{tpu_custom_call.1} parent=43 // pred_fallthru
          _
        // Predicated region
        $region49: #{tpu_custom_call.1} parent=43 // pred_check
          %p405 = pneg %p179
        $region50: #{tpu_custom_call.1} parent=43 // pred_check_branch
          %407 = sbr.rel (%p405) target = $region52
        $region51: #{tpu_custom_call.1} parent=43 // pred_region
          %s408 = sand.u32 %s27, 1
          %s409 = scalar_lea.sflag [#allocation11], %s408
          %s410 = sand.u32 %s169, 1
          %s411 = smul.addr %s410, 7
          %s412 = scalar_lea.vmem [#allocation12], %s411
          %s413 = smul.u32 7, %s35
          %s415 = ssub.s32 112, 112
          %416 = vsyncadd %s409, %s415
          %s417 = smul.addr %s413, 16
          %s418 = scalar_lea.hbm %s5, %s417
          %s420 = sshll.u32 %s412, 4
          %s421 = int_to_ptr.vmem [resolvable:$true] %s420
          %423 = dma.hbm_to_vmem [thread:$0]  %s418, 112, %s421, %s409
        $region52: #{tpu_custom_call.1} parent=43 // pred_fallthru
          _
        // Predicated region
        $region53: #{tpu_custom_call.1} parent=43 // pred_check
          %p424 = pneg %p205
        $region54: #{tpu_custom_call.1} parent=43 // pred_check_branch
          %426 = sbr.rel (%p424) target = $region56
        $region55: #{tpu_custom_call.1} parent=43 // pred_region
          %s427 = sand.u32 %s27, 1
          %s428 = scalar_lea.sflag [#allocation14], %s427
          %s429 = sand.u32 %s195, 1
          %s430 = smul.addr %s429, 896
          %s431 = scalar_lea.vmem [#allocation13], %s430
          %s432 = smul.u32 112, %s35
          %s434 = ssub.s32 14336, 14336
          %435 = vsyncadd %s428, %s434
          %s436 = smul.addr %s432, 128
          %s437 = scalar_lea.hbm %s6, %s436
          %s438 = sshll.u32 %s431, 4
          %s439 = int_to_ptr.vmem [resolvable:$true] %s438
          %444 = dma.hbm_to_vmem [thread:$0]  %s437, 14336, %s439, %s428, 128, 128, 8
        $region56: #{tpu_custom_call.1} parent=43 // pred_fallthru
          _
      $region44: #{tpu_custom_call.1} parent=5 // pred_fallthru
        _
      %p445 = scmp.le.s32.totalorder 1, %s27
      %p446 = scmp.lt.s32.totalorder %s27, 4
      %p447 = pnand %p445, %p446
      %p448 = pneg %p447
      // Predicated region
      $region57: #{tpu_custom_call.1} parent=5 // pred_check
        _
      $region58: #{tpu_custom_call.1} parent=5 // pred_check_branch
        %450 = sbr.rel (%p447) target = $region60
      $region59: #{tpu_custom_call.1} parent=5 // pred_region
        %s451 = ssub.s32 %s27, 1
        // Predicated region
        $region61: #{tpu_custom_call.1} parent=59 // pred_check
          %p452 = pneg %p65
        $region62: #{tpu_custom_call.1} parent=59 // pred_check_branch
          %454 = sbr.rel (%p452) target = $region64
        $region63: #{tpu_custom_call.1} parent=59 // pred_region
          %455 = dma.done [#allocation6], 128
        $region64: #{tpu_custom_call.1} parent=59 // pred_fallthru
          _
        // Predicated region
        $region65: #{tpu_custom_call.1} parent=59 // pred_check
          %p456 = pneg %p91
        $region66: #{tpu_custom_call.1} parent=59 // pred_check_branch
          %458 = sbr.rel (%p456) target = $region68
        $region67: #{tpu_custom_call.1} parent=59 // pred_region
          %459 = dma.done [#allocation8], 128
        $region68: #{tpu_custom_call.1} parent=59 // pred_fallthru
          _
        // Predicated region
        $region69: #{tpu_custom_call.1} parent=59 // pred_check
          %p460 = pneg %p133
        $region70: #{tpu_custom_call.1} parent=59 // pred_check_branch
          %462 = sbr.rel (%p460) target = $region72
        $region71: #{tpu_custom_call.1} parent=59 // pred_region
          %463 = dma.done [#allocation8], 176
        $region72: #{tpu_custom_call.1} parent=59 // pred_fallthru
          _
        %s464 = sand.u32 %s32, 1
        %s465 = scalar_lea.sflag [#allocation11], %s464
        %s466 = sand.u32 %s146, 1
        %s467 = smul.addr %s466, 9408
        %s468 = scalar_lea.vmem [#allocation10], %s467
        // Predicated region
        $region73: #{tpu_custom_call.1} parent=59 // pred_check
          %p469 = pneg %p159
        $region74: #{tpu_custom_call.1} parent=59 // pred_check_branch
          %471 = sbr.rel (%p469) target = $region76
        $region75: #{tpu_custom_call.1} parent=59 // pred_region
          %472 = dma.done %s465, 150528
        $region76: #{tpu_custom_call.1} parent=59 // pred_fallthru
          _
        %s473 = sand.u32 %s32, 1
        %s474 = scalar_lea.sflag [#allocation11], %s473
        %s475 = sand.u32 %s172, 1
        %s476 = smul.addr %s475, 7
        %s477 = scalar_lea.vmem [#allocation12], %s476
        // Predicated region
        $region77: #{tpu_custom_call.1} parent=59 // pred_check
          %p478 = pneg %p185
        $region78: #{tpu_custom_call.1} parent=59 // pred_check_branch
          %480 = sbr.rel (%p478) target = $region80
        $region79: #{tpu_custom_call.1} parent=59 // pred_region
          %481 = dma.done %s474, 112
        $region80: #{tpu_custom_call.1} parent=59 // pred_fallthru
          _
        %s482 = sand.u32 %s32, 1
        %s483 = scalar_lea.sflag [#allocation14], %s482
        %s484 = sand.u32 %s198, 1
        %s485 = smul.addr %s484, 896
        %s486 = scalar_lea.vmem [#allocation13], %s485
        // Predicated region
        $region81: #{tpu_custom_call.1} parent=59 // pred_check
          %p487 = pneg %p211
        $region82: #{tpu_custom_call.1} parent=59 // pred_check_branch
          %489 = sbr.rel (%p487) target = $region84
        $region83: #{tpu_custom_call.1} parent=59 // pred_region
          %490 = dma.done %s483, 14336
        $region84: #{tpu_custom_call.1} parent=59 // pred_fallthru
          _
        // Predicated region
        $region85: #{tpu_custom_call.1} parent=59 // pred_check
          %p491 = pneg %p232
        $region86: #{tpu_custom_call.1} parent=59 // pred_check_branch
          %493 = sbr.rel (%p491) target = $region88
        $region87: #{tpu_custom_call.1} parent=59 // pred_region
          %494 = dma.done [#allocation14], 16
        $region88: #{tpu_custom_call.1} parent=59 // pred_fallthru
          _
        // Predicated region
        $region89: #{tpu_custom_call.1} parent=59 // pred_check
          %p495 = pneg %p253
        $region90: #{tpu_custom_call.1} parent=59 // pred_check_branch
          %497 = sbr.rel (%p495) target = $region92
        $region91: #{tpu_custom_call.1} parent=59 // pred_region
          %498 = dma.done [#allocation17], 16
        $region92: #{tpu_custom_call.1} parent=59 // pred_fallthru
          _
        %p499 = pneg %p65
        %p500 = pneg %p62
        %p501 = pneg %p91
        %p502 = pneg %p88
        %p503 = pneg %p112
        %p504 = pneg %p109
        %p505 = pneg %p133
        %p506 = pneg %p130
        %s507 = sand.u32 %s32, 1
        %s508 = scalar_lea.sflag [#allocation11], %s507
        %s509 = sand.u32 %s146, 1
        %s510 = smul.addr %s509, 9408
        %s511 = scalar_lea.vmem [#allocation10], %s510
        %p512 = pneg %p159
        %p513 = pneg %p156
        %s514 = sand.u32 %s32, 1
        %s515 = scalar_lea.sflag [#allocation11], %s514
        %s516 = sand.u32 %s172, 1
        %s517 = smul.addr %s516, 7
        %s518 = scalar_lea.vmem [#allocation12], %s517
        %p519 = pneg %p185
        %p520 = pneg %p182
        %s521 = sand.u32 %s32, 1
        %s522 = scalar_lea.sflag [#allocation14], %s521
        %s523 = sand.u32 %s198, 1
        %s524 = smul.addr %s523, 896
        %s525 = scalar_lea.vmem [#allocation13], %s524
        %p526 = pneg %p211
        %p527 = pneg %p208
        %p528 = pneg %p232
        %p529 = pneg %p229
        %p530 = pneg %p253
        %p531 = pneg %p250
        %p532 = pneg %p274
        %p533 = pneg %p271
        %p534 = pneg %p300
        %p535 = pneg %p297
        %p536 = scmp.lt.s32.totalorder %s36, 0
        %s537 = scalar_select %p536, %s36, 0
        %s538 = smul.addr %s537, 8
        %s539 = scalar_lea.vmem %s10, %s538
        %s540 = smul.u32 7, %s37
        %s541 = smul.u32 7, %s37
        %s542 = smul.u32 112, %s37
        %p543 = scmp.lt.s32.totalorder %s36, 0
        %s544 = scalar_select %p543, %s36, 0
        %s545 = smul.addr %s544, 8
        %s546 = scalar_lea.vmem %s10, %s545
        %p547 = scmp.eq.s32.totalorder %s37, 0
        // Predicated region
        $region93: #{tpu_custom_call.1} parent=59 // pred_check
          %p548 = pneg %p547
        $region94: #{tpu_custom_call.1} parent=59 // pred_check_branch
          %550 = sbr.rel (%p548) target = $region96
        $region95: #{tpu_custom_call.1} parent=59 // pred_region
          %v551 = vld [vmem:[#allocation5] sm:$0xff]
          %v552 = vld [vmem:[%s2] sm:$0xff]
          %v553 = vld [vmem:[%s2 + $0x8] sm:$0xff]
          %v554 = vld [vmem:[%s2 + $0x10] sm:$0xff]
          %v555 = vld [vmem:[%s2 + $0x18] sm:$0xff]
          %v556 = vld [vmem:[%s2 + $0x20] sm:$0xff]
          %v557 = vld [vmem:[%s2 + $0x28] sm:$0xff]
          %v558 = vld [vmem:[%s2 + $0x30] sm:$0xff]
          %v559 = vld [vmem:[%s2 + $0x38] sm:$0xff]
          %v560 = vld [vmem:[%s2 + $0x40] sm:$0xff]
          %v561 = vld [vmem:[%s2 + $0x48] sm:$0xff]
          %v562 = vld [vmem:[%s2 + $0x50] sm:$0xff]
          %v563 = vld [vmem:[%s2 + $0x58] sm:$0xff]
          %v564 = vld [vmem:[%s2 + $0x60] sm:$0xff]
          %v565 = vld [vmem:[%s2 + $0x68] sm:$0xff]
          %v566 = vld [vmem:[%s2 + $0x70] sm:$0xff]
          %v567 = vld [vmem:[%s2 + $0x78] sm:$0xff]
          %v568 = vld [vmem:[%s2 + $0x80] sm:$0xff]
          %v569 = vld [vmem:[%s2 + $0x88] sm:$0xff]
          %v570 = vld [vmem:[%s2 + $0x90] sm:$0xff]
          %v571 = vld [vmem:[%s2 + $0x98] sm:$0xff]
          %v572 = vld [vmem:[%s2 + $0xa0] sm:$0xff]
          %v573 = vld [vmem:[%s2 + $0xa8] sm:$0xff]
          %v574 = vld [vmem:[%s2 + $0xb0] sm:$0xff]
          %v575 = vld [vmem:[%s2 + $0xb8] sm:$0xff]
          %v576 = vld [vmem:[%s2 + $0xc0] sm:$0xff]
          %v577 = vld [vmem:[%s2 + $0xc8] sm:$0xff]
          %v578 = vld [vmem:[%s2 + $0xd0] sm:$0xff]
          %v579 = vld [vmem:[%s2 + $0xd8] sm:$0xff]
          %v580 = vld [vmem:[%s2 + $0xe0] sm:$0xff]
          %v581 = vld [vmem:[%s2 + $0xe8] sm:$0xff]
          %v582 = vld [vmem:[%s2 + $0xf0] sm:$0xff]
          %v583 = vld [vmem:[%s2 + $0xf8] sm:$0xff]
          %v584 = vld [vmem:[%s2 + $0x100] sm:$0xff]
          %v585 = vld [vmem:[%s2 + $0x108] sm:$0xff]
          %v586 = vld [vmem:[%s2 + $0x110] sm:$0xff]
          %v587 = vld [vmem:[%s2 + $0x118] sm:$0xff]
          %v588 = vld [vmem:[%s2 + $0x120] sm:$0xff]
          %v589 = vld [vmem:[%s2 + $0x128] sm:$0xff]
          %v590 = vld [vmem:[%s2 + $0x130] sm:$0xff]
          %v591 = vld [vmem:[%s2 + $0x138] sm:$0xff]
          %v592 = vld [vmem:[%s2 + $0x140] sm:$0xff]
          %v593 = vld [vmem:[%s2 + $0x148] sm:$0xff]
          %v594 = vld [vmem:[%s2 + $0x150] sm:$0xff]
          %v595 = vld [vmem:[%s2 + $0x158] sm:$0xff]
          %v596 = vld [vmem:[%s2 + $0x160] sm:$0xff]
          %v597 = vld [vmem:[%s2 + $0x168] sm:$0xff]
          %v598 = vld [vmem:[%s2 + $0x170] sm:$0xff]
          %v599 = vld [vmem:[%s2 + $0x178] sm:$0xff]
          %v600 = vld [vmem:[%s2 + $0x180] sm:$0xff]
          %v601 = vld [vmem:[%s2 + $0x188] sm:$0xff]
          %v602 = vld [vmem:[%s2 + $0x190] sm:$0xff]
          %v603 = vld [vmem:[%s2 + $0x198] sm:$0xff]
          %v604 = vld [vmem:[%s2 + $0x1a0] sm:$0xff]
          %v605 = vld [vmem:[%s2 + $0x1a8] sm:$0xff]
          %v606 = vld [vmem:[%s2 + $0x1b0] sm:$0xff]
          %v607 = vld [vmem:[%s2 + $0x1b8] sm:$0xff]
          %v608 = vld [vmem:[%s2 + $0x1c0] sm:$0xff]
          %v609 = vld [vmem:[%s2 + $0x1c8] sm:$0xff]
          %v610 = vld [vmem:[%s2 + $0x1d0] sm:$0xff]
          %v611 = vld [vmem:[%s2 + $0x1d8] sm:$0xff]
          %v612 = vld [vmem:[%s2 + $0x1e0] sm:$0xff]
          %v613 = vld [vmem:[%s2 + $0x1e8] sm:$0xff]
          %v614 = vld [vmem:[%s2 + $0x1f0] sm:$0xff]
          %v615 = vld [vmem:[%s2 + $0x1f8] sm:$0xff]
          %v616 = vld [vmem:[%s2 + $0x200] sm:$0xff]
          %v617 = vld [vmem:[%s2 + $0x208] sm:$0xff]
          %v618 = vld [vmem:[%s2 + $0x210] sm:$0xff]
          %v619 = vld [vmem:[%s2 + $0x218] sm:$0xff]
          %v620 = vld [vmem:[%s2 + $0x220] sm:$0xff]
          %v621 = vld [vmem:[%s2 + $0x228] sm:$0xff]
          %v622 = vld [vmem:[%s2 + $0x230] sm:$0xff]
          %v623 = vld [vmem:[%s2 + $0x238] sm:$0xff]
          %v624 = vld [vmem:[%s2 + $0x240] sm:$0xff]
          %v625 = vld [vmem:[%s2 + $0x248] sm:$0xff]
          %v626 = vld [vmem:[%s2 + $0x250] sm:$0xff]
          %v627 = vld [vmem:[%s2 + $0x258] sm:$0xff]
          %v628 = vld [vmem:[%s2 + $0x260] sm:$0xff]
          %v629 = vld [vmem:[%s2 + $0x268] sm:$0xff]
          %v630 = vld [vmem:[%s2 + $0x270] sm:$0xff]
          %v631 = vld [vmem:[%s2 + $0x278] sm:$0xff]
          %v632 = vld [vmem:[%s2 + $0x280] sm:$0xff]
          %v633 = vld [vmem:[%s2 + $0x288] sm:$0xff]
          %v634 = vld [vmem:[%s2 + $0x290] sm:$0xff]
          %v635 = vld [vmem:[%s2 + $0x298] sm:$0xff]
          %v636 = vld [vmem:[%s2 + $0x2a0] sm:$0xff]
          %v637 = vld [vmem:[%s2 + $0x2a8] sm:$0xff]
          %v638 = vld [vmem:[%s2 + $0x2b0] sm:$0xff]
          %v639 = vld [vmem:[%s2 + $0x2b8] sm:$0xff]
          %v640 = vld [vmem:[%s2 + $0x2c0] sm:$0xff]
          %v641 = vld [vmem:[%s2 + $0x2c8] sm:$0xff]
          %v642 = vld [vmem:[%s2 + $0x2d0] sm:$0xff]
          %v643 = vld [vmem:[%s2 + $0x2d8] sm:$0xff]
          %v644 = vld [vmem:[%s2 + $0x2e0] sm:$0xff]
          %v645 = vld [vmem:[%s2 + $0x2e8] sm:$0xff]
          %v646 = vld [vmem:[%s2 + $0x2f0] sm:$0xff]
          %v647 = vld [vmem:[%s2 + $0x2f8] sm:$0xff]
          %v648 = vld [vmem:[%s2 + $0x300] sm:$0xff]
          %v649 = vld [vmem:[%s2 + $0x308] sm:$0xff]
          %v650 = vld [vmem:[%s2 + $0x310] sm:$0xff]
          %v651 = vld [vmem:[%s2 + $0x318] sm:$0xff]
          %v652 = vld [vmem:[%s2 + $0x320] sm:$0xff]
          %v653 = vld [vmem:[%s2 + $0x328] sm:$0xff]
          %v654 = vld [vmem:[%s2 + $0x330] sm:$0xff]
          %v655 = vld [vmem:[%s2 + $0x338] sm:$0xff]
          %v656 = vld [vmem:[%s2 + $0x340] sm:$0xff]
          %v657 = vld [vmem:[%s2 + $0x348] sm:$0xff]
          %v658 = vld [vmem:[%s2 + $0x350] sm:$0xff]
          %v659 = vld [vmem:[%s2 + $0x358] sm:$0xff]
          %v660 = vld [vmem:[%s2 + $0x360] sm:$0xff]
          %v661 = vld [vmem:[%s2 + $0x368] sm:$0xff]
          %v662 = vld [vmem:[%s2 + $0x370] sm:$0xff]
          %v663 = vld [vmem:[%s2 + $0x378] sm:$0xff]
          %v664 = vld [vmem:[%s2 + $0x380] sm:$0xff]
          %v665 = vld [vmem:[%s2 + $0x388] sm:$0xff]
          %v666 = vld [vmem:[%s2 + $0x390] sm:$0xff]
          %v667 = vld [vmem:[%s2 + $0x398] sm:$0xff]
          %v668 = vld [vmem:[%s2 + $0x3a0] sm:$0xff]
          %v669 = vld [vmem:[%s2 + $0x3a8] sm:$0xff]
          %v670 = vld [vmem:[%s2 + $0x3b0] sm:$0xff]
          %v671 = vld [vmem:[%s2 + $0x3b8] sm:$0xff]
          %v672 = vld [vmem:[%s2 + $0x3c0] sm:$0xff]
          %v673 = vld [vmem:[%s2 + $0x3c8] sm:$0xff]
          %v674 = vld [vmem:[%s2 + $0x3d0] sm:$0xff]
          %v675 = vld [vmem:[%s2 + $0x3d8] sm:$0xff]
          %v676 = vld [vmem:[%s2 + $0x3e0] sm:$0xff]
          %v677 = vld [vmem:[%s2 + $0x3e8] sm:$0xff]
          %v678 = vld [vmem:[%s2 + $0x3f0] sm:$0xff]
          %v679 = vld [vmem:[%s2 + $0x3f8] sm:$0xff]
          %v680 = vld [vmem:[%s2 + $0x400] sm:$0xff]
          %v681 = vld [vmem:[%s2 + $0x408] sm:$0xff]
          %v682 = vld [vmem:[%s2 + $0x410] sm:$0xff]
          %v683 = vld [vmem:[%s2 + $0x418] sm:$0xff]
          %v684 = vld [vmem:[%s2 + $0x420] sm:$0xff]
          %v685 = vld [vmem:[%s2 + $0x428] sm:$0xff]
          %v686 = vld [vmem:[%s2 + $0x430] sm:$0xff]
          %v687 = vld [vmem:[%s2 + $0x438] sm:$0xff]
          %v688 = vld [vmem:[%s2 + $0x440] sm:$0xff]
          %v689 = vld [vmem:[%s2 + $0x448] sm:$0xff]
          %v690 = vld [vmem:[%s2 + $0x450] sm:$0xff]
          %v691 = vld [vmem:[%s2 + $0x458] sm:$0xff]
          %v692 = vld [vmem:[%s2 + $0x460] sm:$0xff]
          %v693 = vld [vmem:[%s2 + $0x468] sm:$0xff]
          %v694 = vld [vmem:[%s2 + $0x470] sm:$0xff]
          %v695 = vld [vmem:[%s2 + $0x478] sm:$0xff]
          %v696 = vld [vmem:[%s2 + $0x480] sm:$0xff]
          %v697 = vld [vmem:[%s2 + $0x488] sm:$0xff]
          %v698 = vld [vmem:[%s2 + $0x490] sm:$0xff]
          %v699 = vld [vmem:[%s2 + $0x498] sm:$0xff]
          %v700 = vld [vmem:[%s2 + $0x4a0] sm:$0xff]
          %v701 = vld [vmem:[%s2 + $0x4a8] sm:$0xff]
          %v702 = vld [vmem:[%s2 + $0x4b0] sm:$0xff]
          %v703 = vld [vmem:[%s2 + $0x4b8] sm:$0xff]
          %v704 = vld [vmem:[%s2 + $0x4c0] sm:$0xff]
          %v705 = vld [vmem:[%s2 + $0x4c8] sm:$0xff]
          %v706 = vld [vmem:[%s2 + $0x4d0] sm:$0xff]
          %v707 = vld [vmem:[%s2 + $0x4d8] sm:$0xff]
          %v708 = vld [vmem:[%s2 + $0x4e0] sm:$0xff]
          %v709 = vld [vmem:[%s2 + $0x4e8] sm:$0xff]
          %v710 = vld [vmem:[%s2 + $0x4f0] sm:$0xff]
          %v711 = vld [vmem:[%s2 + $0x4f8] sm:$0xff]
          %v712 = vld [vmem:[%s2 + $0x500] sm:$0xff]
          %v713 = vld [vmem:[%s2 + $0x508] sm:$0xff]
          %v714 = vld [vmem:[%s2 + $0x510] sm:$0xff]
          %v715 = vld [vmem:[%s2 + $0x518] sm:$0xff]
          %v716 = vld [vmem:[%s2 + $0x520] sm:$0xff]
          %v717 = vld [vmem:[%s2 + $0x528] sm:$0x3f]
          %v718 = vld [vmem:[%s2 + $0x530] sm:$0x3f]
          %v719 = vld [vmem:[%s2 + $0x538] sm:$0x3f]
          %v720 = vld [vmem:[%s2 + $0x540] sm:$0x3f]
          %v721 = vld [vmem:[%s2 + $0x548] sm:$0x3f]
          %v722 = vld [vmem:[%s2 + $0x550] sm:$0x3f]
          %v723 = vld [vmem:[%s2 + $0x558] sm:$0x3f]
          %v724 = vld [vmem:[%s2 + $0x560] sm:$0x3f]
          %v725 = vld [vmem:[%s2 + $0x568] sm:$0x3f]
          %v726 = vld [vmem:[%s2 + $0x570] sm:$0x3f]
          %v727 = vld [vmem:[%s2 + $0x578] sm:$0x3f]
          %v728 = vld [vmem:[#allocation9] sm:$0xff]
          %v729 = vld [vmem:[#allocation9 + $0x8] sm:$0x7]
          %v732 = vlaneseq
          %v733 = vshrl.u32 %v732, 7
          %v734 = vsub.s32 0, %v733
          %v735 = vrot.slane %v728, %v734
          %v736 = vlaneseq
          %v737 = vshrl.u32 %v736, 7
          %v738 = vsub.s32 1, %v737
          %v739 = vrot.slane %v728, %v738
          %v740 = vlaneseq
          %v741 = vshrl.u32 %v740, 7
          %v742 = vsub.s32 2, %v741
          %v743 = vrot.slane %v728, %v742
          %v744 = vlaneseq
          %v745 = vshrl.u32 %v744, 7
          %v746 = vsub.s32 3, %v745
          %v747 = vrot.slane %v728, %v746
          %v748 = vlaneseq
          %v749 = vshrl.u32 %v748, 7
          %v750 = vsub.s32 4, %v749
          %v751 = vrot.slane %v728, %v750
          %v752 = vlaneseq
          %v753 = vshrl.u32 %v752, 7
          %v754 = vsub.s32 5, %v753
          %v755 = vrot.slane %v728, %v754
          %v756 = vlaneseq
          %v757 = vshrl.u32 %v756, 7
          %v758 = vsub.s32 6, %v757
          %v759 = vrot.slane %v728, %v758
          %v760 = vlaneseq
          %v761 = vshrl.u32 %v760, 7
          %v762 = vsub.s32 7, %v761
          %v763 = vrot.slane %v728, %v762
          %v764 = vlaneseq
          %v765 = vshrl.u32 %v764, 7
          %v766 = vsub.s32 0, %v765
          %v767 = vrot.slane %v729, %v766
          %v768 = vlaneseq
          %v769 = vshrl.u32 %v768, 7
          %v770 = vsub.s32 1, %v769
          %v771 = vrot.slane %v729, %v770
          %v772 = vlaneseq
          %v773 = vshrl.u32 %v772, 7
          %v774 = vsub.s32 2, %v773
          %v775 = vrot.slane %v729, %v774
          %vm787 = vcmask 1031168
          %v789 = vsel %vm787, %v551, 0
          %vm791 = vcmask 1045504
          %v793 = vsel %vm791, %v717, 0
          %v796 = vsel %vm791, %v718, 0
          %v799 = vsel %vm791, %v719, 0
          %v802 = vsel %vm791, %v720, 0
          %v805 = vsel %vm791, %v721, 0
          %v808 = vsel %vm791, %v722, 0
          %v811 = vsel %vm791, %v723, 0
          %v814 = vsel %vm791, %v724, 0
          %v817 = vsel %vm791, %v725, 0
          %v820 = vsel %vm791, %v726, 0
          %v823 = vsel %vm791, %v727, 0
          %825 = vmatprep.subr.mxu0 %v553
          %826 = vmatpush1.msra.mxu0 %v552
          %827 = vmatprep.subr.mxu0 %v564
          %828 = vmatpush1.msra.mxu0 %v563
          %829 = vmatprep.subr.mxu0 %v575
          %830 = vmatpush1.msra.mxu0 %v574
          %831 = vmatprep.subr.mxu0 %v586
          %832 = vmatpush1.msra.mxu0 %v585
          %833 = vmatprep.subr.mxu0 %v597
          %834 = vmatpush1.msra.mxu0 %v596
          %835 = vmatprep.subr.mxu0 %v608
          %836 = vmatpush1.msra.mxu0 %v607
          %837 = vmatprep.subr.mxu0 %v619
          %838 = vmatpush1.msra.mxu0 %v618
          %839 = vmatprep.subr.mxu0 %v630
          %840 = vmatpush1.msra.mxu0 %v629
          %841 = vmatprep.subr.mxu0 %v641
          %842 = vmatpush1.msra.mxu0 %v640
          %843 = vmatprep.subr.mxu0 %v652
          %844 = vmatpush1.msra.mxu0 %v651
          %845 = vmatprep.subr.mxu0 %v663
          %846 = vmatpush1.msra.mxu0 %v662
          %847 = vmatprep.subr.mxu0 %v674
          %848 = vmatpush1.msra.mxu0 %v673
          %849 = vmatprep.subr.mxu0 %v685
          %850 = vmatpush1.msra.mxu0 %v684
          %851 = vmatprep.subr.mxu0 %v696
          %852 = vmatpush1.msra.mxu0 %v695
          %853 = vmatprep.subr.mxu0 %v707
          %854 = vmatpush1.msra.mxu0 %v706
          %855 = vmatprep.subr.mxu0 %v796
          %856 = vmatpush1.msra.mxu0 %v793
          %857 = vmatprep.subr.mxu0 0.0
          %858 = vmatpush1.msra.mxu0 0.0
          %859 = vmatprep.subr.mxu0 0.0
          %860 = vmatpush1.msra.mxu0 0.0
          %861 = vmatprep.subr.mxu0 0.0
          %862 = vmatpush1.msra.mxu0 0.0
          %863 = vmatprep.subr.mxu0 0.0
          %864 = vmatpush1.msra.mxu0 0.0
          %865 = vmatprep.subr.mxu0 0.0
          %866 = vmatpush1.msra.mxu0 0.0
          %867 = vmatprep.subr.mxu0 0.0
          %868 = vmatpush1.msra.mxu0 0.0
          %869 = vmatprep.subr.mxu0 0.0
          %870 = vmatpush1.msra.mxu0 0.0
          %871 = vmatprep.subr.mxu0 0.0
          %872 = vmatpush1.msra.mxu0 0.0
          %873 = vmatprep.subr.mxu0 0.0
          %874 = vmatpush1.msra.mxu0 0.0
          %875 = vmatprep.subr.mxu0 0.0
          %876 = vmatpush1.msra.mxu0 0.0
          %877 = vmatprep.subr.mxu0 0.0
          %878 = vmatpush1.msra.mxu0 0.0
          %879 = vmatprep.subr.mxu0 0.0
          %880 = vmatpush1.msra.mxu0 0.0
          %881 = vmatprep.subr.mxu0 0.0
          %882 = vmatpush1.msra.mxu0 0.0
          %883 = vmatprep.subr.mxu0 0.0
          %884 = vmatpush1.msra.mxu0 0.0
          %885 = vmatprep.subr.mxu0 0.0
          %886 = vmatpush1.msra.mxu0 0.0
          %887 = vmatprep.subr.mxu0 0.0
          %888 = vmatpush1.msra.mxu0 0.0
          %889 = vmatprep.mubr.f32.mxu0 0.0
          %890 = vmatmul.mubr.f32.gmra.mrb[0].mxu0 %v789
          %v891 = vpop.f32.mrb[0].mxu0
          %v892 = vadd.f32 %v735, %v891
          %v893 = vpop.f32.mrb[0].mxu0
          %v894 = vadd.f32 %v739, %v893
          %895 = vdwg.mxu0
          %896 = vmatprep.subr.mxu0 %v555
          %897 = vmatpush1.msra.mxu0 %v554
          %898 = vmatprep.subr.mxu0 %v566
          %899 = vmatpush1.msra.mxu0 %v565
          %900 = vmatprep.subr.mxu0 %v577
          %901 = vmatpush1.msra.mxu0 %v576
          %902 = vmatprep.subr.mxu0 %v588
          %903 = vmatpush1.msra.mxu0 %v587
          %904 = vmatprep.subr.mxu0 %v599
          %905 = vmatpush1.msra.mxu0 %v598
          %906 = vmatprep.subr.mxu0 %v610
          %907 = vmatpush1.msra.mxu0 %v609
          %908 = vmatprep.subr.mxu0 %v621
          %909 = vmatpush1.msra.mxu0 %v620
          %910 = vmatprep.subr.mxu0 %v632
          %911 = vmatpush1.msra.mxu0 %v631
          %912 = vmatprep.subr.mxu0 %v643
          %913 = vmatpush1.msra.mxu0 %v642
          %914 = vmatprep.subr.mxu0 %v654
          %915 = vmatpush1.msra.mxu0 %v653
          %916 = vmatprep.subr.mxu0 %v665
          %917 = vmatpush1.msra.mxu0 %v664
          %918 = vmatprep.subr.mxu0 %v676
          %919 = vmatpush1.msra.mxu0 %v675
          %920 = vmatprep.subr.mxu0 %v687
          %921 = vmatpush1.msra.mxu0 %v686
          %922 = vmatprep.subr.mxu0 %v698
          %923 = vmatpush1.msra.mxu0 %v697
          %924 = vmatprep.subr.mxu0 %v709
          %925 = vmatpush1.msra.mxu0 %v708
          %926 = vmatprep.subr.mxu0 %v802
          %927 = vmatpush1.msra.mxu0 %v799
          %928 = vmatprep.subr.mxu0 0.0
          %929 = vmatpush1.msra.mxu0 0.0
          %930 = vmatprep.subr.mxu0 0.0
          %931 = vmatpush1.msra.mxu0 0.0
          %932 = vmatprep.subr.mxu0 0.0
          %933 = vmatpush1.msra.mxu0 0.0
          %934 = vmatprep.subr.mxu0 0.0
          %935 = vmatpush1.msra.mxu0 0.0
          %936 = vmatprep.subr.mxu0 0.0
          %937 = vmatpush1.msra.mxu0 0.0
          %938 = vmatprep.subr.mxu0 0.0
          %939 = vmatpush1.msra.mxu0 0.0
          %940 = vmatprep.subr.mxu0 0.0
          %941 = vmatpush1.msra.mxu0 0.0
          %942 = vmatprep.subr.mxu0 0.0
          %943 = vmatpush1.msra.mxu0 0.0
          %944 = vmatprep.subr.mxu0 0.0
          %945 = vmatpush1.msra.mxu0 0.0
          %946 = vmatprep.subr.mxu0 0.0
          %947 = vmatpush1.msra.mxu0 0.0
          %948 = vmatprep.subr.mxu0 0.0
          %949 = vmatpush1.msra.mxu0 0.0
          %950 = vmatprep.subr.mxu0 0.0
          %951 = vmatpush1.msra.mxu0 0.0
          %952 = vmatprep.subr.mxu0 0.0
          %953 = vmatpush1.msra.mxu0 0.0
          %954 = vmatprep.subr.mxu0 0.0
          %955 = vmatpush1.msra.mxu0 0.0
          %956 = vmatprep.subr.mxu0 0.0
          %957 = vmatpush1.msra.mxu0 0.0
          %958 = vmatprep.subr.mxu0 0.0
          %959 = vmatpush1.msra.mxu0 0.0
          %960 = vmatprep.mubr.f32.mxu0 0.0
          %961 = vmatmul.mubr.f32.gmra.mrb[0].mxu0 %v789
          %v962 = vpop.f32.mrb[0].mxu0
          %v963 = vadd.f32 %v743, %v962
          %v964 = vpop.f32.mrb[0].mxu0
          %v965 = vadd.f32 %v747, %v964
          %966 = vdwg.mxu0
          %967 = vmatprep.subr.mxu0 %v557
          %968 = vmatpush1.msra.mxu0 %v556
          %969 = vmatprep.subr.mxu0 %v568
          %970 = vmatpush1.msra.mxu0 %v567
          %971 = vmatprep.subr.mxu0 %v579
          %972 = vmatpush1.msra.mxu0 %v578
          %973 = vmatprep.subr.mxu0 %v590
          %974 = vmatpush1.msra.mxu0 %v589
          %975 = vmatprep.subr.mxu0 %v601
          %976 = vmatpush1.msra.mxu0 %v600
          %977 = vmatprep.subr.mxu0 %v612
          %978 = vmatpush1.msra.mxu0 %v611
          %979 = vmatprep.subr.mxu0 %v623
          %980 = vmatpush1.msra.mxu0 %v622
          %981 = vmatprep.subr.mxu0 %v634
          %982 = vmatpush1.msra.mxu0 %v633
          %983 = vmatprep.subr.mxu0 %v645
          %984 = vmatpush1.msra.mxu0 %v644
          %985 = vmatprep.subr.mxu0 %v656
          %986 = vmatpush1.msra.mxu0 %v655
          %987 = vmatprep.subr.mxu0 %v667
          %988 = vmatpush1.msra.mxu0 %v666
          %989 = vmatprep.subr.mxu0 %v678
          %990 = vmatpush1.msra.mxu0 %v677
          %991 = vmatprep.subr.mxu0 %v689
          %992 = vmatpush1.msra.mxu0 %v688
          %993 = vmatprep.subr.mxu0 %v700
          %994 = vmatpush1.msra.mxu0 %v699
          %995 = vmatprep.subr.mxu0 %v711
          %996 = vmatpush1.msra.mxu0 %v710
          %997 = vmatprep.subr.mxu0 %v808
          %998 = vmatpush1.msra.mxu0 %v805
          %999 = vmatprep.subr.mxu0 0.0
          %1000 = vmatpush1.msra.mxu0 0.0
          %1001 = vmatprep.subr.mxu0 0.0
          %1002 = vmatpush1.msra.mxu0 0.0
          %1003 = vmatprep.subr.mxu0 0.0
          %1004 = vmatpush1.msra.mxu0 0.0
          %1005 = vmatprep.subr.mxu0 0.0
          %1006 = vmatpush1.msra.mxu0 0.0
          %1007 = vmatprep.subr.mxu0 0.0
          %1008 = vmatpush1.msra.mxu0 0.0
          %1009 = vmatprep.subr.mxu0 0.0
          %1010 = vmatpush1.msra.mxu0 0.0
          %1011 = vmatprep.subr.mxu0 0.0
          %1012 = vmatpush1.msra.mxu0 0.0
          %1013 = vmatprep.subr.mxu0 0.0
          %1014 = vmatpush1.msra.mxu0 0.0
          %1015 = vmatprep.subr.mxu0 0.0
          %1016 = vmatpush1.msra.mxu0 0.0
          %1017 = vmatprep.subr.mxu0 0.0
          %1018 = vmatpush1.msra.mxu0 0.0
          %1019 = vmatprep.subr.mxu0 0.0
          %1020 = vmatpush1.msra.mxu0 0.0
          %1021 = vmatprep.subr.mxu0 0.0
          %1022 = vmatpush1.msra.mxu0 0.0
          %1023 = vmatprep.subr.mxu0 0.0
          %1024 = vmatpush1.msra.mxu0 0.0
          %1025 = vmatprep.subr.mxu0 0.0
          %1026 = vmatpush1.msra.mxu0 0.0
          %1027 = vmatprep.subr.mxu0 0.0
          %1028 = vmatpush1.msra.mxu0 0.0
          %1029 = vmatprep.subr.mxu0 0.0
          %1030 = vmatpush1.msra.mxu0 0.0
          %1031 = vmatprep.mubr.f32.mxu0 0.0
          %1032 = vmatmul.mubr.f32.gmra.mrb[0].mxu0 %v789
          %v1033 = vpop.f32.mrb[0].mxu0
          %v1034 = vadd.f32 %v751, %v1033
          %v1035 = vpop.f32.mrb[0].mxu0
          %v1036 = vadd.f32 %v755, %v1035
          %1037 = vdwg.mxu0
          %1038 = vmatprep.subr.mxu0 %v559
          %1039 = vmatpush1.msra.mxu0 %v558
          %1040 = vmatprep.subr.mxu0 %v570
          %1041 = vmatpush1.msra.mxu0 %v569
          %1042 = vmatprep.subr.mxu0 %v581
          %1043 = vmatpush1.msra.mxu0 %v580
          %1044 = vmatprep.subr.mxu0 %v592
          %1045 = vmatpush1.msra.mxu0 %v591
          %1046 = vmatprep.subr.mxu0 %v603
          %1047 = vmatpush1.msra.mxu0 %v602
          %1048 = vmatprep.subr.mxu0 %v614
          %1049 = vmatpush1.msra.mxu0 %v613
          %1050 = vmatprep.subr.mxu0 %v625
          %1051 = vmatpush1.msra.mxu0 %v624
          %1052 = vmatprep.subr.mxu0 %v636
          %1053 = vmatpush1.msra.mxu0 %v635
          %1054 = vmatprep.subr.mxu0 %v647
          %1055 = vmatpush1.msra.mxu0 %v646
          %1056 = vmatprep.subr.mxu0 %v658
          %1057 = vmatpush1.msra.mxu0 %v657
          %1058 = vmatprep.subr.mxu0 %v669
          %1059 = vmatpush1.msra.mxu0 %v668
          %1060 = vmatprep.subr.mxu0 %v680
          %1061 = vmatpush1.msra.mxu0 %v679
          %1062 = vmatprep.subr.mxu0 %v691
          %1063 = vmatpush1.msra.mxu0 %v690
          %1064 = vmatprep.subr.mxu0 %v702
          %1065 = vmatpush1.msra.mxu0 %v701
          %1066 = vmatprep.subr.mxu0 %v713
          %1067 = vmatpush1.msra.mxu0 %v712
          %1068 = vmatprep.subr.mxu0 %v814
          %1069 = vmatpush1.msra.mxu0 %v811
          %1070 = vmatprep.subr.mxu0 0.0
          %1071 = vmatpush1.msra.mxu0 0.0
          %1072 = vmatprep.subr.mxu0 0.0
          %1073 = vmatpush1.msra.mxu0 0.0
          %1074 = vmatprep.subr.mxu0 0.0
          %1075 = vmatpush1.msra.mxu0 0.0
          %1076 = vmatprep.subr.mxu0 0.0
          %1077 = vmatpush1.msra.mxu0 0.0
          %1078 = vmatprep.subr.mxu0 0.0
          %1079 = vmatpush1.msra.mxu0 0.0
          %1080 = vmatprep.subr.mxu0 0.0
          %1081 = vmatpush1.msra.mxu0 0.0
          %1082 = vmatprep.subr.mxu0 0.0
          %1083 = vmatpush1.msra.mxu0 0.0
          %1084 = vmatprep.subr.mxu0 0.0
          %1085 = vmatpush1.msra.mxu0 0.0
          %1086 = vmatprep.subr.mxu0 0.0
          %1087 = vmatpush1.msra.mxu0 0.0
          %1088 = vmatprep.subr.mxu0 0.0
          %1089 = vmatpush1.msra.mxu0 0.0
          %1090 = vmatprep.subr.mxu0 0.0
          %1091 = vmatpush1.msra.mxu0 0.0
          %1092 = vmatprep.subr.mxu0 0.0
          %1093 = vmatpush1.msra.mxu0 0.0
          %1094 = vmatprep.subr.mxu0 0.0
          %1095 = vmatpush1.msra.mxu0 0.0
          %1096 = vmatprep.subr.mxu0 0.0
          %1097 = vmatpush1.msra.mxu0 0.0
          %1098 = vmatprep.subr.mxu0 0.0
          %1099 = vmatpush1.msra.mxu0 0.0
          %1100 = vmatprep.subr.mxu0 0.0
          %1101 = vmatpush1.msra.mxu0 0.0
          %1102 = vmatprep.mubr.f32.mxu0 0.0
          %1103 = vmatmul.mubr.f32.gmra.mrb[0].mxu0 %v789
          %v1104 = vpop.f32.mrb[0].mxu0
          %v1105 = vadd.f32 %v759, %v1104
          %v1106 = vpop.f32.mrb[0].mxu0
          %v1107 = vadd.f32 %v763, %v1106
          %1108 = vdwg.mxu0
          %1109 = vmatprep.subr.mxu0 %v561
          %1110 = vmatpush1.msra.mxu0 %v560
          %1111 = vmatprep.subr.mxu0 %v572
          %1112 = vmatpush1.msra.mxu0 %v571
          %1113 = vmatprep.subr.mxu0 %v583
          %1114 = vmatpush1.msra.mxu0 %v582
          %1115 = vmatprep.subr.mxu0 %v594
          %1116 = vmatpush1.msra.mxu0 %v593
          %1117 = vmatprep.subr.mxu0 %v605
          %1118 = vmatpush1.msra.mxu0 %v604
          %1119 = vmatprep.subr.mxu0 %v616
          %1120 = vmatpush1.msra.mxu0 %v615
          %1121 = vmatprep.subr.mxu0 %v627
          %1122 = vmatpush1.msra.mxu0 %v626
          %1123 = vmatprep.subr.mxu0 %v638
          %1124 = vmatpush1.msra.mxu0 %v637
          %1125 = vmatprep.subr.mxu0 %v649
          %1126 = vmatpush1.msra.mxu0 %v648
          %1127 = vmatprep.subr.mxu0 %v660
          %1128 = vmatpush1.msra.mxu0 %v659
          %1129 = vmatprep.subr.mxu0 %v671
          %1130 = vmatpush1.msra.mxu0 %v670
          %1131 = vmatprep.subr.mxu0 %v682
          %1132 = vmatpush1.msra.mxu0 %v681
          %1133 = vmatprep.subr.mxu0 %v693
          %1134 = vmatpush1.msra.mxu0 %v692
          %1135 = vmatprep.subr.mxu0 %v704
          %1136 = vmatpush1.msra.mxu0 %v703
          %1137 = vmatprep.subr.mxu0 %v715
          %1138 = vmatpush1.msra.mxu0 %v714
          %1139 = vmatprep.subr.mxu0 %v820
          %1140 = vmatpush1.msra.mxu0 %v817
          %1141 = vmatprep.subr.mxu0 0.0
          %1142 = vmatpush1.msra.mxu0 0.0
          %1143 = vmatprep.subr.mxu0 0.0
          %1144 = vmatpush1.msra.mxu0 0.0
          %1145 = vmatprep.subr.mxu0 0.0
          %1146 = vmatpush1.msra.mxu0 0.0
          %1147 = vmatprep.subr.mxu0 0.0
          %1148 = vmatpush1.msra.mxu0 0.0
          %1149 = vmatprep.subr.mxu0 0.0
          %1150 = vmatpush1.msra.mxu0 0.0
          %1151 = vmatprep.subr.mxu0 0.0
          %1152 = vmatpush1.msra.mxu0 0.0
          %1153 = vmatprep.subr.mxu0 0.0
          %1154 = vmatpush1.msra.mxu0 0.0
          %1155 = vmatprep.subr.mxu0 0.0
          %1156 = vmatpush1.msra.mxu0 0.0
          %1157 = vmatprep.subr.mxu0 0.0
          %1158 = vmatpush1.msra.mxu0 0.0
          %1159 = vmatprep.subr.mxu0 0.0
          %1160 = vmatpush1.msra.mxu0 0.0
          %1161 = vmatprep.subr.mxu0 0.0
          %1162 = vmatpush1.msra.mxu0 0.0
          %1163 = vmatprep.subr.mxu0 0.0
          %1164 = vmatpush1.msra.mxu0 0.0
          %1165 = vmatprep.subr.mxu0 0.0
          %1166 = vmatpush1.msra.mxu0 0.0
          %1167 = vmatprep.subr.mxu0 0.0
          %1168 = vmatpush1.msra.mxu0 0.0
          %1169 = vmatprep.subr.mxu0 0.0
          %1170 = vmatpush1.msra.mxu0 0.0
          %1171 = vmatprep.subr.mxu0 0.0
          %1172 = vmatpush1.msra.mxu0 0.0
          %1173 = vmatprep.mubr.f32.mxu0 0.0
          %1174 = vmatmul.mubr.f32.gmra.mrb[0].mxu0 %v789
          %v1175 = vpop.f32.mrb[0].mxu0
          %v1176 = vadd.f32 %v767, %v1175
          %v1177 = vpop.f32.mrb[0].mxu0
          %v1178 = vadd.f32 %v771, %v1177
          %1179 = vdwg.mxu0
          %1180 = vmatprep.subr.mxu0 0.0
          %1181 = vmatpush1.msra.mxu0 %v562
          %1182 = vmatprep.subr.mxu0 0.0
          %1183 = vmatpush1.msra.mxu0 %v573
          %1184 = vmatprep.subr.mxu0 0.0
          %1185 = vmatpush1.msra.mxu0 %v584
          %1186 = vmatprep.subr.mxu0 0.0
          %1187 = vmatpush1.msra.mxu0 %v595
          %1188 = vmatprep.subr.mxu0 0.0
          %1189 = vmatpush1.msra.mxu0 %v606
          %1190 = vmatprep.subr.mxu0 0.0
          %1191 = vmatpush1.msra.mxu0 %v617
          %1192 = vmatprep.subr.mxu0 0.0
          %1193 = vmatpush1.msra.mxu0 %v628
          %1194 = vmatprep.subr.mxu0 0.0
          %1195 = vmatpush1.msra.mxu0 %v639
          %1196 = vmatprep.subr.mxu0 0.0
          %1197 = vmatpush1.msra.mxu0 %v650
          %1198 = vmatprep.subr.mxu0 0.0
          %1199 = vmatpush1.msra.mxu0 %v661
          %1200 = vmatprep.subr.mxu0 0.0
          %1201 = vmatpush1.msra.mxu0 %v672
          %1202 = vmatprep.subr.mxu0 0.0
          %1203 = vmatpush1.msra.mxu0 %v683
          %1204 = vmatprep.subr.mxu0 0.0
          %1205 = vmatpush1.msra.mxu0 %v694
          %1206 = vmatprep.subr.mxu0 0.0
          %1207 = vmatpush1.msra.mxu0 %v705
          %1208 = vmatprep.subr.mxu0 0.0
          %1209 = vmatpush1.msra.mxu0 %v716
          %1210 = vmatprep.subr.mxu0 0.0
          %1211 = vmatpush1.msra.mxu0 %v823
          %1212 = vmatprep.subr.mxu0 0.0
          %1213 = vmatpush1.msra.mxu0 0.0
          %1214 = vmatprep.subr.mxu0 0.0
          %1215 = vmatpush1.msra.mxu0 0.0
          %1216 = vmatprep.subr.mxu0 0.0
          %1217 = vmatpush1.msra.mxu0 0.0
          %1218 = vmatprep.subr.mxu0 0.0
          %1219 = vmatpush1.msra.mxu0 0.0
          %1220 = vmatprep.subr.mxu0 0.0
          %1221 = vmatpush1.msra.mxu0 0.0
          %1222 = vmatprep.subr.mxu0 0.0
          %1223 = vmatpush1.msra.mxu0 0.0
          %1224 = vmatprep.subr.mxu0 0.0
          %1225 = vmatpush1.msra.mxu0 0.0
          %1226 = vmatprep.subr.mxu0 0.0
          %1227 = vmatpush1.msra.mxu0 0.0
          %1228 = vmatprep.subr.mxu0 0.0
          %1229 = vmatpush1.msra.mxu0 0.0
          %1230 = vmatprep.subr.mxu0 0.0
          %1231 = vmatpush1.msra.mxu0 0.0
          %1232 = vmatprep.subr.mxu0 0.0
          %1233 = vmatpush1.msra.mxu0 0.0
          %1234 = vmatprep.subr.mxu0 0.0
          %1235 = vmatpush1.msra.mxu0 0.0
          %1236 = vmatprep.subr.mxu0 0.0
          %1237 = vmatpush1.msra.mxu0 0.0
          %1238 = vmatprep.subr.mxu0 0.0
          %1239 = vmatpush1.msra.mxu0 0.0
          %1240 = vmatprep.subr.mxu0 0.0
          %1241 = vmatpush1.msra.mxu0 0.0
          %1242 = vmatprep.subr.mxu0 0.0
          %1243 = vmatpush1.msra.mxu0 0.0
          %1244 = vmatprep.mubr.f32.mxu0 0.0
          %1245 = vmatmul.mubr.f32.gmra.mrb[0].mxu0 %v789
          %v1246 = vpop.f32.mrb[0].mxu0
          %v1247 = vadd.f32 %v775, %v1246
          %v1248 = vpop.f32.mrb[0].mxu0
          %1249 = vdwg.mxu0
          %v1250 = vmax.f32 %v892, 0.0
          %v1251 = vmax.f32 %v894, 0.0
          %v1252 = vmax.f32 %v963, 0.0
          %v1253 = vmax.f32 %v965, 0.0
          %v1254 = vmax.f32 %v1034, 0.0
          %v1255 = vmax.f32 %v1036, 0.0
          %v1256 = vmax.f32 %v1105, 0.0
          %v1257 = vmax.f32 %v1107, 0.0
          %v1258 = vmax.f32 %v1176, 0.0
          %v1259 = vmax.f32 %v1178, 0.0
          %v1260 = vmax.f32 %v1247, 0.0
          %1261 = vst [vmem:[#allocation2] sm:$0xff] %v1250
          %1262 = vst [vmem:[#allocation2 + $0x8] sm:$0xff] %v1251
          %1263 = vst [vmem:[#allocation2 + $0x10] sm:$0xff] %v1252
          %1264 = vst [vmem:[#allocation2 + $0x18] sm:$0xff] %v1253
          %1265 = vst [vmem:[#allocation2 + $0x20] sm:$0xff] %v1254
          %1266 = vst [vmem:[#allocation2 + $0x28] sm:$0xff] %v1255
          %1267 = vst [vmem:[#allocation2 + $0x30] sm:$0xff] %v1256
          %1268 = vst [vmem:[#allocation2 + $0x38] sm:$0xff] %v1257
          %1269 = vst [vmem:[#allocation2 + $0x40] sm:$0xff] %v1258
          %1270 = vst [vmem:[#allocation2 + $0x48] sm:$0xff] %v1259
          %vm1271 = vcmask 523264
          %1272 = vst.msk [vmem:[#allocation2 + $0x50] sm:$0xff] %vm1271, %v1260
          %v1273 = vld [vmem:[#allocation7] sm:$0xff]
          %v1274 = vld [vmem:[#allocation15] sm:$0x1]
          %v1276 = vlaneseq
          %v1277 = vshrl.u32 %v1276, 7
          %v1278 = vsub.s32 0, %v1277
          %v1279 = vrot.slane %v1274, %v1278
          %v1281 = vadd.f32 %v1273, %v1279
          %1282 = vst [vmem:[#allocation3] sm:$0xff] %v1281
        $region96: #{tpu_custom_call.1} parent=59 // pred_fallthru
          _
        %v1283 = vld [vmem:[#allocation2] sm:$0xff]
        %v1284 = vld [vmem:[#allocation2 + $0x8] sm:$0xff]
        %v1285 = vld [vmem:[#allocation2 + $0x10] sm:$0xff]
        %v1286 = vld [vmem:[#allocation2 + $0x18] sm:$0xff]
        %v1287 = vld [vmem:[#allocation2 + $0x20] sm:$0xff]
        %v1288 = vld [vmem:[#allocation2 + $0x28] sm:$0xff]
        %v1289 = vld [vmem:[#allocation2 + $0x30] sm:$0xff]
        %v1290 = vld [vmem:[#allocation2 + $0x38] sm:$0xff]
        %v1291 = vld [vmem:[#allocation2 + $0x40] sm:$0xff]
        %v1292 = vld [vmem:[#allocation2 + $0x48] sm:$0xff]
        %v1293 = vld [vmem:[#allocation2 + $0x50] sm:$0xff]
        %v1294 = vld [vmem:[%s468] sm:$0xff]
        %v1295 = vld [vmem:[%s468 + $0x8] sm:$0xff]
        %v1296 = vld [vmem:[%s468 + $0x10] sm:$0xff]
        %v1297 = vld [vmem:[%s468 + $0x18] sm:$0xff]
        %v1298 = vld [vmem:[%s468 + $0x20] sm:$0xff]
        %v1299 = vld [vmem:[%s468 + $0x28] sm:$0xff]
        %v1300 = vld [vmem:[%s468 + $0x30] sm:$0xff]
        %v1301 = vld [vmem:[%s468 + $0x38] sm:$0xff]
        %v1302 = vld [vmem:[%s468 + $0x40] sm:$0xff]
        %v1303 = vld [vmem:[%s468 + $0x48] sm:$0xff]
        %v1304 = vld [vmem:[%s468 + $0x50] sm:$0xff]
        %v1305 = vld [vmem:[%s468 + $0x58] sm:$0xff]
        %v1306 = vld [vmem:[%s468 + $0x60] sm:$0xff]
        %v1307 = vld [vmem:[%s468 + $0x68] sm:$0xff]
        %v1308 = vld [vmem:[%s468 + $0x70] sm:$0xff]
        %v1309 = vld [vmem:[%s468 + $0x78] sm:$0xff]
        %v1310 = vld [vmem:[%s468 + $0x80] sm:$0xff]
        %v1311 = vld [vmem:[%s468 + $0x88] sm:$0xff]
        %v1312 = vld [vmem:[%s468 + $0x90] sm:$0xff]
        %v1313 = vld [vmem:[%s468 + $0x98] sm:$0xff]
        %v1314 = vld [vmem:[%s468 + $0xa0] sm:$0xff]
        %v1315 = vld [vmem:[%s468 + $0xa8] sm:$0xff]
        %v1316 = vld [vmem:[%s468 + $0xb0] sm:$0xff]
        %v1317 = vld [vmem:[%s468 + $0xb8] sm:$0xff]
        %v1318 = vld [vmem:[%s468 + $0xc0] sm:$0xff]
        %v1319 = vld [vmem:[%s468 + $0xc8] sm:$0xff]
        %v1320 = vld [vmem:[%s468 + $0xd0] sm:$0xff]
        %v1321 = vld [vmem:[%s468 + $0xd8] sm:$0xff]
        %v1322 = vld [vmem:[%s468 + $0xe0] sm:$0xff]
        %v1323 = vld [vmem:[%s468 + $0xe8] sm:$0xff]
        %v1324 = vld [vmem:[%s468 + $0xf0] sm:$0xff]
        %v1325 = vld [vmem:[%s468 + $0xf8] sm:$0xff]
        %v1326 = vld [vmem:[%s468 + $0x100] sm:$0xff]
        %v1327 = vld [vmem:[%s468 + $0x108] sm:$0xff]
        %v1328 = vld [vmem:[%s468 + $0x110] sm:$0xff]
        %v1329 = vld [vmem:[%s468 + $0x118] sm:$0xff]
        %v1330 = vld [vmem:[%s468 + $0x120] sm:$0xff]
        %v1331 = vld [vmem:[%s468 + $0x128] sm:$0xff]
        %v1332 = vld [vmem:[%s468 + $0x130] sm:$0xff]
        %v1333 = vld [vmem:[%s468 + $0x138] sm:$0xff]
        %v1334 = vld [vmem:[%s468 + $0x140] sm:$0xff]
        %v1335 = vld [vmem:[%s468 + $0x148] sm:$0xff]
        %v1336 = vld [vmem:[%s468 + $0x150] sm:$0xff]
        %v1337 = vld [vmem:[%s468 + $0x158] sm:$0xff]
        %v1338 = vld [vmem:[%s468 + $0x160] sm:$0xff]
        %v1339 = vld [vmem:[%s468 + $0x168] sm:$0xff]
        %v1340 = vld [vmem:[%s468 + $0x170] sm:$0xff]
        %v1341 = vld [vmem:[%s468 + $0x178] sm:$0xff]
        %v1342 = vld [vmem:[%s468 + $0x180] sm:$0xff]
        %v1343 = vld [vmem:[%s468 + $0x188] sm:$0xff]
        %v1344 = vld [vmem:[%s468 + $0x190] sm:$0xff]
        %v1345 = vld [vmem:[%s468 + $0x198] sm:$0xff]
        %v1346 = vld [vmem:[%s468 + $0x1a0] sm:$0xff]
        %v1347 = vld [vmem:[%s468 + $0x1a8] sm:$0xff]
        %v1348 = vld [vmem:[%s468 + $0x1b0] sm:$0xff]
        %v1349 = vld [vmem:[%s468 + $0x1b8] sm:$0xff]
        %v1350 = vld [vmem:[%s468 + $0x1c0] sm:$0xff]
        %v1351 = vld [vmem:[%s468 + $0x1c8] sm:$0xff]
        %v1352 = vld [vmem:[%s468 + $0x1d0] sm:$0xff]
        %v1353 = vld [vmem:[%s468 + $0x1d8] sm:$0xff]
        %v1354 = vld [vmem:[%s468 + $0x1e0] sm:$0xff]
        %v1355 = vld [vmem:[%s468 + $0x1e8] sm:$0xff]
        %v1356 = vld [vmem:[%s468 + $0x1f0] sm:$0xff]
        %v1357 = vld [vmem:[%s468 + $0x1f8] sm:$0xff]
        %v1358 = vld [vmem:[%s468 + $0x200] sm:$0xff]
        %v1359 = vld [vmem:[%s468 + $0x208] sm:$0xff]
        %v1360 = vld [vmem:[%s468 + $0x210] sm:$0xff]
        %v1361 = vld [vmem:[%s468 + $0x218] sm:$0xff]
        %v1362 = vld [vmem:[%s468 + $0x220] sm:$0xff]
        %v1363 = vld [vmem:[%s468 + $0x228] sm:$0xff]
        %v1364 = vld [vmem:[%s468 + $0x230] sm:$0xff]
        %v1365 = vld [vmem:[%s468 + $0x238] sm:$0xff]
        %v1366 = vld [vmem:[%s468 + $0x240] sm:$0xff]
        %v1367 = vld [vmem:[%s468 + $0x248] sm:$0xff]
        %v1368 = vld [vmem:[%s468 + $0x250] sm:$0xff]
        %v1369 = vld [vmem:[%s468 + $0x258] sm:$0xff]
        %v1370 = vld [vmem:[%s468 + $0x260] sm:$0xff]
        %v1371 = vld [vmem:[%s468 + $0x268] sm:$0xff]
        %v1372 = vld [vmem:[%s468 + $0x270] sm:$0xff]
        %v1373 = vld [vmem:[%s468 + $0x278] sm:$0xff]
        %v1374 = vld [vmem:[%s468 + $0x280] sm:$0xff]
        %v1375 = vld [vmem:[%s468 + $0x288] sm:$0xff]
        %v1376 = vld [vmem:[%s468 + $0x290] sm:$0xff]
        %v1377 = vld [vmem:[%s468 + $0x298] sm:$0xff]
        %v1378 = vld [vmem:[%s468 + $0x2a0] sm:$0xff]
        %v1379 = vld [vmem:[%s468 + $0x2a8] sm:$0xff]
        %v1380 = vld [vmem:[%s468 + $0x2b0] sm:$0xff]
        %v1381 = vld [vmem:[%s468 + $0x2b8] sm:$0xff]
        %v1382 = vld [vmem:[%s468 + $0x2c0] sm:$0xff]
        %v1383 = vld [vmem:[%s468 + $0x2c8] sm:$0xff]
        %v1384 = vld [vmem:[%s468 + $0x2d0] sm:$0xff]
        %v1385 = vld [vmem:[%s468 + $0x2d8] sm:$0xff]
        %v1386 = vld [vmem:[%s468 + $0x2e0] sm:$0xff]
        %v1387 = vld [vmem:[%s468 + $0x2e8] sm:$0xff]
        %v1388 = vld [vmem:[%s468 + $0x2f0] sm:$0xff]
        %v1389 = vld [vmem:[%s468 + $0x2f8] sm:$0xff]
        %v1390 = vld [vmem:[%s468 + $0x300] sm:$0xff]
        %v1391 = vld [vmem:[%s468 + $0x308] sm:$0xff]
        %v1392 = vld [vmem:[%s468 + $0x310] sm:$0xff]
        %v1393 = vld [vmem:[%s468 + $0x318] sm:$0xff]
        %v1394 = vld [vmem:[%s468 + $0x320] sm:$0xff]
        %v1395 = vld [vmem:[%s468 + $0x328] sm:$0xff]
        %v1396 = vld [vmem:[%s468 + $0x330] sm:$0xff]
        %v1397 = vld [vmem:[%s468 + $0x338] sm:$0xff]
        %v1398 = vld [vmem:[%s468 + $0x340] sm:$0xff]
        %v1399 = vld [vmem:[%s468 + $0x348] sm:$0xff]
        %v1400 = vld [vmem:[%s468 + $0x350] sm:$0xff]
        %v1401 = vld [vmem:[%s468 + $0x358] sm:$0xff]
        %v1402 = vld [vmem:[%s468 + $0x360] sm:$0xff]
        %v1403 = vld [vmem:[%s468 + $0x368] sm:$0xff]
        %v1404 = vld [vmem:[%s468 + $0x370] sm:$0xff]
        %v1405 = vld [vmem:[%s468 + $0x378] sm:$0xff]
        %v1406 = vld [vmem:[%s468 + $0x380] sm:$0xff]
        %v1407 = vld [vmem:[%s468 + $0x388] sm:$0xff]
        %v1408 = vld [vmem:[%s468 + $0x390] sm:$0xff]
        %v1409 = vld [vmem:[%s468 + $0x398] sm:$0xff]
        %v1410 = vld [vmem:[%s468 + $0x3a0] sm:$0xff]
        %v1411 = vld [vmem:[%s468 + $0x3a8] sm:$0xff]
        %v1412 = vld [vmem:[%s468 + $0x3b0] sm:$0xff]
        %v1413 = vld [vmem:[%s468 + $0x3b8] sm:$0xff]
        %v1414 = vld [vmem:[%s468 + $0x3c0] sm:$0xff]
        %v1415 = vld [vmem:[%s468 + $0x3c8] sm:$0xff]
        %v1416 = vld [vmem:[%s468 + $0x3d0] sm:$0xff]
        %v1417 = vld [vmem:[%s468 + $0x3d8] sm:$0xff]
        %v1418 = vld [vmem:[%s468 + $0x3e0] sm:$0xff]
        %v1419 = vld [vmem:[%s468 + $0x3e8] sm:$0xff]
        %v1420 = vld [vmem:[%s468 + $0x3f0] sm:$0xff]
        %v1421 = vld [vmem:[%s468 + $0x3f8] sm:$0xff]
        %v1422 = vld [vmem:[%s468 + $0x400] sm:$0xff]
        %v1423 = vld [vmem:[%s468 + $0x408] sm:$0xff]
        %v1424 = vld [vmem:[%s468 + $0x410] sm:$0xff]
        %v1425 = vld [vmem:[%s468 + $0x418] sm:$0xff]
        %v1426 = vld [vmem:[%s468 + $0x420] sm:$0xff]
        %v1427 = vld [vmem:[%s468 + $0x428] sm:$0xff]
        %v1428 = vld [vmem:[%s468 + $0x430] sm:$0xff]
        %v1429 = vld [vmem:[%s468 + $0x438] sm:$0xff]
        %v1430 = vld [vmem:[%s468 + $0x440] sm:$0xff]
        %v1431 = vld [vmem:[%s468 + $0x448] sm:$0xff]
        %v1432 = vld [vmem:[%s468 + $0x450] sm:$0xff]
        %v1433 = vld [vmem:[%s468 + $0x458] sm:$0xff]
        %v1434 = vld [vmem:[%s468 + $0x460] sm:$0xff]
        %v1435 = vld [vmem:[%s468 + $0x468] sm:$0xff]
        %v1436 = vld [vmem:[%s468 + $0x470] sm:$0xff]
        %v1437 = vld [vmem:[%s468 + $0x478] sm:$0xff]
        %v1438 = vld [vmem:[%s468 + $0x480] sm:$0xff]
        %v1439 = vld [vmem:[%s468 + $0x488] sm:$0xff]
        %v1440 = vld [vmem:[%s468 + $0x490] sm:$0xff]
        %v1441 = vld [vmem:[%s468 + $0x498] sm:$0xff]
        %v1442 = vld [vmem:[%s468 + $0x4a0] sm:$0xff]
        %v1443 = vld [vmem:[%s468 + $0x4a8] sm:$0xff]
        %v1444 = vld [vmem:[%s468 + $0x4b0] sm:$0xff]
        %v1445 = vld [vmem:[%s468 + $0x4b8] sm:$0xff]
        %v1446 = vld [vmem:[%s468 + $0x4c0] sm:$0xff]
        %v1447 = vld [vmem:[%s468 + $0x4c8] sm:$0xff]
        %v1448 = vld [vmem:[%s468 + $0x4d0] sm:$0xff]
        %v1449 = vld [vmem:[%s468 + $0x4d8] sm:$0xff]
        %v1450 = vld [vmem:[%s468 + $0x4e0] sm:$0xff]
        %v1451 = vld [vmem:[%s468 + $0x4e8] sm:$0xff]
        %v1452 = vld [vmem:[%s468 + $0x4f0] sm:$0xff]
        %v1453 = vld [vmem:[%s468 + $0x4f8] sm:$0xff]
        %v1454 = vld [vmem:[%s468 + $0x500] sm:$0xff]
        %v1455 = vld [vmem:[%s468 + $0x508] sm:$0xff]
        %v1456 = vld [vmem:[%s468 + $0x510] sm:$0xff]
        %v1457 = vld [vmem:[%s468 + $0x518] sm:$0xff]
        %v1458 = vld [vmem:[%s468 + $0x520] sm:$0xff]
        %v1459 = vld [vmem:[%s468 + $0x528] sm:$0xff]
        %v1460 = vld [vmem:[%s468 + $0x530] sm:$0xff]
        %v1461 = vld [vmem:[%s468 + $0x538] sm:$0xff]
        %v1462 = vld [vmem:[%s468 + $0x540] sm:$0xff]
        %v1463 = vld [vmem:[%s468 + $0x548] sm:$0xff]
        %v1464 = vld [vmem:[%s468 + $0x550] sm:$0xff]
        %v1465 = vld [vmem:[%s468 + $0x558] sm:$0xff]
        %v1466 = vld [vmem:[%s468 + $0x560] sm:$0xff]
        %v1467 = vld [vmem:[%s468 + $0x568] sm:$0xff]
        %v1468 = vld [vmem:[%s468 + $0x570] sm:$0xff]
        %v1469 = vld [vmem:[%s468 + $0x578] sm:$0xff]
        %v1470 = vld [vmem:[%s468 + $0x580] sm:$0xff]
        %v1471 = vld [vmem:[%s468 + $0x588] sm:$0xff]
        %v1472 = vld [vmem:[%s468 + $0x590] sm:$0xff]
        %v1473 = vld [vmem:[%s468 + $0x598] sm:$0xff]
        %v1474 = vld [vmem:[%s468 + $0x5a0] sm:$0xff]
        %v1475 = vld [vmem:[%s468 + $0x5a8] sm:$0xff]
        %v1476 = vld [vmem:[%s468 + $0x5b0] sm:$0xff]
        %v1477 = vld [vmem:[%s468 + $0x5b8] sm:$0xff]
        %v1478 = vld [vmem:[%s468 + $0x5c0] sm:$0xff]
        %v1479 = vld [vmem:[%s468 + $0x5c8] sm:$0xff]
        %v1480 = vld [vmem:[%s468 + $0x5d0] sm:$0xff]
        %v1481 = vld [vmem:[%s468 + $0x5d8] sm:$0xff]
        %v1482 = vld [vmem:[%s468 + $0x5e0] sm:$0xff]
        %v1483 = vld [vmem:[%s468 + $0x5e8] sm:$0xff]
        %v1484 = vld [vmem:[%s468 + $0x5f0] sm:$0xff]
        %v1485 = vld [vmem:[%s468 + $0x5f8] sm:$0xff]
        %v1486 = vld [vmem:[%s468 + $0x600] sm:$0xff]
        %v1487 = vld [vmem:[%s468 + $0x608] sm:$0xff]
        %v1488 = vld [vmem:[%s468 + $0x610] sm:$0xff]
        %v1489 = vld [vmem:[%s468 + $0x618] sm:$0xff]
        %v1490 = vld [vmem:[%s468 + $0x620] sm:$0xff]
        %v1491 = vld [vmem:[%s468 + $0x628] sm:$0xff]
        %v1492 = vld [vmem:[%s468 + $0x630] sm:$0xff]
        %v1493 = vld [vmem:[%s468 + $0x638] sm:$0xff]
        %v1494 = vld [vmem:[%s468 + $0x640] sm:$0xff]
        %v1495 = vld [vmem:[%s468 + $0x648] sm:$0xff]
        %v1496 = vld [vmem:[%s468 + $0x650] sm:$0xff]
        %v1497 = vld [vmem:[%s468 + $0x658] sm:$0xff]
        %v1498 = vld [vmem:[%s468 + $0x660] sm:$0xff]
        %v1499 = vld [vmem:[%s468 + $0x668] sm:$0xff]
        %v1500 = vld [vmem:[%s468 + $0x670] sm:$0xff]
        %v1501 = vld [vmem:[%s468 + $0x678] sm:$0xff]
        %v1502 = vld [vmem:[%s468 + $0x680] sm:$0xff]
        %v1503 = vld [vmem:[%s468 + $0x688] sm:$0xff]
        %v1504 = vld [vmem:[%s468 + $0x690] sm:$0xff]
        %v1505 = vld [vmem:[%s468 + $0x698] sm:$0xff]
        %v1506 = vld [vmem:[%s468 + $0x6a0] sm:$0xff]
        %v1507 = vld [vmem:[%s468 + $0x6a8] sm:$0xff]
        %v1508 = vld [vmem:[%s468 + $0x6b0] sm:$0xff]
        %v1509 = vld [vmem:[%s468 + $0x6b8] sm:$0xff]
        %v1510 = vld [vmem:[%s468 + $0x6c0] sm:$0xff]
        %v1511 = vld [vmem:[%s468 + $0x6c8] sm:$0xff]
        %v1512 = vld [vmem:[%s468 + $0x6d0] sm:$0xff]
        %v1513 = vld [vmem:[%s468 + $0x6d8] sm:$0xff]
        %v1514 = vld [vmem:[%s468 + $0x6e0] sm:$0xff]
        %v1515 = vld [vmem:[%s468 + $0x6e8] sm:$0xff]
        %v1516 = vld [vmem:[%s468 + $0x6f0] sm:$0xff]
        %v1517 = vld [vmem:[%s468 + $0x6f8] sm:$0xff]
        %v1518 = vld [vmem:[%s468 + $0x700] sm:$0xff]
        %v1519 = vld [vmem:[%s468 + $0x708] sm:$0xff]
        %v1520 = vld [vmem:[%s468 + $0x710] sm:$0xff]
        %v1521 = vld [vmem:[%s468 + $0x718] sm:$0xff]
        %v1522 = vld [vmem:[%s468 + $0x720] sm:$0xff]
        %v1523 = vld [vmem:[%s468 + $0x728] sm:$0xff]
        %v1524 = vld [vmem:[%s468 + $0x730] sm:$0xff]
        %v1525 = vld [vmem:[%s468 + $0x738] sm:$0xff]
        %v1526 = vld [vmem:[%s468 + $0x740] sm:$0xff]
        %v1527 = vld [vmem:[%s468 + $0x748] sm:$0xff]
        %v1528 = vld [vmem:[%s468 + $0x750] sm:$0xff]
        %v1529 = vld [vmem:[%s468 + $0x758] sm:$0xff]
        %v1530 = vld [vmem:[%s468 + $0x760] sm:$0xff]
        %v1531 = vld [vmem:[%s468 + $0x768] sm:$0xff]
        %v1532 = vld [vmem:[%s468 + $0x770] sm:$0xff]
        %v1533 = vld [vmem:[%s468 + $0x778] sm:$0xff]
        %v1534 = vld [vmem:[%s468 + $0x780] sm:$0xff]
        %v1535 = vld [vmem:[%s468 + $0x788] sm:$0xff]
        %v1536 = vld [vmem:[%s468 + $0x790] sm:$0xff]
        %v1537 = vld [vmem:[%s468 + $0x798] sm:$0xff]
        %v1538 = vld [vmem:[%s468 + $0x7a0] sm:$0xff]
        %v1539 = vld [vmem:[%s468 + $0x7a8] sm:$0xff]
        %v1540 = vld [vmem:[%s468 + $0x7b0] sm:$0xff]
        %v1541 = vld [vmem:[%s468 + $0x7b8] sm:$0xff]
        %v1542 = vld [vmem:[%s468 + $0x7c0] sm:$0xff]
        %v1543 = vld [vmem:[%s468 + $0x7c8] sm:$0xff]
        %v1544 = vld [vmem:[%s468 + $0x7d0] sm:$0xff]
        %v1545 = vld [vmem:[%s468 + $0x7d8] sm:$0xff]
        %v1546 = vld [vmem:[%s468 + $0x7e0] sm:$0xff]
        %v1547 = vld [vmem:[%s468 + $0x7e8] sm:$0xff]
        %v1548 = vld [vmem:[%s468 + $0x7f0] sm:$0xff]
        %v1549 = vld [vmem:[%s468 + $0x7f8] sm:$0xff]
        %v1550 = vld [vmem:[%s468 + $0x800] sm:$0xff]
        %v1551 = vld [vmem:[%s468 + $0x808] sm:$0xff]
        %v1552 = vld [vmem:[%s468 + $0x810] sm:$0xff]
        %v1553 = vld [vmem:[%s468 + $0x818] sm:$0xff]
        %v1554 = vld [vmem:[%s468 + $0x820] sm:$0xff]
        %v1555 = vld [vmem:[%s468 + $0x828] sm:$0xff]
        %v1556 = vld [vmem:[%s468 + $0x830] sm:$0xff]
        %v1557 = vld [vmem:[%s468 + $0x838] sm:$0xff]
        %v1558 = vld [vmem:[%s468 + $0x840] sm:$0xff]
        %v1559 = vld [vmem:[%s468 + $0x848] sm:$0xff]
        %v1560 = vld [vmem:[%s468 + $0x850] sm:$0xff]
        %v1561 = vld [vmem:[%s468 + $0x858] sm:$0xff]
        %v1562 = vld [vmem:[%s468 + $0x860] sm:$0xff]
        %v1563 = vld [vmem:[%s468 + $0x868] sm:$0xff]
        %v1564 = vld [vmem:[%s468 + $0x870] sm:$0xff]
        %v1565 = vld [vmem:[%s468 + $0x878] sm:$0xff]
        %v1566 = vld [vmem:[%s468 + $0x880] sm:$0xff]
        %v1567 = vld [vmem:[%s468 + $0x888] sm:$0xff]
        %v1568 = vld [vmem:[%s468 + $0x890] sm:$0xff]
        %v1569 = vld [vmem:[%s468 + $0x898] sm:$0xff]
        %v1570 = vld [vmem:[%s468 + $0x8a0] sm:$0xff]
        %v1571 = vld [vmem:[%s468 + $0x8a8] sm:$0xff]
        %v1572 = vld [vmem:[%s468 + $0x8b0] sm:$0xff]
        %v1573 = vld [vmem:[%s468 + $0x8b8] sm:$0xff]
        %v1574 = vld [vmem:[%s468 + $0x8c0] sm:$0xff]
        %v1575 = vld [vmem:[%s468 + $0x8c8] sm:$0xff]
        %v1576 = vld [vmem:[%s468 + $0x8d0] sm:$0xff]
        %v1577 = vld [vmem:[%s468 + $0x8d8] sm:$0xff]
        %v1578 = vld [vmem:[%s468 + $0x8e0] sm:$0xff]
        %v1579 = vld [vmem:[%s468 + $0x8e8] sm:$0xff]
        %v1580 = vld [vmem:[%s468 + $0x8f0] sm:$0xff]
        %v1581 = vld [vmem:[%s468 + $0x8f8] sm:$0xff]
        %v1582 = vld [vmem:[%s468 + $0x900] sm:$0xff]
        %v1583 = vld [vmem:[%s468 + $0x908] sm:$0xff]
        %v1584 = vld [vmem:[%s468 + $0x910] sm:$0xff]
        %v1585 = vld [vmem:[%s468 + $0x918] sm:$0xff]
        %v1586 = vld [vmem:[%s468 + $0x920] sm:$0xff]
        %v1587 = vld [vmem:[%s468 + $0x928] sm:$0xff]
        %v1588 = vld [vmem:[%s468 + $0x930] sm:$0xff]
        %v1589 = vld [vmem:[%s468 + $0x938] sm:$0xff]
        %v1590 = vld [vmem:[%s468 + $0x940] sm:$0xff]
        %v1591 = vld [vmem:[%s468 + $0x948] sm:$0xff]
        %v1592 = vld [vmem:[%s468 + $0x950] sm:$0xff]
        %v1593 = vld [vmem:[%s468 + $0x958] sm:$0xff]
        %v1594 = vld [vmem:[%s468 + $0x960] sm:$0xff]
        %v1595 = vld [vmem:[%s468 + $0x968] sm:$0xff]
        %v1596 = vld [vmem:[%s468 + $0x970] sm:$0xff]
        %v1597 = vld [vmem:[%s468 + $0x978] sm:$0xff]
        %v1598 = vld [vmem:[%s468 + $0x980] sm:$0xff]
        %v1599 = vld [vmem:[%s468 + $0x988] sm:$0xff]
        %v1600 = vld [vmem:[%s468 + $0x990] sm:$0xff]
        %v1601 = vld [vmem:[%s468 + $0x998] sm:$0xff]
        %v1602 = vld [vmem:[%s468 + $0x9a0] sm:$0xff]
        %v1603 = vld [vmem:[%s468 + $0x9a8] sm:$0xff]
        %v1604 = vld [vmem:[%s468 + $0x9b0] sm:$0xff]
        %v1605 = vld [vmem:[%s468 + $0x9b8] sm:$0xff]
        %v1606 = vld [vmem:[%s468 + $0x9c0] sm:$0xff]
        %v1607 = vld [vmem:[%s468 + $0x9c8] sm:$0xff]
        %v1608 = vld [vmem:[%s468 + $0x9d0] sm:$0xff]
        %v1609 = vld [vmem:[%s468 + $0x9d8] sm:$0xff]
        %v1610 = vld [vmem:[%s468 + $0x9e0] sm:$0xff]
        %v1611 = vld [vmem:[%s468 + $0x9e8] sm:$0xff]
        %v1612 = vld [vmem:[%s468 + $0x9f0] sm:$0xff]
        %v1613 = vld [vmem:[%s468 + $0x9f8] sm:$0xff]
        %v1614 = vld [vmem:[%s468 + $0xa00] sm:$0xff]
        %v1615 = vld [vmem:[%s468 + $0xa08] sm:$0xff]
        %v1616 = vld [vmem:[%s468 + $0xa10] sm:$0xff]
        %v1617 = vld [vmem:[%s468 + $0xa18] sm:$0xff]
        %v1618 = vld [vmem:[%s468 + $0xa20] sm:$0xff]
        %v1619 = vld [vmem:[%s468 + $0xa28] sm:$0xff]
        %v1620 = vld [vmem:[%s468 + $0xa30] sm:$0xff]
        %v1621 = vld [vmem:[%s468 + $0xa38] sm:$0xff]
        %v1622 = vld [vmem:[%s468 + $0xa40] sm:$0xff]
        %v1623 = vld [vmem:[%s468 + $0xa48] sm:$0xff]
        %v1624 = vld [vmem:[%s468 + $0xa50] sm:$0xff]
        %v1625 = vld [vmem:[%s468 + $0xa58] sm:$0xff]
        %v1626 = vld [vmem:[%s468 + $0xa60] sm:$0xff]
        %v1627 = vld [vmem:[%s468 + $0xa68] sm:$0xff]
        %v1628 = vld [vmem:[%s468 + $0xa70] sm:$0xff]
        %v1629 = vld [vmem:[%s468 + $0xa78] sm:$0xff]
        %v1630 = vld [vmem:[%s468 + $0xa80] sm:$0xff]
        %v1631 = vld [vmem:[%s468 + $0xa88] sm:$0xff]
        %v1632 = vld [vmem:[%s468 + $0xa90] sm:$0xff]
        %v1633 = vld [vmem:[%s468 + $0xa98] sm:$0xff]
        %v1634 = vld [vmem:[%s468 + $0xaa0] sm:$0xff]
        %v1635 = vld [vmem:[%s468 + $0xaa8] sm:$0xff]
        %v1636 = vld [vmem:[%s468 + $0xab0] sm:$0xff]
        %v1637 = vld [vmem:[%s468 + $0xab8] sm:$0xff]
        %v1638 = vld [vmem:[%s468 + $0xac0] sm:$0xff]
        %v1639 = vld [vmem:[%s468 + $0xac8] sm:$0xff]
        %v1640 = vld [vmem:[%s468 + $0xad0] sm:$0xff]
        %v1641 = vld [vmem:[%s468 + $0xad8] sm:$0xff]
        %v1642 = vld [vmem:[%s468 + $0xae0] sm:$0xff]
        %v1643 = vld [vmem:[%s468 + $0xae8] sm:$0xff]
        %v1644 = vld [vmem:[%s468 + $0xaf0] sm:$0xff]
        %v1645 = vld [vmem:[%s468 + $0xaf8] sm:$0xff]
        %v1646 = vld [vmem:[%s468 + $0xb00] sm:$0xff]
        %v1647 = vld [vmem:[%s468 + $0xb08] sm:$0xff]
        %v1648 = vld [vmem:[%s468 + $0xb10] sm:$0xff]
        %v1649 = vld [vmem:[%s468 + $0xb18] sm:$0xff]
        %v1650 = vld [vmem:[%s468 + $0xb20] sm:$0xff]
        %v1651 = vld [vmem:[%s468 + $0xb28] sm:$0xff]
        %v1652 = vld [vmem:[%s468 + $0xb30] sm:$0xff]
        %v1653 = vld [vmem:[%s468 + $0xb38] sm:$0xff]
        %v1654 = vld [vmem:[%s468 + $0xb40] sm:$0xff]
        %v1655 = vld [vmem:[%s468 + $0xb48] sm:$0xff]
        %v1656 = vld [vmem:[%s468 + $0xb50] sm:$0xff]
        %v1657 = vld [vmem:[%s468 + $0xb58] sm:$0xff]
        %v1658 = vld [vmem:[%s468 + $0xb60] sm:$0xff]
        %v1659 = vld [vmem:[%s468 + $0xb68] sm:$0xff]
        %v1660 = vld [vmem:[%s468 + $0xb70] sm:$0xff]
        %v1661 = vld [vmem:[%s468 + $0xb78] sm:$0xff]
        %v1662 = vld [vmem:[%s468 + $0xb80] sm:$0xff]
        %v1663 = vld [vmem:[%s468 + $0xb88] sm:$0xff]
        %v1664 = vld [vmem:[%s468 + $0xb90] sm:$0xff]
        %v1665 = vld [vmem:[%s468 + $0xb98] sm:$0xff]
        %v1666 = vld [vmem:[%s468 + $0xba0] sm:$0xff]
        %v1667 = vld [vmem:[%s468 + $0xba8] sm:$0xff]
        %v1668 = vld [vmem:[%s468 + $0xbb0] sm:$0xff]
        %v1669 = vld [vmem:[%s468 + $0xbb8] sm:$0xff]
        %v1670 = vld [vmem:[%s468 + $0xbc0] sm:$0xff]
        %v1671 = vld [vmem:[%s468 + $0xbc8] sm:$0xff]
        %v1672 = vld [vmem:[%s468 + $0xbd0] sm:$0xff]
        %v1673 = vld [vmem:[%s468 + $0xbd8] sm:$0xff]
        %v1674 = vld [vmem:[%s468 + $0xbe0] sm:$0xff]
        %v1675 = vld [vmem:[%s468 + $0xbe8] sm:$0xff]
        %v1676 = vld [vmem:[%s468 + $0xbf0] sm:$0xff]
        %v1677 = vld [vmem:[%s468 + $0xbf8] sm:$0xff]
        %v1678 = vld [vmem:[%s468 + $0xc00] sm:$0xff]
        %v1679 = vld [vmem:[%s468 + $0xc08] sm:$0xff]
        %v1680 = vld [vmem:[%s468 + $0xc10] sm:$0xff]
        %v1681 = vld [vmem:[%s468 + $0xc18] sm:$0xff]
        %v1682 = vld [vmem:[%s468 + $0xc20] sm:$0xff]
        %v1683 = vld [vmem:[%s468 + $0xc28] sm:$0xff]
        %v1684 = vld [vmem:[%s468 + $0xc30] sm:$0xff]
        %v1685 = vld [vmem:[%s468 + $0xc38] sm:$0xff]
        %v1686 = vld [vmem:[%s468 + $0xc40] sm:$0xff]
        %v1687 = vld [vmem:[%s468 + $0xc48] sm:$0xff]
        %v1688 = vld [vmem:[%s468 + $0xc50] sm:$0xff]
        %v1689 = vld [vmem:[%s468 + $0xc58] sm:$0xff]
        %v1690 = vld [vmem:[%s468 + $0xc60] sm:$0xff]
        %v1691 = vld [vmem:[%s468 + $0xc68] sm:$0xff]
        %v1692 = vld [vmem:[%s468 + $0xc70] sm:$0xff]
        %v1693 = vld [vmem:[%s468 + $0xc78] sm:$0xff]
        %v1694 = vld [vmem:[%s468 + $0xc80] sm:$0xff]
        %v1695 = vld [vmem:[%s468 + $0xc88] sm:$0xff]
        %v1696 = vld [vmem:[%s468 + $0xc90] sm:$0xff]
        %v1697 = vld [vmem:[%s468 + $0xc98] sm:$0xff]
        %v1698 = vld [vmem:[%s468 + $0xca0] sm:$0xff]
        %v1699 = vld [vmem:[%s468 + $0xca8] sm:$0xff]
        %v1700 = vld [vmem:[%s468 + $0xcb0] sm:$0xff]
        %v1701 = vld [vmem:[%s468 + $0xcb8] sm:$0xff]
        %v1702 = vld [vmem:[%s468 + $0xcc0] sm:$0xff]
        %v1703 = vld [vmem:[%s468 + $0xcc8] sm:$0xff]
        %v1704 = vld [vmem:[%s468 + $0xcd0] sm:$0xff]
        %v1705 = vld [vmem:[%s468 + $0xcd8] sm:$0xff]
        %v1706 = vld [vmem:[%s468 + $0xce0] sm:$0xff]
        %v1707 = vld [vmem:[%s468 + $0xce8] sm:$0xff]
        %v1708 = vld [vmem:[%s468 + $0xcf0] sm:$0xff]
        %v1709 = vld [vmem:[%s468 + $0xcf8] sm:$0xff]
        %v1710 = vld [vmem:[%s468 + $0xd00] sm:$0xff]
        %v1711 = vld [vmem:[%s468 + $0xd08] sm:$0xff]
        %v1712 = vld [vmem:[%s468 + $0xd10] sm:$0xff]
        %v1713 = vld [vmem:[%s468 + $0xd18] sm:$0xff]
        %v1714 = vld [vmem:[%s468 + $0xd20] sm:$0xff]
        %v1715 = vld [vmem:[%s468 + $0xd28] sm:$0xff]
        %v1716 = vld [vmem:[%s468 + $0xd30] sm:$0xff]
        %v1717 = vld [vmem:[%s468 + $0xd38] sm:$0xff]
        %v1718 = vld [vmem:[%s468 + $0xd40] sm:$0xff]
        %v1719 = vld [vmem:[%s468 + $0xd48] sm:$0xff]
        %v1720 = vld [vmem:[%s468 + $0xd50] sm:$0xff]
        %v1721 = vld [vmem:[%s468 + $0xd58] sm:$0xff]
        %v1722 = vld [vmem:[%s468 + $0xd60] sm:$0xff]
        %v1723 = vld [vmem:[%s468 + $0xd68] sm:$0xff]
        %v1724 = vld [vmem:[%s468 + $0xd70] sm:$0xff]
        %v1725 = vld [vmem:[%s468 + $0xd78] sm:$0xff]
        %v1726 = vld [vmem:[%s468 + $0xd80] sm:$0xff]
        %v1727 = vld [vmem:[%s468 + $0xd88] sm:$0xff]
        %v1728 = vld [vmem:[%s468 + $0xd90] sm:$0xff]
        %v1729 = vld [vmem:[%s468 + $0xd98] sm:$0xff]
        %v1730 = vld [vmem:[%s468 + $0xda0] sm:$0xff]
        %v1731 = vld [vmem:[%s468 + $0xda8] sm:$0xff]
        %v1732 = vld [vmem:[%s468 + $0xdb0] sm:$0xff]
        %v1733 = vld [vmem:[%s468 + $0xdb8] sm:$0xff]
        %v1734 = vld [vmem:[%s468 + $0xdc0] sm:$0xff]
        %v1735 = vld [vmem:[%s468 + $0xdc8] sm:$0xff]
        %v1736 = vld [vmem:[%s468 + $0xdd0] sm:$0xff]
        %v1737 = vld [vmem:[%s468 + $0xdd8] sm:$0xff]
        %v1738 = vld [vmem:[%s468 + $0xde0] sm:$0xff]
        %v1739 = vld [vmem:[%s468 + $0xde8] sm:$0xff]
        %v1740 = vld [vmem:[%s468 + $0xdf0] sm:$0xff]
        %v1741 = vld [vmem:[%s468 + $0xdf8] sm:$0xff]
        %v1742 = vld [vmem:[%s468 + $0xe00] sm:$0xff]
        %v1743 = vld [vmem:[%s468 + $0xe08] sm:$0xff]
        %v1744 = vld [vmem:[%s468 + $0xe10] sm:$0xff]
        %v1745 = vld [vmem:[%s468 + $0xe18] sm:$0xff]
        %v1746 = vld [vmem:[%s468 + $0xe20] sm:$0xff]
        %v1747 = vld [vmem:[%s468 + $0xe28] sm:$0xff]
        %v1748 = vld [vmem:[%s468 + $0xe30] sm:$0xff]
        %v1749 = vld [vmem:[%s468 + $0xe38] sm:$0xff]
        %v1750 = vld [vmem:[%s468 + $0xe40] sm:$0xff]
        %v1751 = vld [vmem:[%s468 + $0xe48] sm:$0xff]
        %v1752 = vld [vmem:[%s468 + $0xe50] sm:$0xff]
        %v1753 = vld [vmem:[%s468 + $0xe58] sm:$0xff]
        %v1754 = vld [vmem:[%s468 + $0xe60] sm:$0xff]
        %v1755 = vld [vmem:[%s468 + $0xe68] sm:$0xff]
        %v1756 = vld [vmem:[%s468 + $0xe70] sm:$0xff]
        %v1757 = vld [vmem:[%s468 + $0xe78] sm:$0xff]
        %v1758 = vld [vmem:[%s468 + $0xe80] sm:$0xff]
        %v1759 = vld [vmem:[%s468 + $0xe88] sm:$0xff]
        %v1760 = vld [vmem:[%s468 + $0xe90] sm:$0xff]
        %v1761 = vld [vmem:[%s468 + $0xe98] sm:$0xff]
        %v1762 = vld [vmem:[%s468 + $0xea0] sm:$0xff]
        %v1763 = vld [vmem:[%s468 + $0xea8] sm:$0xff]
        %v1764 = vld [vmem:[%s468 + $0xeb0] sm:$0xff]
        %v1765 = vld [vmem:[%s468 + $0xeb8] sm:$0xff]
        %v1766 = vld [vmem:[%s468 + $0xec0] sm:$0xff]
        %v1767 = vld [vmem:[%s468 + $0xec8] sm:$0xff]
        %v1768 = vld [vmem:[%s468 + $0xed0] sm:$0xff]
        %v1769 = vld [vmem:[%s468 + $0xed8] sm:$0xff]
        %v1770 = vld [vmem:[%s468 + $0xee0] sm:$0xff]
        %v1771 = vld [vmem:[%s468 + $0xee8] sm:$0xff]
        %v1772 = vld [vmem:[%s468 + $0xef0] sm:$0xff]
        %v1773 = vld [vmem:[%s468 + $0xef8] sm:$0xff]
        %v1774 = vld [vmem:[%s468 + $0xf00] sm:$0xff]
        %v1775 = vld [vmem:[%s468 + $0xf08] sm:$0xff]
        %v1776 = vld [vmem:[%s468 + $0xf10] sm:$0xff]
        %v1777 = vld [vmem:[%s468 + $0xf18] sm:$0xff]
        %v1778 = vld [vmem:[%s468 + $0xf20] sm:$0xff]
        %v1779 = vld [vmem:[%s468 + $0xf28] sm:$0xff]
        %v1780 = vld [vmem:[%s468 + $0xf30] sm:$0xff]
        %v1781 = vld [vmem:[%s468 + $0xf38] sm:$0xff]
        %v1782 = vld [vmem:[%s468 + $0xf40] sm:$0xff]
        %v1783 = vld [vmem:[%s468 + $0xf48] sm:$0xff]
        %v1784 = vld [vmem:[%s468 + $0xf50] sm:$0xff]
        %v1785 = vld [vmem:[%s468 + $0xf58] sm:$0xff]
        %v1786 = vld [vmem:[%s468 + $0xf60] sm:$0xff]
        %v1787 = vld [vmem:[%s468 + $0xf68] sm:$0xff]
        %v1788 = vld [vmem:[%s468 + $0xf70] sm:$0xff]
        %v1789 = vld [vmem:[%s468 + $0xf78] sm:$0xff]
        %v1790 = vld [vmem:[%s468 + $0xf80] sm:$0xff]
        %v1791 = vld [vmem:[%s468 + $0xf88] sm:$0xff]
        %v1792 = vld [vmem:[%s468 + $0xf90] sm:$0xff]
        %v1793 = vld [vmem:[%s468 + $0xf98] sm:$0xff]
        %v1794 = vld [vmem:[%s468 + $0xfa0] sm:$0xff]
        %v1795 = vld [vmem:[%s468 + $0xfa8] sm:$0xff]
        %v1796 = vld [vmem:[%s468 + $0xfb0] sm:$0xff]
        %v1797 = vld [vmem:[%s468 + $0xfb8] sm:$0xff]
        %v1798 = vld [vmem:[%s468 + $0xfc0] sm:$0xff]
        %v1799 = vld [vmem:[%s468 + $0xfc8] sm:$0xff]
        %v1800 = vld [vmem:[%s468 + $0xfd0] sm:$0xff]
        %v1801 = vld [vmem:[%s468 + $0xfd8] sm:$0xff]
        %v1802 = vld [vmem:[%s468 + $0xfe0] sm:$0xff]
        %v1803 = vld [vmem:[%s468 + $0xfe8] sm:$0xff]
        %v1804 = vld [vmem:[%s468 + $0xff0] sm:$0xff]
        %v1805 = vld [vmem:[%s468 + $0xff8] sm:$0xff]
        %v1806 = vld [vmem:[%s468 + $0x1000] sm:$0xff]
        %v1807 = vld [vmem:[%s468 + $0x1008] sm:$0xff]
        %v1808 = vld [vmem:[%s468 + $0x1010] sm:$0xff]
        %v1809 = vld [vmem:[%s468 + $0x1018] sm:$0xff]
        %v1810 = vld [vmem:[%s468 + $0x1020] sm:$0xff]
        %v1811 = vld [vmem:[%s468 + $0x1028] sm:$0xff]
        %v1812 = vld [vmem:[%s468 + $0x1030] sm:$0xff]
        %v1813 = vld [vmem:[%s468 + $0x1038] sm:$0xff]
        %v1814 = vld [vmem:[%s468 + $0x1040] sm:$0xff]
        %v1815 = vld [vmem:[%s468 + $0x1048] sm:$0xff]
        %v1816 = vld [vmem:[%s468 + $0x1050] sm:$0xff]
        %v1817 = vld [vmem:[%s468 + $0x1058] sm:$0xff]
        %v1818 = vld [vmem:[%s468 + $0x1060] sm:$0xff]
        %v1819 = vld [vmem:[%s468 + $0x1068] sm:$0xff]
        %v1820 = vld [vmem:[%s468 + $0x1070] sm:$0xff]
        %v1821 = vld [vmem:[%s468 + $0x1078] sm:$0xff]
        %v1822 = vld [vmem:[%s468 + $0x1080] sm:$0xff]
        %v1823 = vld [vmem:[%s468 + $0x1088] sm:$0xff]
        %v1824 = vld [vmem:[%s468 + $0x1090] sm:$0xff]
        %v1825 = vld [vmem:[%s468 + $0x1098] sm:$0xff]
        %v1826 = vld [vmem:[%s468 + $0x10a0] sm:$0xff]
        %v1827 = vld [vmem:[%s468 + $0x10a8] sm:$0xff]
        %v1828 = vld [vmem:[%s468 + $0x10b0] sm:$0xff]
        %v1829 = vld [vmem:[%s468 + $0x10b8] sm:$0xff]
        %v1830 = vld [vmem:[%s468 + $0x10c0] sm:$0xff]
        %v1831 = vld [vmem:[%s468 + $0x10c8] sm:$0xff]
        %v1832 = vld [vmem:[%s468 + $0x10d0] sm:$0xff]
        %v1833 = vld [vmem:[%s468 + $0x10d8] sm:$0xff]
        %v1834 = vld [vmem:[%s468 + $0x10e0] sm:$0xff]
        %v1835 = vld [vmem:[%s468 + $0x10e8] sm:$0xff]
        %v1836 = vld [vmem:[%s468 + $0x10f0] sm:$0xff]
        %v1837 = vld [vmem:[%s468 + $0x10f8] sm:$0xff]
        %v1838 = vld [vmem:[%s468 + $0x1100] sm:$0xff]
        %v1839 = vld [vmem:[%s468 + $0x1108] sm:$0xff]
        %v1840 = vld [vmem:[%s468 + $0x1110] sm:$0xff]
        %v1841 = vld [vmem:[%s468 + $0x1118] sm:$0xff]
        %v1842 = vld [vmem:[%s468 + $0x1120] sm:$0xff]
        %v1843 = vld [vmem:[%s468 + $0x1128] sm:$0xff]
        %v1844 = vld [vmem:[%s468 + $0x1130] sm:$0xff]
        %v1845 = vld [vmem:[%s468 + $0x1138] sm:$0xff]
        %v1846 = vld [vmem:[%s468 + $0x1140] sm:$0xff]
        %v1847 = vld [vmem:[%s468 + $0x1148] sm:$0xff]
        %v1848 = vld [vmem:[%s468 + $0x1150] sm:$0xff]
        %v1849 = vld [vmem:[%s468 + $0x1158] sm:$0xff]
        %v1850 = vld [vmem:[%s468 + $0x1160] sm:$0xff]
        %v1851 = vld [vmem:[%s468 + $0x1168] sm:$0xff]
        %v1852 = vld [vmem:[%s468 + $0x1170] sm:$0xff]
        %v1853 = vld [vmem:[%s468 + $0x1178] sm:$0xff]
        %v1854 = vld [vmem:[%s468 + $0x1180] sm:$0xff]
        %v1855 = vld [vmem:[%s468 + $0x1188] sm:$0xff]
        %v1856 = vld [vmem:[%s468 + $0x1190] sm:$0xff]
        %v1857 = vld [vmem:[%s468 + $0x1198] sm:$0xff]
        %v1858 = vld [vmem:[%s468 + $0x11a0] sm:$0xff]
        %v1859 = vld [vmem:[%s468 + $0x11a8] sm:$0xff]
        %v1860 = vld [vmem:[%s468 + $0x11b0] sm:$0xff]
        %v1861 = vld [vmem:[%s468 + $0x11b8] sm:$0xff]
        %v1862 = vld [vmem:[%s468 + $0x11c0] sm:$0xff]
        %v1863 = vld [vmem:[%s468 + $0x11c8] sm:$0xff]
        %v1864 = vld [vmem:[%s468 + $0x11d0] sm:$0xff]
        %v1865 = vld [vmem:[%s468 + $0x11d8] sm:$0xff]
        %v1866 = vld [vmem:[%s468 + $0x11e0] sm:$0xff]
        %v1867 = vld [vmem:[%s468 + $0x11e8] sm:$0xff]
        %v1868 = vld [vmem:[%s468 + $0x11f0] sm:$0xff]
        %v1869 = vld [vmem:[%s468 + $0x11f8] sm:$0xff]
        %v1870 = vld [vmem:[%s468 + $0x1200] sm:$0xff]
        %v1871 = vld [vmem:[%s468 + $0x1208] sm:$0xff]
        %v1872 = vld [vmem:[%s468 + $0x1210] sm:$0xff]
        %v1873 = vld [vmem:[%s468 + $0x1218] sm:$0xff]
        %v1874 = vld [vmem:[%s468 + $0x1220] sm:$0xff]
        %v1875 = vld [vmem:[%s468 + $0x1228] sm:$0xff]
        %v1876 = vld [vmem:[%s468 + $0x1230] sm:$0xff]
        %v1877 = vld [vmem:[%s468 + $0x1238] sm:$0xff]
        %v1878 = vld [vmem:[%s468 + $0x1240] sm:$0xff]
        %v1879 = vld [vmem:[%s468 + $0x1248] sm:$0xff]
        %v1880 = vld [vmem:[%s468 + $0x1250] sm:$0xff]
        %v1881 = vld [vmem:[%s468 + $0x1258] sm:$0xff]
        %v1882 = vld [vmem:[%s468 + $0x1260] sm:$0xff]
        %v1883 = vld [vmem:[%s468 + $0x1268] sm:$0xff]
        %v1884 = vld [vmem:[%s468 + $0x1270] sm:$0xff]
        %v1885 = vld [vmem:[%s468 + $0x1278] sm:$0xff]
        %v1886 = vld [vmem:[%s468 + $0x1280] sm:$0xff]
        %v1887 = vld [vmem:[%s468 + $0x1288] sm:$0xff]
        %v1888 = vld [vmem:[%s468 + $0x1290] sm:$0xff]
        %v1889 = vld [vmem:[%s468 + $0x1298] sm:$0xff]
        %v1890 = vld [vmem:[%s468 + $0x12a0] sm:$0xff]
        %v1891 = vld [vmem:[%s468 + $0x12a8] sm:$0xff]
        %v1892 = vld [vmem:[%s468 + $0x12b0] sm:$0xff]
        %v1893 = vld [vmem:[%s468 + $0x12b8] sm:$0xff]
        %v1894 = vld [vmem:[%s468 + $0x12c0] sm:$0xff]
        %v1895 = vld [vmem:[%s468 + $0x12c8] sm:$0xff]
        %v1896 = vld [vmem:[%s468 + $0x12d0] sm:$0xff]
        %v1897 = vld [vmem:[%s468 + $0x12d8] sm:$0xff]
        %v1898 = vld [vmem:[%s468 + $0x12e0] sm:$0xff]
        %v1899 = vld [vmem:[%s468 + $0x12e8] sm:$0xff]
        %v1900 = vld [vmem:[%s468 + $0x12f0] sm:$0xff]
        %v1901 = vld [vmem:[%s468 + $0x12f8] sm:$0xff]
        %v1902 = vld [vmem:[%s468 + $0x1300] sm:$0xff]
        %v1903 = vld [vmem:[%s468 + $0x1308] sm:$0xff]
        %v1904 = vld [vmem:[%s468 + $0x1310] sm:$0xff]
        %v1905 = vld [vmem:[%s468 + $0x1318] sm:$0xff]
        %v1906 = vld [vmem:[%s468 + $0x1320] sm:$0xff]
        %v1907 = vld [vmem:[%s468 + $0x1328] sm:$0xff]
        %v1908 = vld [vmem:[%s468 + $0x1330] sm:$0xff]
        %v1909 = vld [vmem:[%s468 + $0x1338] sm:$0xff]
        %v1910 = vld [vmem:[%s468 + $0x1340] sm:$0xff]
        %v1911 = vld [vmem:[%s468 + $0x1348] sm:$0xff]
        %v1912 = vld [vmem:[%s468 + $0x1350] sm:$0xff]
        %v1913 = vld [vmem:[%s468 + $0x1358] sm:$0xff]
        %v1914 = vld [vmem:[%s468 + $0x1360] sm:$0xff]
        %v1915 = vld [vmem:[%s468 + $0x1368] sm:$0xff]
        %v1916 = vld [vmem:[%s468 + $0x1370] sm:$0xff]
        %v1917 = vld [vmem:[%s468 + $0x1378] sm:$0xff]
        %v1918 = vld [vmem:[%s468 + $0x1380] sm:$0xff]
        %v1919 = vld [vmem:[%s468 + $0x1388] sm:$0xff]
        %v1920 = vld [vmem:[%s468 + $0x1390] sm:$0xff]
        %v1921 = vld [vmem:[%s468 + $0x1398] sm:$0xff]
        %v1922 = vld [vmem:[%s468 + $0x13a0] sm:$0xff]
        %v1923 = vld [vmem:[%s468 + $0x13a8] sm:$0xff]
        %v1924 = vld [vmem:[%s468 + $0x13b0] sm:$0xff]
        %v1925 = vld [vmem:[%s468 + $0x13b8] sm:$0xff]
        %v1926 = vld [vmem:[%s468 + $0x13c0] sm:$0xff]
        %v1927 = vld [vmem:[%s468 + $0x13c8] sm:$0xff]
        %v1928 = vld [vmem:[%s468 + $0x13d0] sm:$0xff]
        %v1929 = vld [vmem:[%s468 + $0x13d8] sm:$0xff]
        %v1930 = vld [vmem:[%s468 + $0x13e0] sm:$0xff]
        %v1931 = vld [vmem:[%s468 + $0x13e8] sm:$0xff]
        %v1932 = vld [vmem:[%s468 + $0x13f0] sm:$0xff]
        %v1933 = vld [vmem:[%s468 + $0x13f8] sm:$0xff]
        %v1934 = vld [vmem:[%s468 + $0x1400] sm:$0xff]
        %v1935 = vld [vmem:[%s468 + $0x1408] sm:$0xff]
        %v1936 = vld [vmem:[%s468 + $0x1410] sm:$0xff]
        %v1937 = vld [vmem:[%s468 + $0x1418] sm:$0xff]
        %v1938 = vld [vmem:[%s468 + $0x1420] sm:$0xff]
        %v1939 = vld [vmem:[%s468 + $0x1428] sm:$0xff]
        %v1940 = vld [vmem:[%s468 + $0x1430] sm:$0xff]
        %v1941 = vld [vmem:[%s468 + $0x1438] sm:$0xff]
        %v1942 = vld [vmem:[%s468 + $0x1440] sm:$0xff]
        %v1943 = vld [vmem:[%s468 + $0x1448] sm:$0xff]
        %v1944 = vld [vmem:[%s468 + $0x1450] sm:$0xff]
        %v1945 = vld [vmem:[%s468 + $0x1458] sm:$0xff]
        %v1946 = vld [vmem:[%s468 + $0x1460] sm:$0xff]
        %v1947 = vld [vmem:[%s468 + $0x1468] sm:$0xff]
        %v1948 = vld [vmem:[%s468 + $0x1470] sm:$0xff]
        %v1949 = vld [vmem:[%s468 + $0x1478] sm:$0xff]
        %v1950 = vld [vmem:[%s468 + $0x1480] sm:$0xff]
        %v1951 = vld [vmem:[%s468 + $0x1488] sm:$0xff]
        %v1952 = vld [vmem:[%s468 + $0x1490] sm:$0xff]
        %v1953 = vld [vmem:[%s468 + $0x1498] sm:$0xff]
        %v1954 = vld [vmem:[%s468 + $0x14a0] sm:$0xff]
        %v1955 = vld [vmem:[%s468 + $0x14a8] sm:$0xff]
        %v1956 = vld [vmem:[%s468 + $0x14b0] sm:$0xff]
        %v1957 = vld [vmem:[%s468 + $0x14b8] sm:$0xff]
        %v1958 = vld [vmem:[%s468 + $0x14c0] sm:$0xff]
        %v1959 = vld [vmem:[%s468 + $0x14c8] sm:$0xff]
        %v1960 = vld [vmem:[%s468 + $0x14d0] sm:$0xff]
        %v1961 = vld [vmem:[%s468 + $0x14d8] sm:$0xff]
        %v1962 = vld [vmem:[%s468 + $0x14e0] sm:$0xff]
        %v1963 = vld [vmem:[%s468 + $0x14e8] sm:$0xff]
        %v1964 = vld [vmem:[%s468 + $0x14f0] sm:$0xff]
        %v1965 = vld [vmem:[%s468 + $0x14f8] sm:$0xff]
        %v1966 = vld [vmem:[%s468 + $0x1500] sm:$0xff]
        %v1967 = vld [vmem:[%s468 + $0x1508] sm:$0xff]
        %v1968 = vld [vmem:[%s468 + $0x1510] sm:$0xff]
        %v1969 = vld [vmem:[%s468 + $0x1518] sm:$0xff]
        %v1970 = vld [vmem:[%s468 + $0x1520] sm:$0xff]
        %v1971 = vld [vmem:[%s468 + $0x1528] sm:$0xff]
        %v1972 = vld [vmem:[%s468 + $0x1530] sm:$0xff]
        %v1973 = vld [vmem:[%s468 + $0x1538] sm:$0xff]
        %v1974 = vld [vmem:[%s468 + $0x1540] sm:$0xff]
        %v1975 = vld [vmem:[%s468 + $0x1548] sm:$0xff]
        %v1976 = vld [vmem:[%s468 + $0x1550] sm:$0xff]
        %v1977 = vld [vmem:[%s468 + $0x1558] sm:$0xff]
        %v1978 = vld [vmem:[%s468 + $0x1560] sm:$0xff]
        %v1979 = vld [vmem:[%s468 + $0x1568] sm:$0xff]
        %v1980 = vld [vmem:[%s468 + $0x1570] sm:$0xff]
        %v1981 = vld [vmem:[%s468 + $0x1578] sm:$0xff]
        %v1982 = vld [vmem:[%s468 + $0x1580] sm:$0xff]
        %v1983 = vld [vmem:[%s468 + $0x1588] sm:$0xff]
        %v1984 = vld [vmem:[%s468 + $0x1590] sm:$0xff]
        %v1985 = vld [vmem:[%s468 + $0x1598] sm:$0xff]
        %v1986 = vld [vmem:[%s468 + $0x15a0] sm:$0xff]
        %v1987 = vld [vmem:[%s468 + $0x15a8] sm:$0xff]
        %v1988 = vld [vmem:[%s468 + $0x15b0] sm:$0xff]
        %v1989 = vld [vmem:[%s468 + $0x15b8] sm:$0xff]
        %v1990 = vld [vmem:[%s468 + $0x15c0] sm:$0xff]
        %v1991 = vld [vmem:[%s468 + $0x15c8] sm:$0xff]
        %v1992 = vld [vmem:[%s468 + $0x15d0] sm:$0xff]
        %v1993 = vld [vmem:[%s468 + $0x15d8] sm:$0xff]
        %v1994 = vld [vmem:[%s468 + $0x15e0] sm:$0xff]
        %v1995 = vld [vmem:[%s468 + $0x15e8] sm:$0xff]
        %v1996 = vld [vmem:[%s468 + $0x15f0] sm:$0xff]
        %v1997 = vld [vmem:[%s468 + $0x15f8] sm:$0xff]
        %v1998 = vld [vmem:[%s468 + $0x1600] sm:$0xff]
        %v1999 = vld [vmem:[%s468 + $0x1608] sm:$0xff]
        %v2000 = vld [vmem:[%s468 + $0x1610] sm:$0xff]
        %v2001 = vld [vmem:[%s468 + $0x1618] sm:$0xff]
        %v2002 = vld [vmem:[%s468 + $0x1620] sm:$0xff]
        %v2003 = vld [vmem:[%s468 + $0x1628] sm:$0xff]
        %v2004 = vld [vmem:[%s468 + $0x1630] sm:$0xff]
        %v2005 = vld [vmem:[%s468 + $0x1638] sm:$0xff]
        %v2006 = vld [vmem:[%s468 + $0x1640] sm:$0xff]
        %v2007 = vld [vmem:[%s468 + $0x1648] sm:$0xff]
        %v2008 = vld [vmem:[%s468 + $0x1650] sm:$0xff]
        %v2009 = vld [vmem:[%s468 + $0x1658] sm:$0xff]
        %v2010 = vld [vmem:[%s468 + $0x1660] sm:$0xff]
        %v2011 = vld [vmem:[%s468 + $0x1668] sm:$0xff]
        %v2012 = vld [vmem:[%s468 + $0x1670] sm:$0xff]
        %v2013 = vld [vmem:[%s468 + $0x1678] sm:$0xff]
        %v2014 = vld [vmem:[%s468 + $0x1680] sm:$0xff]
        %v2015 = vld [vmem:[%s468 + $0x1688] sm:$0xff]
        %v2016 = vld [vmem:[%s468 + $0x1690] sm:$0xff]
        %v2017 = vld [vmem:[%s468 + $0x1698] sm:$0xff]
        %v2018 = vld [vmem:[%s468 + $0x16a0] sm:$0xff]
        %v2019 = vld [vmem:[%s468 + $0x16a8] sm:$0xff]
        %v2020 = vld [vmem:[%s468 + $0x16b0] sm:$0xff]
        %v2021 = vld [vmem:[%s468 + $0x16b8] sm:$0xff]
        %v2022 = vld [vmem:[%s468 + $0x16c0] sm:$0xff]
        %v2023 = vld [vmem:[%s468 + $0x16c8] sm:$0xff]
        %v2024 = vld [vmem:[%s468 + $0x16d0] sm:$0xff]
        %v2025 = vld [vmem:[%s468 + $0x16d8] sm:$0xff]
        %v2026 = vld [vmem:[%s468 + $0x16e0] sm:$0xff]
        %v2027 = vld [vmem:[%s468 + $0x16e8] sm:$0xff]
        %v2028 = vld [vmem:[%s468 + $0x16f0] sm:$0xff]
        %v2029 = vld [vmem:[%s468 + $0x16f8] sm:$0xff]
        %v2030 = vld [vmem:[%s468 + $0x1700] sm:$0xff]
        %v2031 = vld [vmem:[%s468 + $0x1708] sm:$0xff]
        %v2032 = vld [vmem:[%s468 + $0x1710] sm:$0xff]
        %v2033 = vld [vmem:[%s468 + $0x1718] sm:$0xff]
        %v2034 = vld [vmem:[%s468 + $0x1720] sm:$0xff]
        %v2035 = vld [vmem:[%s468 + $0x1728] sm:$0xff]
        %v2036 = vld [vmem:[%s468 + $0x1730] sm:$0xff]
        %v2037 = vld [vmem:[%s468 + $0x1738] sm:$0xff]
        %v2038 = vld [vmem:[%s468 + $0x1740] sm:$0xff]
        %v2039 = vld [vmem:[%s468 + $0x1748] sm:$0xff]
        %v2040 = vld [vmem:[%s468 + $0x1750] sm:$0xff]
        %v2041 = vld [vmem:[%s468 + $0x1758] sm:$0xff]
        %v2042 = vld [vmem:[%s468 + $0x1760] sm:$0xff]
        %v2043 = vld [vmem:[%s468 + $0x1768] sm:$0xff]
        %v2044 = vld [vmem:[%s468 + $0x1770] sm:$0xff]
        %v2045 = vld [vmem:[%s468 + $0x1778] sm:$0xff]
        %v2046 = vld [vmem:[%s468 + $0x1780] sm:$0xff]
        %v2047 = vld [vmem:[%s468 + $0x1788] sm:$0xff]
        %v2048 = vld [vmem:[%s468 + $0x1790] sm:$0xff]
        %v2049 = vld [vmem:[%s468 + $0x1798] sm:$0xff]
        %v2050 = vld [vmem:[%s468 + $0x17a0] sm:$0xff]
        %v2051 = vld [vmem:[%s468 + $0x17a8] sm:$0xff]
        %v2052 = vld [vmem:[%s468 + $0x17b0] sm:$0xff]
        %v2053 = vld [vmem:[%s468 + $0x17b8] sm:$0xff]
        %v2054 = vld [vmem:[%s468 + $0x17c0] sm:$0xff]
        %v2055 = vld [vmem:[%s468 + $0x17c8] sm:$0xff]
        %v2056 = vld [vmem:[%s468 + $0x17d0] sm:$0xff]
        %v2057 = vld [vmem:[%s468 + $0x17d8] sm:$0xff]
        %v2058 = vld [vmem:[%s468 + $0x17e0] sm:$0xff]
        %v2059 = vld [vmem:[%s468 + $0x17e8] sm:$0xff]
        %v2060 = vld [vmem:[%s468 + $0x17f0] sm:$0xff]
        %v2061 = vld [vmem:[%s468 + $0x17f8] sm:$0xff]
        %v2062 = vld [vmem:[%s468 + $0x1800] sm:$0xff]
        %v2063 = vld [vmem:[%s468 + $0x1808] sm:$0xff]
        %v2064 = vld [vmem:[%s468 + $0x1810] sm:$0xff]
        %v2065 = vld [vmem:[%s468 + $0x1818] sm:$0xff]
        %v2066 = vld [vmem:[%s468 + $0x1820] sm:$0xff]
        %v2067 = vld [vmem:[%s468 + $0x1828] sm:$0xff]
        %v2068 = vld [vmem:[%s468 + $0x1830] sm:$0xff]
        %v2069 = vld [vmem:[%s468 + $0x1838] sm:$0xff]
        %v2070 = vld [vmem:[%s468 + $0x1840] sm:$0xff]
        %v2071 = vld [vmem:[%s468 + $0x1848] sm:$0xff]
        %v2072 = vld [vmem:[%s468 + $0x1850] sm:$0xff]
        %v2073 = vld [vmem:[%s468 + $0x1858] sm:$0xff]
        %v2074 = vld [vmem:[%s468 + $0x1860] sm:$0xff]
        %v2075 = vld [vmem:[%s468 + $0x1868] sm:$0xff]
        %v2076 = vld [vmem:[%s468 + $0x1870] sm:$0xff]
        %v2077 = vld [vmem:[%s468 + $0x1878] sm:$0xff]
        %v2078 = vld [vmem:[%s468 + $0x1880] sm:$0xff]
        %v2079 = vld [vmem:[%s468 + $0x1888] sm:$0xff]
        %v2080 = vld [vmem:[%s468 + $0x1890] sm:$0xff]
        %v2081 = vld [vmem:[%s468 + $0x1898] sm:$0xff]
        %v2082 = vld [vmem:[%s468 + $0x18a0] sm:$0xff]
        %v2083 = vld [vmem:[%s468 + $0x18a8] sm:$0xff]
        %v2084 = vld [vmem:[%s468 + $0x18b0] sm:$0xff]
        %v2085 = vld [vmem:[%s468 + $0x18b8] sm:$0xff]
        %v2086 = vld [vmem:[%s468 + $0x18c0] sm:$0xff]
        %v2087 = vld [vmem:[%s468 + $0x18c8] sm:$0xff]
        %v2088 = vld [vmem:[%s468 + $0x18d0] sm:$0xff]
        %v2089 = vld [vmem:[%s468 + $0x18d8] sm:$0xff]
        %v2090 = vld [vmem:[%s468 + $0x18e0] sm:$0xff]
        %v2091 = vld [vmem:[%s468 + $0x18e8] sm:$0xff]
        %v2092 = vld [vmem:[%s468 + $0x18f0] sm:$0xff]
        %v2093 = vld [vmem:[%s468 + $0x18f8] sm:$0xff]
        %v2094 = vld [vmem:[%s468 + $0x1900] sm:$0xff]
        %v2095 = vld [vmem:[%s468 + $0x1908] sm:$0xff]
        %v2096 = vld [vmem:[%s468 + $0x1910] sm:$0xff]
        %v2097 = vld [vmem:[%s468 + $0x1918] sm:$0xff]
        %v2098 = vld [vmem:[%s468 + $0x1920] sm:$0xff]
        %v2099 = vld [vmem:[%s468 + $0x1928] sm:$0xff]
        %v2100 = vld [vmem:[%s468 + $0x1930] sm:$0xff]
        %v2101 = vld [vmem:[%s468 + $0x1938] sm:$0xff]
        %v2102 = vld [vmem:[%s468 + $0x1940] sm:$0xff]
        %v2103 = vld [vmem:[%s468 + $0x1948] sm:$0xff]
        %v2104 = vld [vmem:[%s468 + $0x1950] sm:$0xff]
        %v2105 = vld [vmem:[%s468 + $0x1958] sm:$0xff]
        %v2106 = vld [vmem:[%s468 + $0x1960] sm:$0xff]
        %v2107 = vld [vmem:[%s468 + $0x1968] sm:$0xff]
        %v2108 = vld [vmem:[%s468 + $0x1970] sm:$0xff]
        %v2109 = vld [vmem:[%s468 + $0x1978] sm:$0xff]
        %v2110 = vld [vmem:[%s468 + $0x1980] sm:$0xff]
        %v2111 = vld [vmem:[%s468 + $0x1988] sm:$0xff]
        %v2112 = vld [vmem:[%s468 + $0x1990] sm:$0xff]
        %v2113 = vld [vmem:[%s468 + $0x1998] sm:$0xff]
        %v2114 = vld [vmem:[%s468 + $0x19a0] sm:$0xff]
        %v2115 = vld [vmem:[%s468 + $0x19a8] sm:$0xff]
        %v2116 = vld [vmem:[%s468 + $0x19b0] sm:$0xff]
        %v2117 = vld [vmem:[%s468 + $0x19b8] sm:$0xff]
        %v2118 = vld [vmem:[%s468 + $0x19c0] sm:$0xff]
        %v2119 = vld [vmem:[%s468 + $0x19c8] sm:$0xff]
        %v2120 = vld [vmem:[%s468 + $0x19d0] sm:$0xff]
        %v2121 = vld [vmem:[%s468 + $0x19d8] sm:$0xff]
        %v2122 = vld [vmem:[%s468 + $0x19e0] sm:$0xff]
        %v2123 = vld [vmem:[%s468 + $0x19e8] sm:$0xff]
        %v2124 = vld [vmem:[%s468 + $0x19f0] sm:$0xff]
        %v2125 = vld [vmem:[%s468 + $0x19f8] sm:$0xff]
        %v2126 = vld [vmem:[%s468 + $0x1a00] sm:$0xff]
        %v2127 = vld [vmem:[%s468 + $0x1a08] sm:$0xff]
        %v2128 = vld [vmem:[%s468 + $0x1a10] sm:$0xff]
        %v2129 = vld [vmem:[%s468 + $0x1a18] sm:$0xff]
        %v2130 = vld [vmem:[%s468 + $0x1a20] sm:$0xff]
        %v2131 = vld [vmem:[%s468 + $0x1a28] sm:$0xff]
        %v2132 = vld [vmem:[%s468 + $0x1a30] sm:$0xff]
        %v2133 = vld [vmem:[%s468 + $0x1a38] sm:$0xff]
        %v2134 = vld [vmem:[%s468 + $0x1a40] sm:$0xff]
        %v2135 = vld [vmem:[%s468 + $0x1a48] sm:$0xff]
        %v2136 = vld [vmem:[%s468 + $0x1a50] sm:$0xff]
        %v2137 = vld [vmem:[%s468 + $0x1a58] sm:$0xff]
        %v2138 = vld [vmem:[%s468 + $0x1a60] sm:$0xff]
        %v2139 = vld [vmem:[%s468 + $0x1a68] sm:$0xff]
        %v2140 = vld [vmem:[%s468 + $0x1a70] sm:$0xff]
        %v2141 = vld [vmem:[%s468 + $0x1a78] sm:$0xff]
        %v2142 = vld [vmem:[%s468 + $0x1a80] sm:$0xff]
        %v2143 = vld [vmem:[%s468 + $0x1a88] sm:$0xff]
        %v2144 = vld [vmem:[%s468 + $0x1a90] sm:$0xff]
        %v2145 = vld [vmem:[%s468 + $0x1a98] sm:$0xff]
        %v2146 = vld [vmem:[%s468 + $0x1aa0] sm:$0xff]
        %v2147 = vld [vmem:[%s468 + $0x1aa8] sm:$0xff]
        %v2148 = vld [vmem:[%s468 + $0x1ab0] sm:$0xff]
        %v2149 = vld [vmem:[%s468 + $0x1ab8] sm:$0xff]
        %v2150 = vld [vmem:[%s468 + $0x1ac0] sm:$0xff]
        %v2151 = vld [vmem:[%s468 + $0x1ac8] sm:$0xff]
        %v2152 = vld [vmem:[%s468 + $0x1ad0] sm:$0xff]
        %v2153 = vld [vmem:[%s468 + $0x1ad8] sm:$0xff]
        %v2154 = vld [vmem:[%s468 + $0x1ae0] sm:$0xff]
        %v2155 = vld [vmem:[%s468 + $0x1ae8] sm:$0xff]
        %v2156 = vld [vmem:[%s468 + $0x1af0] sm:$0xff]
        %v2157 = vld [vmem:[%s468 + $0x1af8] sm:$0xff]
        %v2158 = vld [vmem:[%s468 + $0x1b00] sm:$0xff]
        %v2159 = vld [vmem:[%s468 + $0x1b08] sm:$0xff]
        %v2160 = vld [vmem:[%s468 + $0x1b10] sm:$0xff]
        %v2161 = vld [vmem:[%s468 + $0x1b18] sm:$0xff]
        %v2162 = vld [vmem:[%s468 + $0x1b20] sm:$0xff]
        %v2163 = vld [vmem:[%s468 + $0x1b28] sm:$0xff]
        %v2164 = vld [vmem:[%s468 + $0x1b30] sm:$0xff]
        %v2165 = vld [vmem:[%s468 + $0x1b38] sm:$0xff]
        %v2166 = vld [vmem:[%s468 + $0x1b40] sm:$0xff]
        %v2167 = vld [vmem:[%s468 + $0x1b48] sm:$0xff]
        %v2168 = vld [vmem:[%s468 + $0x1b50] sm:$0xff]
        %v2169 = vld [vmem:[%s468 + $0x1b58] sm:$0xff]
        %v2170 = vld [vmem:[%s468 + $0x1b60] sm:$0xff]
        %v2171 = vld [vmem:[%s468 + $0x1b68] sm:$0xff]
        %v2172 = vld [vmem:[%s468 + $0x1b70] sm:$0xff]
        %v2173 = vld [vmem:[%s468 + $0x1b78] sm:$0xff]
        %v2174 = vld [vmem:[%s468 + $0x1b80] sm:$0xff]
        %v2175 = vld [vmem:[%s468 + $0x1b88] sm:$0xff]
        %v2176 = vld [vmem:[%s468 + $0x1b90] sm:$0xff]
        %v2177 = vld [vmem:[%s468 + $0x1b98] sm:$0xff]
        %v2178 = vld [vmem:[%s468 + $0x1ba0] sm:$0xff]
        %v2179 = vld [vmem:[%s468 + $0x1ba8] sm:$0xff]
        %v2180 = vld [vmem:[%s468 + $0x1bb0] sm:$0xff]
        %v2181 = vld [vmem:[%s468 + $0x1bb8] sm:$0xff]
        %v2182 = vld [vmem:[%s468 + $0x1bc0] sm:$0xff]
        %v2183 = vld [vmem:[%s468 + $0x1bc8] sm:$0xff]
        %v2184 = vld [vmem:[%s468 + $0x1bd0] sm:$0xff]
        %v2185 = vld [vmem:[%s468 + $0x1bd8] sm:$0xff]
        %v2186 = vld [vmem:[%s468 + $0x1be0] sm:$0xff]
        %v2187 = vld [vmem:[%s468 + $0x1be8] sm:$0xff]
        %v2188 = vld [vmem:[%s468 + $0x1bf0] sm:$0xff]
        %v2189 = vld [vmem:[%s468 + $0x1bf8] sm:$0xff]
        %v2190 = vld [vmem:[%s468 + $0x1c00] sm:$0xff]
        %v2191 = vld [vmem:[%s468 + $0x1c08] sm:$0xff]
        %v2192 = vld [vmem:[%s468 + $0x1c10] sm:$0xff]
        %v2193 = vld [vmem:[%s468 + $0x1c18] sm:$0xff]
        %v2194 = vld [vmem:[%s468 + $0x1c20] sm:$0xff]
        %v2195 = vld [vmem:[%s468 + $0x1c28] sm:$0xff]
        %v2196 = vld [vmem:[%s468 + $0x1c30] sm:$0xff]
        %v2197 = vld [vmem:[%s468 + $0x1c38] sm:$0xff]
        %v2198 = vld [vmem:[%s468 + $0x1c40] sm:$0xff]
        %v2199 = vld [vmem:[%s468 + $0x1c48] sm:$0xff]
        %v2200 = vld [vmem:[%s468 + $0x1c50] sm:$0xff]
        %v2201 = vld [vmem:[%s468 + $0x1c58] sm:$0xff]
        %v2202 = vld [vmem:[%s468 + $0x1c60] sm:$0xff]
        %v2203 = vld [vmem:[%s468 + $0x1c68] sm:$0xff]
        %v2204 = vld [vmem:[%s468 + $0x1c70] sm:$0xff]
        %v2205 = vld [vmem:[%s468 + $0x1c78] sm:$0xff]
        %v2206 = vld [vmem:[%s468 + $0x1c80] sm:$0xff]
        %v2207 = vld [vmem:[%s468 + $0x1c88] sm:$0xff]
        %v2208 = vld [vmem:[%s468 + $0x1c90] sm:$0xff]
        %v2209 = vld [vmem:[%s468 + $0x1c98] sm:$0xff]
        %v2210 = vld [vmem:[%s468 + $0x1ca0] sm:$0xff]
        %v2211 = vld [vmem:[%s468 + $0x1ca8] sm:$0xff]
        %v2212 = vld [vmem:[%s468 + $0x1cb0] sm:$0xff]
        %v2213 = vld [vmem:[%s468 + $0x1cb8] sm:$0xff]
        %v2214 = vld [vmem:[%s468 + $0x1cc0] sm:$0xff]
        %v2215 = vld [vmem:[%s468 + $0x1cc8] sm:$0xff]
        %v2216 = vld [vmem:[%s468 + $0x1cd0] sm:$0xff]
        %v2217 = vld [vmem:[%s468 + $0x1cd8] sm:$0xff]
        %v2218 = vld [vmem:[%s468 + $0x1ce0] sm:$0xff]
        %v2219 = vld [vmem:[%s468 + $0x1ce8] sm:$0xff]
        %v2220 = vld [vmem:[%s468 + $0x1cf0] sm:$0xff]
        %v2221 = vld [vmem:[%s468 + $0x1cf8] sm:$0xff]
        %v2222 = vld [vmem:[%s468 + $0x1d00] sm:$0xff]
        %v2223 = vld [vmem:[%s468 + $0x1d08] sm:$0xff]
        %v2224 = vld [vmem:[%s468 + $0x1d10] sm:$0xff]
        %v2225 = vld [vmem:[%s468 + $0x1d18] sm:$0xff]
        %v2226 = vld [vmem:[%s468 + $0x1d20] sm:$0xff]
        %v2227 = vld [vmem:[%s468 + $0x1d28] sm:$0xff]
        %v2228 = vld [vmem:[%s468 + $0x1d30] sm:$0xff]
        %v2229 = vld [vmem:[%s468 + $0x1d38] sm:$0xff]
        %v2230 = vld [vmem:[%s468 + $0x1d40] sm:$0xff]
        %v2231 = vld [vmem:[%s468 + $0x1d48] sm:$0xff]
        %v2232 = vld [vmem:[%s468 + $0x1d50] sm:$0xff]
        %v2233 = vld [vmem:[%s468 + $0x1d58] sm:$0xff]
        %v2234 = vld [vmem:[%s468 + $0x1d60] sm:$0xff]
        %v2235 = vld [vmem:[%s468 + $0x1d68] sm:$0xff]
        %v2236 = vld [vmem:[%s468 + $0x1d70] sm:$0xff]
        %v2237 = vld [vmem:[%s468 + $0x1d78] sm:$0xff]
        %v2238 = vld [vmem:[%s468 + $0x1d80] sm:$0xff]
        %v2239 = vld [vmem:[%s468 + $0x1d88] sm:$0xff]
        %v2240 = vld [vmem:[%s468 + $0x1d90] sm:$0xff]
        %v2241 = vld [vmem:[%s468 + $0x1d98] sm:$0xff]
        %v2242 = vld [vmem:[%s468 + $0x1da0] sm:$0xff]
        %v2243 = vld [vmem:[%s468 + $0x1da8] sm:$0xff]
        %v2244 = vld [vmem:[%s468 + $0x1db0] sm:$0xff]
        %v2245 = vld [vmem:[%s468 + $0x1db8] sm:$0xff]
        %v2246 = vld [vmem:[%s468 + $0x1dc0] sm:$0xff]
        %v2247 = vld [vmem:[%s468 + $0x1dc8] sm:$0xff]
        %v2248 = vld [vmem:[%s468 + $0x1dd0] sm:$0xff]
        %v2249 = vld [vmem:[%s468 + $0x1dd8] sm:$0xff]
        %v2250 = vld [vmem:[%s468 + $0x1de0] sm:$0xff]
        %v2251 = vld [vmem:[%s468 + $0x1de8] sm:$0xff]
        %v2252 = vld [vmem:[%s468 + $0x1df0] sm:$0xff]
        %v2253 = vld [vmem:[%s468 + $0x1df8] sm:$0xff]
        %v2254 = vld [vmem:[%s468 + $0x1e00] sm:$0xff]
        %v2255 = vld [vmem:[%s468 + $0x1e08] sm:$0xff]
        %v2256 = vld [vmem:[%s468 + $0x1e10] sm:$0xff]
        %v2257 = vld [vmem:[%s468 + $0x1e18] sm:$0xff]
        %v2258 = vld [vmem:[%s468 + $0x1e20] sm:$0xff]
        %v2259 = vld [vmem:[%s468 + $0x1e28] sm:$0xff]
        %v2260 = vld [vmem:[%s468 + $0x1e30] sm:$0xff]
        %v2261 = vld [vmem:[%s468 + $0x1e38] sm:$0xff]
        %v2262 = vld [vmem:[%s468 + $0x1e40] sm:$0xff]
        %v2263 = vld [vmem:[%s468 + $0x1e48] sm:$0xff]
        %v2264 = vld [vmem:[%s468 + $0x1e50] sm:$0xff]
        %v2265 = vld [vmem:[%s468 + $0x1e58] sm:$0xff]
        %v2266 = vld [vmem:[%s468 + $0x1e60] sm:$0xff]
        %v2267 = vld [vmem:[%s468 + $0x1e68] sm:$0xff]
        %v2268 = vld [vmem:[%s468 + $0x1e70] sm:$0xff]
        %v2269 = vld [vmem:[%s468 + $0x1e78] sm:$0xff]
        %v2270 = vld [vmem:[%s468 + $0x1e80] sm:$0xff]
        %v2271 = vld [vmem:[%s468 + $0x1e88] sm:$0xff]
        %v2272 = vld [vmem:[%s468 + $0x1e90] sm:$0xff]
        %v2273 = vld [vmem:[%s468 + $0x1e98] sm:$0xff]
        %v2274 = vld [vmem:[%s468 + $0x1ea0] sm:$0xff]
        %v2275 = vld [vmem:[%s468 + $0x1ea8] sm:$0xff]
        %v2276 = vld [vmem:[%s468 + $0x1eb0] sm:$0xff]
        %v2277 = vld [vmem:[%s468 + $0x1eb8] sm:$0xff]
        %v2278 = vld [vmem:[%s468 + $0x1ec0] sm:$0xff]
        %v2279 = vld [vmem:[%s468 + $0x1ec8] sm:$0xff]
        %v2280 = vld [vmem:[%s468 + $0x1ed0] sm:$0xff]
        %v2281 = vld [vmem:[%s468 + $0x1ed8] sm:$0xff]
        %v2282 = vld [vmem:[%s468 + $0x1ee0] sm:$0xff]
        %v2283 = vld [vmem:[%s468 + $0x1ee8] sm:$0xff]
        %v2284 = vld [vmem:[%s468 + $0x1ef0] sm:$0xff]
        %v2285 = vld [vmem:[%s468 + $0x1ef8] sm:$0xff]
        %v2286 = vld [vmem:[%s468 + $0x1f00] sm:$0xff]
        %v2287 = vld [vmem:[%s468 + $0x1f08] sm:$0xff]
        %v2288 = vld [vmem:[%s468 + $0x1f10] sm:$0xff]
        %v2289 = vld [vmem:[%s468 + $0x1f18] sm:$0xff]
        %v2290 = vld [vmem:[%s468 + $0x1f20] sm:$0xff]
        %v2291 = vld [vmem:[%s468 + $0x1f28] sm:$0xff]
        %v2292 = vld [vmem:[%s468 + $0x1f30] sm:$0xff]
        %v2293 = vld [vmem:[%s468 + $0x1f38] sm:$0xff]
        %v2294 = vld [vmem:[%s468 + $0x1f40] sm:$0xff]
        %v2295 = vld [vmem:[%s468 + $0x1f48] sm:$0xff]
        %v2296 = vld [vmem:[%s468 + $0x1f50] sm:$0xff]
        %v2297 = vld [vmem:[%s468 + $0x1f58] sm:$0xff]
        %v2298 = vld [vmem:[%s468 + $0x1f60] sm:$0xff]
        %v2299 = vld [vmem:[%s468 + $0x1f68] sm:$0xff]
        %v2300 = vld [vmem:[%s468 + $0x1f70] sm:$0xff]
        %v2301 = vld [vmem:[%s468 + $0x1f78] sm:$0xff]
        %v2302 = vld [vmem:[%s468 + $0x1f80] sm:$0xff]
        %v2303 = vld [vmem:[%s468 + $0x1f88] sm:$0xff]
        %v2304 = vld [vmem:[%s468 + $0x1f90] sm:$0xff]
        %v2305 = vld [vmem:[%s468 + $0x1f98] sm:$0xff]
        %v2306 = vld [vmem:[%s468 + $0x1fa0] sm:$0xff]
        %v2307 = vld [vmem:[%s468 + $0x1fa8] sm:$0xff]
        %v2308 = vld [vmem:[%s468 + $0x1fb0] sm:$0xff]
        %v2309 = vld [vmem:[%s468 + $0x1fb8] sm:$0xff]
        %v2310 = vld [vmem:[%s468 + $0x1fc0] sm:$0xff]
        %v2311 = vld [vmem:[%s468 + $0x1fc8] sm:$0xff]
        %v2312 = vld [vmem:[%s468 + $0x1fd0] sm:$0xff]
        %v2313 = vld [vmem:[%s468 + $0x1fd8] sm:$0xff]
        %v2314 = vld [vmem:[%s468 + $0x1fe0] sm:$0xff]
        %v2315 = vld [vmem:[%s468 + $0x1fe8] sm:$0xff]
        %v2316 = vld [vmem:[%s468 + $0x1ff0] sm:$0xff]
        %v2317 = vld [vmem:[%s468 + $0x1ff8] sm:$0xff]
        %v2318 = vld [vmem:[%s468 + $0x2000] sm:$0xff]
        %v2319 = vld [vmem:[%s468 + $0x2008] sm:$0xff]
        %v2320 = vld [vmem:[%s468 + $0x2010] sm:$0xff]
        %v2321 = vld [vmem:[%s468 + $0x2018] sm:$0xff]
        %v2322 = vld [vmem:[%s468 + $0x2020] sm:$0xff]
        %v2323 = vld [vmem:[%s468 + $0x2028] sm:$0xff]
        %v2324 = vld [vmem:[%s468 + $0x2030] sm:$0xff]
        %v2325 = vld [vmem:[%s468 + $0x2038] sm:$0xff]
        %v2326 = vld [vmem:[%s468 + $0x2040] sm:$0xff]
        %v2327 = vld [vmem:[%s468 + $0x2048] sm:$0xff]
        %v2328 = vld [vmem:[%s468 + $0x2050] sm:$0xff]
        %v2329 = vld [vmem:[%s468 + $0x2058] sm:$0xff]
        %v2330 = vld [vmem:[%s468 + $0x2060] sm:$0xff]
        %v2331 = vld [vmem:[%s468 + $0x2068] sm:$0xff]
        %v2332 = vld [vmem:[%s468 + $0x2070] sm:$0xff]
        %v2333 = vld [vmem:[%s468 + $0x2078] sm:$0xff]
        %v2334 = vld [vmem:[%s468 + $0x2080] sm:$0xff]
        %v2335 = vld [vmem:[%s468 + $0x2088] sm:$0xff]
        %v2336 = vld [vmem:[%s468 + $0x2090] sm:$0xff]
        %v2337 = vld [vmem:[%s468 + $0x2098] sm:$0xff]
        %v2338 = vld [vmem:[%s468 + $0x20a0] sm:$0xff]
        %v2339 = vld [vmem:[%s468 + $0x20a8] sm:$0xff]
        %v2340 = vld [vmem:[%s468 + $0x20b0] sm:$0xff]
        %v2341 = vld [vmem:[%s468 + $0x20b8] sm:$0xff]
        %v2342 = vld [vmem:[%s468 + $0x20c0] sm:$0xff]
        %v2343 = vld [vmem:[%s468 + $0x20c8] sm:$0xff]
        %v2344 = vld [vmem:[%s468 + $0x20d0] sm:$0xff]
        %v2345 = vld [vmem:[%s468 + $0x20d8] sm:$0xff]
        %v2346 = vld [vmem:[%s468 + $0x20e0] sm:$0xff]
        %v2347 = vld [vmem:[%s468 + $0x20e8] sm:$0xff]
        %v2348 = vld [vmem:[%s468 + $0x20f0] sm:$0xff]
        %v2349 = vld [vmem:[%s468 + $0x20f8] sm:$0xff]
        %v2350 = vld [vmem:[%s468 + $0x2100] sm:$0xff]
        %v2351 = vld [vmem:[%s468 + $0x2108] sm:$0xff]
        %v2352 = vld [vmem:[%s468 + $0x2110] sm:$0xff]
        %v2353 = vld [vmem:[%s468 + $0x2118] sm:$0xff]
        %v2354 = vld [vmem:[%s468 + $0x2120] sm:$0xff]
        %v2355 = vld [vmem:[%s468 + $0x2128] sm:$0xff]
        %v2356 = vld [vmem:[%s468 + $0x2130] sm:$0xff]
        %v2357 = vld [vmem:[%s468 + $0x2138] sm:$0xff]
        %v2358 = vld [vmem:[%s468 + $0x2140] sm:$0xff]
        %v2359 = vld [vmem:[%s468 + $0x2148] sm:$0xff]
        %v2360 = vld [vmem:[%s468 + $0x2150] sm:$0xff]
        %v2361 = vld [vmem:[%s468 + $0x2158] sm:$0xff]
        %v2362 = vld [vmem:[%s468 + $0x2160] sm:$0xff]
        %v2363 = vld [vmem:[%s468 + $0x2168] sm:$0xff]
        %v2364 = vld [vmem:[%s468 + $0x2170] sm:$0xff]
        %v2365 = vld [vmem:[%s468 + $0x2178] sm:$0xff]
        %v2366 = vld [vmem:[%s468 + $0x2180] sm:$0xff]
        %v2367 = vld [vmem:[%s468 + $0x2188] sm:$0xff]
        %v2368 = vld [vmem:[%s468 + $0x2190] sm:$0xff]
        %v2369 = vld [vmem:[%s468 + $0x2198] sm:$0xff]
        %v2370 = vld [vmem:[%s468 + $0x21a0] sm:$0xff]
        %v2371 = vld [vmem:[%s468 + $0x21a8] sm:$0xff]
        %v2372 = vld [vmem:[%s468 + $0x21b0] sm:$0xff]
        %v2373 = vld [vmem:[%s468 + $0x21b8] sm:$0xff]
        %v2374 = vld [vmem:[%s468 + $0x21c0] sm:$0xff]
        %v2375 = vld [vmem:[%s468 + $0x21c8] sm:$0xff]
        %v2376 = vld [vmem:[%s468 + $0x21d0] sm:$0xff]
        %v2377 = vld [vmem:[%s468 + $0x21d8] sm:$0xff]
        %v2378 = vld [vmem:[%s468 + $0x21e0] sm:$0xff]
        %v2379 = vld [vmem:[%s468 + $0x21e8] sm:$0xff]
        %v2380 = vld [vmem:[%s468 + $0x21f0] sm:$0xff]
        %v2381 = vld [vmem:[%s468 + $0x21f8] sm:$0xff]
        %v2382 = vld [vmem:[%s468 + $0x2200] sm:$0xff]
        %v2383 = vld [vmem:[%s468 + $0x2208] sm:$0xff]
        %v2384 = vld [vmem:[%s468 + $0x2210] sm:$0xff]
        %v2385 = vld [vmem:[%s468 + $0x2218] sm:$0xff]
        %v2386 = vld [vmem:[%s468 + $0x2220] sm:$0xff]
        %v2387 = vld [vmem:[%s468 + $0x2228] sm:$0xff]
        %v2388 = vld [vmem:[%s468 + $0x2230] sm:$0xff]
        %v2389 = vld [vmem:[%s468 + $0x2238] sm:$0xff]
        %v2390 = vld [vmem:[%s468 + $0x2240] sm:$0xff]
        %v2391 = vld [vmem:[%s468 + $0x2248] sm:$0xff]
        %v2392 = vld [vmem:[%s468 + $0x2250] sm:$0xff]
        %v2393 = vld [vmem:[%s468 + $0x2258] sm:$0xff]
        %v2394 = vld [vmem:[%s468 + $0x2260] sm:$0xff]
        %v2395 = vld [vmem:[%s468 + $0x2268] sm:$0xff]
        %v2396 = vld [vmem:[%s468 + $0x2270] sm:$0xff]
        %v2397 = vld [vmem:[%s468 + $0x2278] sm:$0xff]
        %v2398 = vld [vmem:[%s468 + $0x2280] sm:$0xff]
        %v2399 = vld [vmem:[%s468 + $0x2288] sm:$0xff]
        %v2400 = vld [vmem:[%s468 + $0x2290] sm:$0xff]
        %v2401 = vld [vmem:[%s468 + $0x2298] sm:$0xff]
        %v2402 = vld [vmem:[%s468 + $0x22a0] sm:$0xff]
        %v2403 = vld [vmem:[%s468 + $0x22a8] sm:$0xff]
        %v2404 = vld [vmem:[%s468 + $0x22b0] sm:$0xff]
        %v2405 = vld [vmem:[%s468 + $0x22b8] sm:$0xff]
        %v2406 = vld [vmem:[%s468 + $0x22c0] sm:$0xff]
        %v2407 = vld [vmem:[%s468 + $0x22c8] sm:$0xff]
        %v2408 = vld [vmem:[%s468 + $0x22d0] sm:$0xff]
        %v2409 = vld [vmem:[%s468 + $0x22d8] sm:$0xff]
        %v2410 = vld [vmem:[%s468 + $0x22e0] sm:$0xff]
        %v2411 = vld [vmem:[%s468 + $0x22e8] sm:$0xff]
        %v2412 = vld [vmem:[%s468 + $0x22f0] sm:$0xff]
        %v2413 = vld [vmem:[%s468 + $0x22f8] sm:$0xff]
        %v2414 = vld [vmem:[%s468 + $0x2300] sm:$0xff]
        %v2415 = vld [vmem:[%s468 + $0x2308] sm:$0xff]
        %v2416 = vld [vmem:[%s468 + $0x2310] sm:$0xff]
        %v2417 = vld [vmem:[%s468 + $0x2318] sm:$0xff]
        %v2418 = vld [vmem:[%s468 + $0x2320] sm:$0xff]
        %v2419 = vld [vmem:[%s468 + $0x2328] sm:$0xff]
        %v2420 = vld [vmem:[%s468 + $0x2330] sm:$0xff]
        %v2421 = vld [vmem:[%s468 + $0x2338] sm:$0xff]
        %v2422 = vld [vmem:[%s468 + $0x2340] sm:$0xff]
        %v2423 = vld [vmem:[%s468 + $0x2348] sm:$0xff]
        %v2424 = vld [vmem:[%s468 + $0x2350] sm:$0xff]
        %v2425 = vld [vmem:[%s468 + $0x2358] sm:$0xff]
        %v2426 = vld [vmem:[%s468 + $0x2360] sm:$0xff]
        %v2427 = vld [vmem:[%s468 + $0x2368] sm:$0xff]
        %v2428 = vld [vmem:[%s468 + $0x2370] sm:$0xff]
        %v2429 = vld [vmem:[%s468 + $0x2378] sm:$0xff]
        %v2430 = vld [vmem:[%s468 + $0x2380] sm:$0xff]
        %v2431 = vld [vmem:[%s468 + $0x2388] sm:$0xff]
        %v2432 = vld [vmem:[%s468 + $0x2390] sm:$0xff]
        %v2433 = vld [vmem:[%s468 + $0x2398] sm:$0xff]
        %v2434 = vld [vmem:[%s468 + $0x23a0] sm:$0xff]
        %v2435 = vld [vmem:[%s468 + $0x23a8] sm:$0xff]
        %v2436 = vld [vmem:[%s468 + $0x23b0] sm:$0xff]
        %v2437 = vld [vmem:[%s468 + $0x23b8] sm:$0xff]
        %v2438 = vld [vmem:[%s468 + $0x23c0] sm:$0xff]
        %v2439 = vld [vmem:[%s468 + $0x23c8] sm:$0xff]
        %v2440 = vld [vmem:[%s468 + $0x23d0] sm:$0xff]
        %v2441 = vld [vmem:[%s468 + $0x23d8] sm:$0xff]
        %v2442 = vld [vmem:[%s468 + $0x23e0] sm:$0xff]
        %v2443 = vld [vmem:[%s468 + $0x23e8] sm:$0xff]
        %v2444 = vld [vmem:[%s468 + $0x23f0] sm:$0xff]
        %v2445 = vld [vmem:[%s468 + $0x23f8] sm:$0xff]
        %v2446 = vld [vmem:[%s468 + $0x2400] sm:$0xff]
        %v2447 = vld [vmem:[%s468 + $0x2408] sm:$0xff]
        %v2448 = vld [vmem:[%s468 + $0x2410] sm:$0xff]
        %v2449 = vld [vmem:[%s468 + $0x2418] sm:$0xff]
        %v2450 = vld [vmem:[%s468 + $0x2420] sm:$0xff]
        %v2451 = vld [vmem:[%s468 + $0x2428] sm:$0xff]
        %v2452 = vld [vmem:[%s468 + $0x2430] sm:$0xff]
        %v2453 = vld [vmem:[%s468 + $0x2438] sm:$0xff]
        %v2454 = vld [vmem:[%s468 + $0x2440] sm:$0xff]
        %v2455 = vld [vmem:[%s468 + $0x2448] sm:$0xff]
        %v2456 = vld [vmem:[%s468 + $0x2450] sm:$0xff]
        %v2457 = vld [vmem:[%s468 + $0x2458] sm:$0xff]
        %v2458 = vld [vmem:[%s468 + $0x2460] sm:$0xff]
        %v2459 = vld [vmem:[%s468 + $0x2468] sm:$0xff]
        %v2460 = vld [vmem:[%s468 + $0x2470] sm:$0xff]
        %v2461 = vld [vmem:[%s468 + $0x2478] sm:$0xff]
        %v2462 = vld [vmem:[%s468 + $0x2480] sm:$0xff]
        %v2463 = vld [vmem:[%s468 + $0x2488] sm:$0xff]
        %v2464 = vld [vmem:[%s468 + $0x2490] sm:$0xff]
        %v2465 = vld [vmem:[%s468 + $0x2498] sm:$0xff]
        %v2466 = vld [vmem:[%s468 + $0x24a0] sm:$0xff]
        %v2467 = vld [vmem:[%s468 + $0x24a8] sm:$0xff]
        %v2468 = vld [vmem:[%s468 + $0x24b0] sm:$0xff]
        %v2469 = vld [vmem:[%s468 + $0x24b8] sm:$0xff]
        %v2470 = vld [vmem:[%s477] sm:$0xff]
        %v2472 = vlaneseq
        %v2473 = vshrl.u32 %v2472, 7
        %v2474 = vsub.s32 0, %v2473
        %v2475 = vrot.slane %v2470, %v2474
        %v2476 = vlaneseq
        %v2477 = vshrl.u32 %v2476, 7
        %v2478 = vsub.s32 1, %v2477
        %v2479 = vrot.slane %v2470, %v2478
        %v2480 = vlaneseq
        %v2481 = vshrl.u32 %v2480, 7
        %v2482 = vsub.s32 2, %v2481
        %v2483 = vrot.slane %v2470, %v2482
        %v2484 = vlaneseq
        %v2485 = vshrl.u32 %v2484, 7
        %v2486 = vsub.s32 3, %v2485
        %v2487 = vrot.slane %v2470, %v2486
        %v2488 = vlaneseq
        %v2489 = vshrl.u32 %v2488, 7
        %v2490 = vsub.s32 4, %v2489
        %v2491 = vrot.slane %v2470, %v2490
        %v2492 = vlaneseq
        %v2493 = vshrl.u32 %v2492, 7
        %v2494 = vsub.s32 5, %v2493
        %v2495 = vrot.slane %v2470, %v2494
        %v2496 = vlaneseq
        %v2497 = vshrl.u32 %v2496, 7
        %v2498 = vsub.s32 6, %v2497
        %v2499 = vrot.slane %v2470, %v2498
        %vm2507 = vcmask 523264
        %v2509 = vsel %vm2507, %v1293, 0
        %2511 = vmatprep.subr.mxu0 %v1295
        %2512 = vmatpush1.msra.mxu0 %v1294
        %2513 = vmatprep.subr.mxu0 %v1302
        %2514 = vmatpush1.msra.mxu0 %v1301
        %2515 = vmatprep.subr.mxu0 %v1309
        %2516 = vmatpush1.msra.mxu0 %v1308
        %2517 = vmatprep.subr.mxu0 %v1316
        %2518 = vmatpush1.msra.mxu0 %v1315
        %2519 = vmatprep.subr.mxu0 %v1323
        %2520 = vmatpush1.msra.mxu0 %v1322
        %2521 = vmatprep.subr.mxu0 %v1330
        %2522 = vmatpush1.msra.mxu0 %v1329
        %2523 = vmatprep.subr.mxu0 %v1337
        %2524 = vmatpush1.msra.mxu0 %v1336
        %2525 = vmatprep.subr.mxu0 %v1344
        %2526 = vmatpush1.msra.mxu0 %v1343
        %2527 = vmatprep.subr.mxu0 %v1351
        %2528 = vmatpush1.msra.mxu0 %v1350
        %2529 = vmatprep.subr.mxu0 %v1358
        %2530 = vmatpush1.msra.mxu0 %v1357
        %2531 = vmatprep.subr.mxu0 %v1365
        %2532 = vmatpush1.msra.mxu0 %v1364
        %2533 = vmatprep.subr.mxu0 %v1372
        %2534 = vmatpush1.msra.mxu0 %v1371
        %2535 = vmatprep.subr.mxu0 %v1379
        %2536 = vmatpush1.msra.mxu0 %v1378
        %2537 = vmatprep.subr.mxu0 %v1386
        %2538 = vmatpush1.msra.mxu0 %v1385
        %2539 = vmatprep.subr.mxu0 %v1393
        %2540 = vmatpush1.msra.mxu0 %v1392
        %2541 = vmatprep.subr.mxu0 %v1400
        %2542 = vmatpush1.msra.mxu0 %v1399
        %2543 = vmatprep.subr.mxu0 %v1407
        %2544 = vmatpush1.msra.mxu0 %v1406
        %2545 = vmatprep.subr.mxu0 %v1414
        %2546 = vmatpush1.msra.mxu0 %v1413
        %2547 = vmatprep.subr.mxu0 %v1421
        %2548 = vmatpush1.msra.mxu0 %v1420
        %2549 = vmatprep.subr.mxu0 %v1428
        %2550 = vmatpush1.msra.mxu0 %v1427
        %2551 = vmatprep.subr.mxu0 %v1435
        %2552 = vmatpush1.msra.mxu0 %v1434
        %2553 = vmatprep.subr.mxu0 %v1442
        %2554 = vmatpush1.msra.mxu0 %v1441
        %2555 = vmatprep.subr.mxu0 %v1449
        %2556 = vmatpush1.msra.mxu0 %v1448
        %2557 = vmatprep.subr.mxu0 %v1456
        %2558 = vmatpush1.msra.mxu0 %v1455
        %2559 = vmatprep.subr.mxu0 %v1463
        %2560 = vmatpush1.msra.mxu0 %v1462
        %2561 = vmatprep.subr.mxu0 %v1470
        %2562 = vmatpush1.msra.mxu0 %v1469
        %2563 = vmatprep.subr.mxu0 %v1477
        %2564 = vmatpush1.msra.mxu0 %v1476
        %2565 = vmatprep.subr.mxu0 %v1484
        %2566 = vmatpush1.msra.mxu0 %v1483
        %2567 = vmatprep.subr.mxu0 %v1491
        %2568 = vmatpush1.msra.mxu0 %v1490
        %2569 = vmatprep.subr.mxu0 %v1498
        %2570 = vmatpush1.msra.mxu0 %v1497
        %2571 = vmatprep.subr.mxu0 %v1505
        %2572 = vmatpush1.msra.mxu0 %v1504
        %2573 = vmatprep.subr.mxu0 %v1512
        %2574 = vmatpush1.msra.mxu0 %v1511
        %2575 = vmatprep.mubr.f32.mxu0 %v1284
        %2576 = vmatmul.mubr.f32.gmra.mrb[0].mxu0 %v1283
        %v2577 = vpop.f32.mrb[0].mxu0
        %v2578 = vadd.f32 %v2475, %v2577
        %v2579 = vpop.f32.mrb[0].mxu0
        %v2580 = vadd.f32 %v2479, %v2579
        %2581 = vdwg.mxu0
        %2582 = vmatprep.subr.mxu0 %v1519
        %2583 = vmatpush1.msra.mxu0 %v1518
        %2584 = vmatprep.subr.mxu0 %v1526
        %2585 = vmatpush1.msra.mxu0 %v1525
        %2586 = vmatprep.subr.mxu0 %v1533
        %2587 = vmatpush1.msra.mxu0 %v1532
        %2588 = vmatprep.subr.mxu0 %v1540
        %2589 = vmatpush1.msra.mxu0 %v1539
        %2590 = vmatprep.subr.mxu0 %v1547
        %2591 = vmatpush1.msra.mxu0 %v1546
        %2592 = vmatprep.subr.mxu0 %v1554
        %2593 = vmatpush1.msra.mxu0 %v1553
        %2594 = vmatprep.subr.mxu0 %v1561
        %2595 = vmatpush1.msra.mxu0 %v1560
        %2596 = vmatprep.subr.mxu0 %v1568
        %2597 = vmatpush1.msra.mxu0 %v1567
        %2598 = vmatprep.subr.mxu0 %v1575
        %2599 = vmatpush1.msra.mxu0 %v1574
        %2600 = vmatprep.subr.mxu0 %v1582
        %2601 = vmatpush1.msra.mxu0 %v1581
        %2602 = vmatprep.subr.mxu0 %v1589
        %2603 = vmatpush1.msra.mxu0 %v1588
        %2604 = vmatprep.subr.mxu0 %v1596
        %2605 = vmatpush1.msra.mxu0 %v1595
        %2606 = vmatprep.subr.mxu0 %v1603
        %2607 = vmatpush1.msra.mxu0 %v1602
        %2608 = vmatprep.subr.mxu0 %v1610
        %2609 = vmatpush1.msra.mxu0 %v1609
        %2610 = vmatprep.subr.mxu0 %v1617
        %2611 = vmatpush1.msra.mxu0 %v1616
        %2612 = vmatprep.subr.mxu0 %v1624
        %2613 = vmatpush1.msra.mxu0 %v1623
        %2614 = vmatprep.subr.mxu0 %v1631
        %2615 = vmatpush1.msra.mxu0 %v1630
        %2616 = vmatprep.subr.mxu0 %v1638
        %2617 = vmatpush1.msra.mxu0 %v1637
        %2618 = vmatprep.subr.mxu0 %v1645
        %2619 = vmatpush1.msra.mxu0 %v1644
        %2620 = vmatprep.subr.mxu0 %v1652
        %2621 = vmatpush1.msra.mxu0 %v1651
        %2622 = vmatprep.subr.mxu0 %v1659
        %2623 = vmatpush1.msra.mxu0 %v1658
        %2624 = vmatprep.subr.mxu0 %v1666
        %2625 = vmatpush1.msra.mxu0 %v1665
        %2626 = vmatprep.subr.mxu0 %v1673
        %2627 = vmatpush1.msra.mxu0 %v1672
        %2628 = vmatprep.subr.mxu0 %v1680
        %2629 = vmatpush1.msra.mxu0 %v1679
        %2630 = vmatprep.subr.mxu0 %v1687
        %2631 = vmatpush1.msra.mxu0 %v1686
        %2632 = vmatprep.subr.mxu0 %v1694
        %2633 = vmatpush1.msra.mxu0 %v1693
        %2634 = vmatprep.subr.mxu0 %v1701
        %2635 = vmatpush1.msra.mxu0 %v1700
        %2636 = vmatprep.subr.mxu0 %v1708
        %2637 = vmatpush1.msra.mxu0 %v1707
        %2638 = vmatprep.subr.mxu0 %v1715
        %2639 = vmatpush1.msra.mxu0 %v1714
        %2640 = vmatprep.subr.mxu0 %v1722
        %2641 = vmatpush1.msra.mxu0 %v1721
        %2642 = vmatprep.subr.mxu0 %v1729
        %2643 = vmatpush1.msra.mxu0 %v1728
        %2644 = vmatprep.subr.mxu0 %v1736
        %2645 = vmatpush1.msra.mxu0 %v1735
        %2646 = vmatprep.mubr.f32.mxu0 %v1286
        %2647 = vmatmul.mubr.f32.gmra.mrb[0].mxu0 %v1285
        %v2648 = vpop.f32.mrb[0].mxu0
        %v2649 = vadd.f32 %v2578, %v2648
        %v2650 = vpop.f32.mrb[0].mxu0
        %v2651 = vadd.f32 %v2580, %v2650
        %2652 = vdwg.mxu0
        %2653 = vmatprep.subr.mxu0 %v1743
        %2654 = vmatpush1.msra.mxu0 %v1742
        %2655 = vmatprep.subr.mxu0 %v1750
        %2656 = vmatpush1.msra.mxu0 %v1749
        %2657 = vmatprep.subr.mxu0 %v1757
        %2658 = vmatpush1.msra.mxu0 %v1756
        %2659 = vmatprep.subr.mxu0 %v1764
        %2660 = vmatpush1.msra.mxu0 %v1763
        %2661 = vmatprep.subr.mxu0 %v1771
        %2662 = vmatpush1.msra.mxu0 %v1770
        %2663 = vmatprep.subr.mxu0 %v1778
        %2664 = vmatpush1.msra.mxu0 %v1777
        %2665 = vmatprep.subr.mxu0 %v1785
        %2666 = vmatpush1.msra.mxu0 %v1784
        %2667 = vmatprep.subr.mxu0 %v1792
        %2668 = vmatpush1.msra.mxu0 %v1791
        %2669 = vmatprep.subr.mxu0 %v1799
        %2670 = vmatpush1.msra.mxu0 %v1798
        %2671 = vmatprep.subr.mxu0 %v1806
        %2672 = vmatpush1.msra.mxu0 %v1805
        %2673 = vmatprep.subr.mxu0 %v1813
        %2674 = vmatpush1.msra.mxu0 %v1812
        %2675 = vmatprep.subr.mxu0 %v1820
        %2676 = vmatpush1.msra.mxu0 %v1819
        %2677 = vmatprep.subr.mxu0 %v1827
        %2678 = vmatpush1.msra.mxu0 %v1826
        %2679 = vmatprep.subr.mxu0 %v1834
        %2680 = vmatpush1.msra.mxu0 %v1833
        %2681 = vmatprep.subr.mxu0 %v1841
        %2682 = vmatpush1.msra.mxu0 %v1840
        %2683 = vmatprep.subr.mxu0 %v1848
        %2684 = vmatpush1.msra.mxu0 %v1847
        %2685 = vmatprep.subr.mxu0 %v1855
        %2686 = vmatpush1.msra.mxu0 %v1854
        %2687 = vmatprep.subr.mxu0 %v1862
        %2688 = vmatpush1.msra.mxu0 %v1861
        %2689 = vmatprep.subr.mxu0 %v1869
        %2690 = vmatpush1.msra.mxu0 %v1868
        %2691 = vmatprep.subr.mxu0 %v1876
        %2692 = vmatpush1.msra.mxu0 %v1875
        %2693 = vmatprep.subr.mxu0 %v1883
        %2694 = vmatpush1.msra.mxu0 %v1882
        %2695 = vmatprep.subr.mxu0 %v1890
        %2696 = vmatpush1.msra.mxu0 %v1889
        %2697 = vmatprep.subr.mxu0 %v1897
        %2698 = vmatpush1.msra.mxu0 %v1896
        %2699 = vmatprep.subr.mxu0 %v1904
        %2700 = vmatpush1.msra.mxu0 %v1903
        %2701 = vmatprep.subr.mxu0 %v1911
        %2702 = vmatpush1.msra.mxu0 %v1910
        %2703 = vmatprep.subr.mxu0 %v1918
        %2704 = vmatpush1.msra.mxu0 %v1917
        %2705 = vmatprep.subr.mxu0 %v1925
        %2706 = vmatpush1.msra.mxu0 %v1924
        %2707 = vmatprep.subr.mxu0 %v1932
        %2708 = vmatpush1.msra.mxu0 %v1931
        %2709 = vmatprep.subr.mxu0 %v1939
        %2710 = vmatpush1.msra.mxu0 %v1938
        %2711 = vmatprep.subr.mxu0 %v1946
        %2712 = vmatpush1.msra.mxu0 %v1945
        %2713 = vmatprep.subr.mxu0 %v1953
        %2714 = vmatpush1.msra.mxu0 %v1952
        %2715 = vmatprep.subr.mxu0 %v1960
        %2716 = vmatpush1.msra.mxu0 %v1959
        %2717 = vmatprep.mubr.f32.mxu0 %v1288
        %2718 = vmatmul.mubr.f32.gmra.mrb[0].mxu0 %v1287
        %v2719 = vpop.f32.mrb[0].mxu0
        %v2720 = vadd.f32 %v2649, %v2719
        %v2721 = vpop.f32.mrb[0].mxu0
        %v2722 = vadd.f32 %v2651, %v2721
        %2723 = vdwg.mxu0
        %2724 = vmatprep.subr.mxu0 %v1967
        %2725 = vmatpush1.msra.mxu0 %v1966
        %2726 = vmatprep.subr.mxu0 %v1974
        %2727 = vmatpush1.msra.mxu0 %v1973
        %2728 = vmatprep.subr.mxu0 %v1981
        %2729 = vmatpush1.msra.mxu0 %v1980
        %2730 = vmatprep.subr.mxu0 %v1988
        %2731 = vmatpush1.msra.mxu0 %v1987
        %2732 = vmatprep.subr.mxu0 %v1995
        %2733 = vmatpush1.msra.mxu0 %v1994
        %2734 = vmatprep.subr.mxu0 %v2002
        %2735 = vmatpush1.msra.mxu0 %v2001
        %2736 = vmatprep.subr.mxu0 %v2009
        %2737 = vmatpush1.msra.mxu0 %v2008
        %2738 = vmatprep.subr.mxu0 %v2016
        %2739 = vmatpush1.msra.mxu0 %v2015
        %2740 = vmatprep.subr.mxu0 %v2023
        %2741 = vmatpush1.msra.mxu0 %v2022
        %2742 = vmatprep.subr.mxu0 %v2030
        %2743 = vmatpush1.msra.mxu0 %v2029
        %2744 = vmatprep.subr.mxu0 %v2037
        %2745 = vmatpush1.msra.mxu0 %v2036
        %2746 = vmatprep.subr.mxu0 %v2044
        %2747 = vmatpush1.msra.mxu0 %v2043
        %2748 = vmatprep.subr.mxu0 %v2051
        %2749 = vmatpush1.msra.mxu0 %v2050
        %2750 = vmatprep.subr.mxu0 %v2058
        %2751 = vmatpush1.msra.mxu0 %v2057
        %2752 = vmatprep.subr.mxu0 %v2065
        %2753 = vmatpush1.msra.mxu0 %v2064
        %2754 = vmatprep.subr.mxu0 %v2072
        %2755 = vmatpush1.msra.mxu0 %v2071
        %2756 = vmatprep.subr.mxu0 %v2079
        %2757 = vmatpush1.msra.mxu0 %v2078
        %2758 = vmatprep.subr.mxu0 %v2086
        %2759 = vmatpush1.msra.mxu0 %v2085
        %2760 = vmatprep.subr.mxu0 %v2093
        %2761 = vmatpush1.msra.mxu0 %v2092
        %2762 = vmatprep.subr.mxu0 %v2100
        %2763 = vmatpush1.msra.mxu0 %v2099
        %2764 = vmatprep.subr.mxu0 %v2107
        %2765 = vmatpush1.msra.mxu0 %v2106
        %2766 = vmatprep.subr.mxu0 %v2114
        %2767 = vmatpush1.msra.mxu0 %v2113
        %2768 = vmatprep.subr.mxu0 %v2121
        %2769 = vmatpush1.msra.mxu0 %v2120
        %2770 = vmatprep.subr.mxu0 %v2128
        %2771 = vmatpush1.msra.mxu0 %v2127
        %2772 = vmatprep.subr.mxu0 %v2135
        %2773 = vmatpush1.msra.mxu0 %v2134
        %2774 = vmatprep.subr.mxu0 %v2142
        %2775 = vmatpush1.msra.mxu0 %v2141
        %2776 = vmatprep.subr.mxu0 %v2149
        %2777 = vmatpush1.msra.mxu0 %v2148
        %2778 = vmatprep.subr.mxu0 %v2156
        %2779 = vmatpush1.msra.mxu0 %v2155
        %2780 = vmatprep.subr.mxu0 %v2163
        %2781 = vmatpush1.msra.mxu0 %v2162
        %2782 = vmatprep.subr.mxu0 %v2170
        %2783 = vmatpush1.msra.mxu0 %v2169
        %2784 = vmatprep.subr.mxu0 %v2177
        %2785 = vmatpush1.msra.mxu0 %v2176
        %2786 = vmatprep.subr.mxu0 %v2184
        %2787 = vmatpush1.msra.mxu0 %v2183
        %2788 = vmatprep.mubr.f32.mxu0 %v1290
        %2789 = vmatmul.mubr.f32.gmra.mrb[0].mxu0 %v1289
        %v2790 = vpop.f32.mrb[0].mxu0
        %v2791 = vadd.f32 %v2720, %v2790
        %v2792 = vpop.f32.mrb[0].mxu0
        %v2793 = vadd.f32 %v2722, %v2792
        %2794 = vdwg.mxu0
        %2795 = vmatprep.subr.mxu0 %v2191
        %2796 = vmatpush1.msra.mxu0 %v2190
        %2797 = vmatprep.subr.mxu0 %v2198
        %2798 = vmatpush1.msra.mxu0 %v2197
        %2799 = vmatprep.subr.mxu0 %v2205
        %2800 = vmatpush1.msra.mxu0 %v2204
        %2801 = vmatprep.subr.mxu0 %v2212
        %2802 = vmatpush1.msra.mxu0 %v2211
        %2803 = vmatprep.subr.mxu0 %v2219
        %2804 = vmatpush1.msra.mxu0 %v2218
        %2805 = vmatprep.subr.mxu0 %v2226
        %2806 = vmatpush1.msra.mxu0 %v2225
        %2807 = vmatprep.subr.mxu0 %v2233
        %2808 = vmatpush1.msra.mxu0 %v2232
        %2809 = vmatprep.subr.mxu0 %v2240
        %2810 = vmatpush1.msra.mxu0 %v2239
        %2811 = vmatprep.subr.mxu0 %v2247
        %2812 = vmatpush1.msra.mxu0 %v2246
        %2813 = vmatprep.subr.mxu0 %v2254
        %2814 = vmatpush1.msra.mxu0 %v2253
        %2815 = vmatprep.subr.mxu0 %v2261
        %2816 = vmatpush1.msra.mxu0 %v2260
        %2817 = vmatprep.subr.mxu0 %v2268
        %2818 = vmatpush1.msra.mxu0 %v2267
        %2819 = vmatprep.subr.mxu0 %v2275
        %2820 = vmatpush1.msra.mxu0 %v2274
        %2821 = vmatprep.subr.mxu0 %v2282
        %2822 = vmatpush1.msra.mxu0 %v2281
        %2823 = vmatprep.subr.mxu0 %v2289
        %2824 = vmatpush1.msra.mxu0 %v2288
        %2825 = vmatprep.subr.mxu0 %v2296
        %2826 = vmatpush1.msra.mxu0 %v2295
        %2827 = vmatprep.subr.mxu0 %v2303
        %2828 = vmatpush1.msra.mxu0 %v2302
        %2829 = vmatprep.subr.mxu0 %v2310
        %2830 = vmatpush1.msra.mxu0 %v2309
        %2831 = vmatprep.subr.mxu0 %v2317
        %2832 = vmatpush1.msra.mxu0 %v2316
        %2833 = vmatprep.subr.mxu0 %v2324
        %2834 = vmatpush1.msra.mxu0 %v2323
        %2835 = vmatprep.subr.mxu0 %v2331
        %2836 = vmatpush1.msra.mxu0 %v2330
        %2837 = vmatprep.subr.mxu0 %v2338
        %2838 = vmatpush1.msra.mxu0 %v2337
        %2839 = vmatprep.subr.mxu0 %v2345
        %2840 = vmatpush1.msra.mxu0 %v2344
        %2841 = vmatprep.subr.mxu0 %v2352
        %2842 = vmatpush1.msra.mxu0 %v2351
        %2843 = vmatprep.subr.mxu0 %v2359
        %2844 = vmatpush1.msra.mxu0 %v2358
        %2845 = vmatprep.subr.mxu0 %v2366
        %2846 = vmatpush1.msra.mxu0 %v2365
        %2847 = vmatprep.subr.mxu0 %v2373
        %2848 = vmatpush1.msra.mxu0 %v2372
        %2849 = vmatprep.subr.mxu0 %v2380
        %2850 = vmatpush1.msra.mxu0 %v2379
        %2851 = vmatprep.subr.mxu0 %v2387
        %2852 = vmatpush1.msra.mxu0 %v2386
        %2853 = vmatprep.subr.mxu0 %v2394
        %2854 = vmatpush1.msra.mxu0 %v2393
        %2855 = vmatprep.subr.mxu0 %v2401
        %2856 = vmatpush1.msra.mxu0 %v2400
        %2857 = vmatprep.subr.mxu0 %v2408
        %2858 = vmatpush1.msra.mxu0 %v2407
        %2859 = vmatprep.mubr.f32.mxu0 %v1292
        %2860 = vmatmul.mubr.f32.gmra.mrb[0].mxu0 %v1291
        %v2861 = vpop.f32.mrb[0].mxu0
        %v2862 = vadd.f32 %v2791, %v2861
        %v2863 = vpop.f32.mrb[0].mxu0
        %v2864 = vadd.f32 %v2793, %v2863
        %2865 = vdwg.mxu0
        %2866 = vmatprep.subr.mxu0 %v2415
        %2867 = vmatpush1.msra.mxu0 %v2414
        %2868 = vmatprep.subr.mxu0 %v2422
        %2869 = vmatpush1.msra.mxu0 %v2421
        %2870 = vmatprep.subr.mxu0 %v2429
        %2871 = vmatpush1.msra.mxu0 %v2428
        %2872 = vmatprep.subr.mxu0 %v2436
        %2873 = vmatpush1.msra.mxu0 %v2435
        %2874 = vmatprep.subr.mxu0 %v2443
        %2875 = vmatpush1.msra.mxu0 %v2442
        %2876 = vmatprep.subr.mxu0 %v2450
        %2877 = vmatpush1.msra.mxu0 %v2449
        %2878 = vmatprep.subr.mxu0 %v2457
        %2879 = vmatpush1.msra.mxu0 %v2456
        %2880 = vmatprep.subr.mxu0 %v2464
        %2881 = vmatpush1.msra.mxu0 %v2463
        %2882 = vmatprep.subr.mxu0 0.0
        %2883 = vmatpush1.msra.mxu0 0.0
        %2884 = vmatprep.subr.mxu0 0.0
        %2885 = vmatpush1.msra.mxu0 0.0
        %2886 = vmatprep.subr.mxu0 0.0
        %2887 = vmatpush1.msra.mxu0 0.0
        %2888 = vmatprep.subr.mxu0 0.0
        %2889 = vmatpush1.msra.mxu0 0.0
        %2890 = vmatprep.subr.mxu0 0.0
        %2891 = vmatpush1.msra.mxu0 0.0
        %2892 = vmatprep.subr.mxu0 0.0
        %2893 = vmatpush1.msra.mxu0 0.0
        %2894 = vmatprep.subr.mxu0 0.0
        %2895 = vmatpush1.msra.mxu0 0.0
        %2896 = vmatprep.subr.mxu0 0.0
        %2897 = vmatpush1.msra.mxu0 0.0
        %2898 = vmatprep.subr.mxu0 0.0
        %2899 = vmatpush1.msra.mxu0 0.0
        %2900 = vmatprep.subr.mxu0 0.0
        %2901 = vmatpush1.msra.mxu0 0.0
        %2902 = vmatprep.subr.mxu0 0.0
        %2903 = vmatpush1.msra.mxu0 0.0
        %2904 = vmatprep.subr.mxu0 0.0
        %2905 = vmatpush1.msra.mxu0 0.0
        %2906 = vmatprep.subr.mxu0 0.0
        %2907 = vmatpush1.msra.mxu0 0.0
        %2908 = vmatprep.subr.mxu0 0.0
        %2909 = vmatpush1.msra.mxu0 0.0
        %2910 = vmatprep.subr.mxu0 0.0
        %2911 = vmatpush1.msra.mxu0 0.0
        %2912 = vmatprep.subr.mxu0 0.0
        %2913 = vmatpush1.msra.mxu0 0.0
        %2914 = vmatprep.subr.mxu0 0.0
        %2915 = vmatpush1.msra.mxu0 0.0
        %2916 = vmatprep.subr.mxu0 0.0
        %2917 = vmatpush1.msra.mxu0 0.0
        %2918 = vmatprep.subr.mxu0 0.0
        %2919 = vmatpush1.msra.mxu0 0.0
        %2920 = vmatprep.subr.mxu0 0.0
        %2921 = vmatpush1.msra.mxu0 0.0
        %2922 = vmatprep.subr.mxu0 0.0
        %2923 = vmatpush1.msra.mxu0 0.0
        %2924 = vmatprep.subr.mxu0 0.0
        %2925 = vmatpush1.msra.mxu0 0.0
        %2926 = vmatprep.subr.mxu0 0.0
        %2927 = vmatpush1.msra.mxu0 0.0
        %2928 = vmatprep.subr.mxu0 0.0
        %2929 = vmatpush1.msra.mxu0 0.0
        %2930 = vmatprep.mubr.f32.mxu0 0.0
        %2931 = vmatmul.mubr.f32.gmra.mrb[0].mxu0 %v2509
        %v2932 = vpop.f32.mrb[0].mxu0
        %v2933 = vadd.f32 %v2862, %v2932
        %v2934 = vpop.f32.mrb[0].mxu0
        %v2935 = vadd.f32 %v2864, %v2934
        %2936 = vdwg.mxu0
        %2937 = vmatprep.subr.mxu0 %v1297
        %2938 = vmatpush1.msra.mxu0 %v1296
        %2939 = vmatprep.subr.mxu0 %v1304
        %2940 = vmatpush1.msra.mxu0 %v1303
        %2941 = vmatprep.subr.mxu0 %v1311
        %2942 = vmatpush1.msra.mxu0 %v1310
        %2943 = vmatprep.subr.mxu0 %v1318
        %2944 = vmatpush1.msra.mxu0 %v1317
        %2945 = vmatprep.subr.mxu0 %v1325
        %2946 = vmatpush1.msra.mxu0 %v1324
        %2947 = vmatprep.subr.mxu0 %v1332
        %2948 = vmatpush1.msra.mxu0 %v1331
        %2949 = vmatprep.subr.mxu0 %v1339
        %2950 = vmatpush1.msra.mxu0 %v1338
        %2951 = vmatprep.subr.mxu0 %v1346
        %2952 = vmatpush1.msra.mxu0 %v1345
        %2953 = vmatprep.subr.mxu0 %v1353
        %2954 = vmatpush1.msra.mxu0 %v1352
        %2955 = vmatprep.subr.mxu0 %v1360
        %2956 = vmatpush1.msra.mxu0 %v1359
        %2957 = vmatprep.subr.mxu0 %v1367
        %2958 = vmatpush1.msra.mxu0 %v1366
        %2959 = vmatprep.subr.mxu0 %v1374
        %2960 = vmatpush1.msra.mxu0 %v1373
        %2961 = vmatprep.subr.mxu0 %v1381
        %2962 = vmatpush1.msra.mxu0 %v1380
        %2963 = vmatprep.subr.mxu0 %v1388
        %2964 = vmatpush1.msra.mxu0 %v1387
        %2965 = vmatprep.subr.mxu0 %v1395
        %2966 = vmatpush1.msra.mxu0 %v1394
        %2967 = vmatprep.subr.mxu0 %v1402
        %2968 = vmatpush1.msra.mxu0 %v1401
        %2969 = vmatprep.subr.mxu0 %v1409
        %2970 = vmatpush1.msra.mxu0 %v1408
        %2971 = vmatprep.subr.mxu0 %v1416
        %2972 = vmatpush1.msra.mxu0 %v1415
        %2973 = vmatprep.subr.mxu0 %v1423
        %2974 = vmatpush1.msra.mxu0 %v1422
        %2975 = vmatprep.subr.mxu0 %v1430
        %2976 = vmatpush1.msra.mxu0 %v1429
        %2977 = vmatprep.subr.mxu0 %v1437
        %2978 = vmatpush1.msra.mxu0 %v1436
        %2979 = vmatprep.subr.mxu0 %v1444
        %2980 = vmatpush1.msra.mxu0 %v1443
        %2981 = vmatprep.subr.mxu0 %v1451
        %2982 = vmatpush1.msra.mxu0 %v1450
        %2983 = vmatprep.subr.mxu0 %v1458
        %2984 = vmatpush1.msra.mxu0 %v1457
        %2985 = vmatprep.subr.mxu0 %v1465
        %2986 = vmatpush1.msra.mxu0 %v1464
        %2987 = vmatprep.subr.mxu0 %v1472
        %2988 = vmatpush1.msra.mxu0 %v1471
        %2989 = vmatprep.subr.mxu0 %v1479
        %2990 = vmatpush1.msra.mxu0 %v1478
        %2991 = vmatprep.subr.mxu0 %v1486
        %2992 = vmatpush1.msra.mxu0 %v1485
        %2993 = vmatprep.subr.mxu0 %v1493
        %2994 = vmatpush1.msra.mxu0 %v1492
        %2995 = vmatprep.subr.mxu0 %v1500
        %2996 = vmatpush1.msra.mxu0 %v1499
        %2997 = vmatprep.subr.mxu0 %v1507
        %2998 = vmatpush1.msra.mxu0 %v1506
        %2999 = vmatprep.subr.mxu0 %v1514
        %3000 = vmatpush1.msra.mxu0 %v1513
        %3001 = vmatprep.mubr.f32.mxu0 %v1284
        %3002 = vmatmul.mubr.f32.gmra.mrb[0].mxu0 %v1283
        %v3003 = vpop.f32.mrb[0].mxu0
        %v3004 = vadd.f32 %v2483, %v3003
        %v3005 = vpop.f32.mrb[0].mxu0
        %v3006 = vadd.f32 %v2487, %v3005
        %3007 = vdwg.mxu0
        %3008 = vmatprep.subr.mxu0 %v1521
        %3009 = vmatpush1.msra.mxu0 %v1520
        %3010 = vmatprep.subr.mxu0 %v1528
        %3011 = vmatpush1.msra.mxu0 %v1527
        %3012 = vmatprep.subr.mxu0 %v1535
        %3013 = vmatpush1.msra.mxu0 %v1534
        %3014 = vmatprep.subr.mxu0 %v1542
        %3015 = vmatpush1.msra.mxu0 %v1541
        %3016 = vmatprep.subr.mxu0 %v1549
        %3017 = vmatpush1.msra.mxu0 %v1548
        %3018 = vmatprep.subr.mxu0 %v1556
        %3019 = vmatpush1.msra.mxu0 %v1555
        %3020 = vmatprep.subr.mxu0 %v1563
        %3021 = vmatpush1.msra.mxu0 %v1562
        %3022 = vmatprep.subr.mxu0 %v1570
        %3023 = vmatpush1.msra.mxu0 %v1569
        %3024 = vmatprep.subr.mxu0 %v1577
        %3025 = vmatpush1.msra.mxu0 %v1576
        %3026 = vmatprep.subr.mxu0 %v1584
        %3027 = vmatpush1.msra.mxu0 %v1583
        %3028 = vmatprep.subr.mxu0 %v1591
        %3029 = vmatpush1.msra.mxu0 %v1590
        %3030 = vmatprep.subr.mxu0 %v1598
        %3031 = vmatpush1.msra.mxu0 %v1597
        %3032 = vmatprep.subr.mxu0 %v1605
        %3033 = vmatpush1.msra.mxu0 %v1604
        %3034 = vmatprep.subr.mxu0 %v1612
        %3035 = vmatpush1.msra.mxu0 %v1611
        %3036 = vmatprep.subr.mxu0 %v1619
        %3037 = vmatpush1.msra.mxu0 %v1618
        %3038 = vmatprep.subr.mxu0 %v1626
        %3039 = vmatpush1.msra.mxu0 %v1625
        %3040 = vmatprep.subr.mxu0 %v1633
        %3041 = vmatpush1.msra.mxu0 %v1632
        %3042 = vmatprep.subr.mxu0 %v1640
        %3043 = vmatpush1.msra.mxu0 %v1639
        %3044 = vmatprep.subr.mxu0 %v1647
        %3045 = vmatpush1.msra.mxu0 %v1646
        %3046 = vmatprep.subr.mxu0 %v1654
        %3047 = vmatpush1.msra.mxu0 %v1653
        %3048 = vmatprep.subr.mxu0 %v1661
        %3049 = vmatpush1.msra.mxu0 %v1660
        %3050 = vmatprep.subr.mxu0 %v1668
        %3051 = vmatpush1.msra.mxu0 %v1667
        %3052 = vmatprep.subr.mxu0 %v1675
        %3053 = vmatpush1.msra.mxu0 %v1674
        %3054 = vmatprep.subr.mxu0 %v1682
        %3055 = vmatpush1.msra.mxu0 %v1681
        %3056 = vmatprep.subr.mxu0 %v1689
        %3057 = vmatpush1.msra.mxu0 %v1688
        %3058 = vmatprep.subr.mxu0 %v1696
        %3059 = vmatpush1.msra.mxu0 %v1695
        %3060 = vmatprep.subr.mxu0 %v1703
        %3061 = vmatpush1.msra.mxu0 %v1702
        %3062 = vmatprep.subr.mxu0 %v1710
        %3063 = vmatpush1.msra.mxu0 %v1709
        %3064 = vmatprep.subr.mxu0 %v1717
        %3065 = vmatpush1.msra.mxu0 %v1716
        %3066 = vmatprep.subr.mxu0 %v1724
        %3067 = vmatpush1.msra.mxu0 %v1723
        %3068 = vmatprep.subr.mxu0 %v1731
        %3069 = vmatpush1.msra.mxu0 %v1730
        %3070 = vmatprep.subr.mxu0 %v1738
        %3071 = vmatpush1.msra.mxu0 %v1737
        %3072 = vmatprep.mubr.f32.mxu0 %v1286
        %3073 = vmatmul.mubr.f32.gmra.mrb[0].mxu0 %v1285
        %v3074 = vpop.f32.mrb[0].mxu0
        %v3075 = vadd.f32 %v3004, %v3074
        %v3076 = vpop.f32.mrb[0].mxu0
        %v3077 = vadd.f32 %v3006, %v3076
        %3078 = vdwg.mxu0
        %3079 = vmatprep.subr.mxu0 %v1745
        %3080 = vmatpush1.msra.mxu0 %v1744
        %3081 = vmatprep.subr.mxu0 %v1752
        %3082 = vmatpush1.msra.mxu0 %v1751
        %3083 = vmatprep.subr.mxu0 %v1759
        %3084 = vmatpush1.msra.mxu0 %v1758
        %3085 = vmatprep.subr.mxu0 %v1766
        %3086 = vmatpush1.msra.mxu0 %v1765
        %3087 = vmatprep.subr.mxu0 %v1773
        %3088 = vmatpush1.msra.mxu0 %v1772
        %3089 = vmatprep.subr.mxu0 %v1780
        %3090 = vmatpush1.msra.mxu0 %v1779
        %3091 = vmatprep.subr.mxu0 %v1787
        %3092 = vmatpush1.msra.mxu0 %v1786
        %3093 = vmatprep.subr.mxu0 %v1794
        %3094 = vmatpush1.msra.mxu0 %v1793
        %3095 = vmatprep.subr.mxu0 %v1801
        %3096 = vmatpush1.msra.mxu0 %v1800
        %3097 = vmatprep.subr.mxu0 %v1808
        %3098 = vmatpush1.msra.mxu0 %v1807
        %3099 = vmatprep.subr.mxu0 %v1815
        %3100 = vmatpush1.msra.mxu0 %v1814
        %3101 = vmatprep.subr.mxu0 %v1822
        %3102 = vmatpush1.msra.mxu0 %v1821
        %3103 = vmatprep.subr.mxu0 %v1829
        %3104 = vmatpush1.msra.mxu0 %v1828
        %3105 = vmatprep.subr.mxu0 %v1836
        %3106 = vmatpush1.msra.mxu0 %v1835
        %3107 = vmatprep.subr.mxu0 %v1843
        %3108 = vmatpush1.msra.mxu0 %v1842
        %3109 = vmatprep.subr.mxu0 %v1850
        %3110 = vmatpush1.msra.mxu0 %v1849
        %3111 = vmatprep.subr.mxu0 %v1857
        %3112 = vmatpush1.msra.mxu0 %v1856
        %3113 = vmatprep.subr.mxu0 %v1864
        %3114 = vmatpush1.msra.mxu0 %v1863
        %3115 = vmatprep.subr.mxu0 %v1871
        %3116 = vmatpush1.msra.mxu0 %v1870
        %3117 = vmatprep.subr.mxu0 %v1878
        %3118 = vmatpush1.msra.mxu0 %v1877
        %3119 = vmatprep.subr.mxu0 %v1885
        %3120 = vmatpush1.msra.mxu0 %v1884
        %3121 = vmatprep.subr.mxu0 %v1892
        %3122 = vmatpush1.msra.mxu0 %v1891
        %3123 = vmatprep.subr.mxu0 %v1899
        %3124 = vmatpush1.msra.mxu0 %v1898
        %3125 = vmatprep.subr.mxu0 %v1906
        %3126 = vmatpush1.msra.mxu0 %v1905
        %3127 = vmatprep.subr.mxu0 %v1913
        %3128 = vmatpush1.msra.mxu0 %v1912
        %3129 = vmatprep.subr.mxu0 %v1920
        %3130 = vmatpush1.msra.mxu0 %v1919
        %3131 = vmatprep.subr.mxu0 %v1927
        %3132 = vmatpush1.msra.mxu0 %v1926
        %3133 = vmatprep.subr.mxu0 %v1934
        %3134 = vmatpush1.msra.mxu0 %v1933
        %3135 = vmatprep.subr.mxu0 %v1941
        %3136 = vmatpush1.msra.mxu0 %v1940
        %3137 = vmatprep.subr.mxu0 %v1948
        %3138 = vmatpush1.msra.mxu0 %v1947
        %3139 = vmatprep.subr.mxu0 %v1955
        %3140 = vmatpush1.msra.mxu0 %v1954
        %3141 = vmatprep.subr.mxu0 %v1962
        %3142 = vmatpush1.msra.mxu0 %v1961
        %3143 = vmatprep.mubr.f32.mxu0 %v1288
        %3144 = vmatmul.mubr.f32.gmra.mrb[0].mxu0 %v1287
        %v3145 = vpop.f32.mrb[0].mxu0
        %v3146 = vadd.f32 %v3075, %v3145
        %v3147 = vpop.f32.mrb[0].mxu0
        %v3148 = vadd.f32 %v3077, %v3147
        %3149 = vdwg.mxu0
        %3150 = vmatprep.subr.mxu0 %v1969
        %3151 = vmatpush1.msra.mxu0 %v1968
        %3152 = vmatprep.subr.mxu0 %v1976
        %3153 = vmatpush1.msra.mxu0 %v1975
        %3154 = vmatprep.subr.mxu0 %v1983
        %3155 = vmatpush1.msra.mxu0 %v1982
        %3156 = vmatprep.subr.mxu0 %v1990
        %3157 = vmatpush1.msra.mxu0 %v1989
        %3158 = vmatprep.subr.mxu0 %v1997
        %3159 = vmatpush1.msra.mxu0 %v1996
        %3160 = vmatprep.subr.mxu0 %v2004
        %3161 = vmatpush1.msra.mxu0 %v2003
        %3162 = vmatprep.subr.mxu0 %v2011
        %3163 = vmatpush1.msra.mxu0 %v2010
        %3164 = vmatprep.subr.mxu0 %v2018
        %3165 = vmatpush1.msra.mxu0 %v2017
        %3166 = vmatprep.subr.mxu0 %v2025
        %3167 = vmatpush1.msra.mxu0 %v2024
        %3168 = vmatprep.subr.mxu0 %v2032
        %3169 = vmatpush1.msra.mxu0 %v2031
        %3170 = vmatprep.subr.mxu0 %v2039
        %3171 = vmatpush1.msra.mxu0 %v2038
        %3172 = vmatprep.subr.mxu0 %v2046
        %3173 = vmatpush1.msra.mxu0 %v2045
        %3174 = vmatprep.subr.mxu0 %v2053
        %3175 = vmatpush1.msra.mxu0 %v2052
        %3176 = vmatprep.subr.mxu0 %v2060
        %3177 = vmatpush1.msra.mxu0 %v2059
        %3178 = vmatprep.subr.mxu0 %v2067
        %3179 = vmatpush1.msra.mxu0 %v2066
        %3180 = vmatprep.subr.mxu0 %v2074
        %3181 = vmatpush1.msra.mxu0 %v2073
        %3182 = vmatprep.subr.mxu0 %v2081
        %3183 = vmatpush1.msra.mxu0 %v2080
        %3184 = vmatprep.subr.mxu0 %v2088
        %3185 = vmatpush1.msra.mxu0 %v2087
        %3186 = vmatprep.subr.mxu0 %v2095
        %3187 = vmatpush1.msra.mxu0 %v2094
        %3188 = vmatprep.subr.mxu0 %v2102
        %3189 = vmatpush1.msra.mxu0 %v2101
        %3190 = vmatprep.subr.mxu0 %v2109
        %3191 = vmatpush1.msra.mxu0 %v2108
        %3192 = vmatprep.subr.mxu0 %v2116
        %3193 = vmatpush1.msra.mxu0 %v2115
        %3194 = vmatprep.subr.mxu0 %v2123
        %3195 = vmatpush1.msra.mxu0 %v2122
        %3196 = vmatprep.subr.mxu0 %v2130
        %3197 = vmatpush1.msra.mxu0 %v2129
        %3198 = vmatprep.subr.mxu0 %v2137
        %3199 = vmatpush1.msra.mxu0 %v2136
        %3200 = vmatprep.subr.mxu0 %v2144
        %3201 = vmatpush1.msra.mxu0 %v2143
        %3202 = vmatprep.subr.mxu0 %v2151
        %3203 = vmatpush1.msra.mxu0 %v2150
        %3204 = vmatprep.subr.mxu0 %v2158
        %3205 = vmatpush1.msra.mxu0 %v2157
        %3206 = vmatprep.subr.mxu0 %v2165
        %3207 = vmatpush1.msra.mxu0 %v2164
        %3208 = vmatprep.subr.mxu0 %v2172
        %3209 = vmatpush1.msra.mxu0 %v2171
        %3210 = vmatprep.subr.mxu0 %v2179
        %3211 = vmatpush1.msra.mxu0 %v2178
        %3212 = vmatprep.subr.mxu0 %v2186
        %3213 = vmatpush1.msra.mxu0 %v2185
        %3214 = vmatprep.mubr.f32.mxu0 %v1290
        %3215 = vmatmul.mubr.f32.gmra.mrb[0].mxu0 %v1289
        %v3216 = vpop.f32.mrb[0].mxu0
        %v3217 = vadd.f32 %v3146, %v3216
        %v3218 = vpop.f32.mrb[0].mxu0
        %v3219 = vadd.f32 %v3148, %v3218
        %3220 = vdwg.mxu0
        %3221 = vmatprep.subr.mxu0 %v2193
        %3222 = vmatpush1.msra.mxu0 %v2192
        %3223 = vmatprep.subr.mxu0 %v2200
        %3224 = vmatpush1.msra.mxu0 %v2199
        %3225 = vmatprep.subr.mxu0 %v2207
        %3226 = vmatpush1.msra.mxu0 %v2206
        %3227 = vmatprep.subr.mxu0 %v2214
        %3228 = vmatpush1.msra.mxu0 %v2213
        %3229 = vmatprep.subr.mxu0 %v2221
        %3230 = vmatpush1.msra.mxu0 %v2220
        %3231 = vmatprep.subr.mxu0 %v2228
        %3232 = vmatpush1.msra.mxu0 %v2227
        %3233 = vmatprep.subr.mxu0 %v2235
        %3234 = vmatpush1.msra.mxu0 %v2234
        %3235 = vmatprep.subr.mxu0 %v2242
        %3236 = vmatpush1.msra.mxu0 %v2241
        %3237 = vmatprep.subr.mxu0 %v2249
        %3238 = vmatpush1.msra.mxu0 %v2248
        %3239 = vmatprep.subr.mxu0 %v2256
        %3240 = vmatpush1.msra.mxu0 %v2255
        %3241 = vmatprep.subr.mxu0 %v2263
        %3242 = vmatpush1.msra.mxu0 %v2262
        %3243 = vmatprep.subr.mxu0 %v2270
        %3244 = vmatpush1.msra.mxu0 %v2269
        %3245 = vmatprep.subr.mxu0 %v2277
        %3246 = vmatpush1.msra.mxu0 %v2276
        %3247 = vmatprep.subr.mxu0 %v2284
        %3248 = vmatpush1.msra.mxu0 %v2283
        %3249 = vmatprep.subr.mxu0 %v2291
        %3250 = vmatpush1.msra.mxu0 %v2290
        %3251 = vmatprep.subr.mxu0 %v2298
        %3252 = vmatpush1.msra.mxu0 %v2297
        %3253 = vmatprep.subr.mxu0 %v2305
        %3254 = vmatpush1.msra.mxu0 %v2304
        %3255 = vmatprep.subr.mxu0 %v2312
        %3256 = vmatpush1.msra.mxu0 %v2311
        %3257 = vmatprep.subr.mxu0 %v2319
        %3258 = vmatpush1.msra.mxu0 %v2318
        %3259 = vmatprep.subr.mxu0 %v2326
        %3260 = vmatpush1.msra.mxu0 %v2325
        %3261 = vmatprep.subr.mxu0 %v2333
        %3262 = vmatpush1.msra.mxu0 %v2332
        %3263 = vmatprep.subr.mxu0 %v2340
        %3264 = vmatpush1.msra.mxu0 %v2339
        %3265 = vmatprep.subr.mxu0 %v2347
        %3266 = vmatpush1.msra.mxu0 %v2346
        %3267 = vmatprep.subr.mxu0 %v2354
        %3268 = vmatpush1.msra.mxu0 %v2353
        %3269 = vmatprep.subr.mxu0 %v2361
        %3270 = vmatpush1.msra.mxu0 %v2360
        %3271 = vmatprep.subr.mxu0 %v2368
        %3272 = vmatpush1.msra.mxu0 %v2367
        %3273 = vmatprep.subr.mxu0 %v2375
        %3274 = vmatpush1.msra.mxu0 %v2374
        %3275 = vmatprep.subr.mxu0 %v2382
        %3276 = vmatpush1.msra.mxu0 %v2381
        %3277 = vmatprep.subr.mxu0 %v2389
        %3278 = vmatpush1.msra.mxu0 %v2388
        %3279 = vmatprep.subr.mxu0 %v2396
        %3280 = vmatpush1.msra.mxu0 %v2395
        %3281 = vmatprep.subr.mxu0 %v2403
        %3282 = vmatpush1.msra.mxu0 %v2402
        %3283 = vmatprep.subr.mxu0 %v2410
        %3284 = vmatpush1.msra.mxu0 %v2409
        %3285 = vmatprep.mubr.f32.mxu0 %v1292
        %3286 = vmatmul.mubr.f32.gmra.mrb[0].mxu0 %v1291
        %v3287 = vpop.f32.mrb[0].mxu0
        %v3288 = vadd.f32 %v3217, %v3287
        %v3289 = vpop.f32.mrb[0].mxu0
        %v3290 = vadd.f32 %v3219, %v3289
        %3291 = vdwg.mxu0
        %3292 = vmatprep.subr.mxu0 %v2417
        %3293 = vmatpush1.msra.mxu0 %v2416
        %3294 = vmatprep.subr.mxu0 %v2424
        %3295 = vmatpush1.msra.mxu0 %v2423
        %3296 = vmatprep.subr.mxu0 %v2431
        %3297 = vmatpush1.msra.mxu0 %v2430
        %3298 = vmatprep.subr.mxu0 %v2438
        %3299 = vmatpush1.msra.mxu0 %v2437
        %3300 = vmatprep.subr.mxu0 %v2445
        %3301 = vmatpush1.msra.mxu0 %v2444
        %3302 = vmatprep.subr.mxu0 %v2452
        %3303 = vmatpush1.msra.mxu0 %v2451
        %3304 = vmatprep.subr.mxu0 %v2459
        %3305 = vmatpush1.msra.mxu0 %v2458
        %3306 = vmatprep.subr.mxu0 %v2466
        %3307 = vmatpush1.msra.mxu0 %v2465
        %3308 = vmatprep.subr.mxu0 0.0
        %3309 = vmatpush1.msra.mxu0 0.0
        %3310 = vmatprep.subr.mxu0 0.0
        %3311 = vmatpush1.msra.mxu0 0.0
        %3312 = vmatprep.subr.mxu0 0.0
        %3313 = vmatpush1.msra.mxu0 0.0
        %3314 = vmatprep.subr.mxu0 0.0
        %3315 = vmatpush1.msra.mxu0 0.0
        %3316 = vmatprep.subr.mxu0 0.0
        %3317 = vmatpush1.msra.mxu0 0.0
        %3318 = vmatprep.subr.mxu0 0.0
        %3319 = vmatpush1.msra.mxu0 0.0
        %3320 = vmatprep.subr.mxu0 0.0
        %3321 = vmatpush1.msra.mxu0 0.0
        %3322 = vmatprep.subr.mxu0 0.0
        %3323 = vmatpush1.msra.mxu0 0.0
        %3324 = vmatprep.subr.mxu0 0.0
        %3325 = vmatpush1.msra.mxu0 0.0
        %3326 = vmatprep.subr.mxu0 0.0
        %3327 = vmatpush1.msra.mxu0 0.0
        %3328 = vmatprep.subr.mxu0 0.0
        %3329 = vmatpush1.msra.mxu0 0.0
        %3330 = vmatprep.subr.mxu0 0.0
        %3331 = vmatpush1.msra.mxu0 0.0
        %3332 = vmatprep.subr.mxu0 0.0
        %3333 = vmatpush1.msra.mxu0 0.0
        %3334 = vmatprep.subr.mxu0 0.0
        %3335 = vmatpush1.msra.mxu0 0.0
        %3336 = vmatprep.subr.mxu0 0.0
        %3337 = vmatpush1.msra.mxu0 0.0
        %3338 = vmatprep.subr.mxu0 0.0
        %3339 = vmatpush1.msra.mxu0 0.0
        %3340 = vmatprep.subr.mxu0 0.0
        %3341 = vmatpush1.msra.mxu0 0.0
        %3342 = vmatprep.subr.mxu0 0.0
        %3343 = vmatpush1.msra.mxu0 0.0
        %3344 = vmatprep.subr.mxu0 0.0
        %3345 = vmatpush1.msra.mxu0 0.0
        %3346 = vmatprep.subr.mxu0 0.0
        %3347 = vmatpush1.msra.mxu0 0.0
        %3348 = vmatprep.subr.mxu0 0.0
        %3349 = vmatpush1.msra.mxu0 0.0
        %3350 = vmatprep.subr.mxu0 0.0
        %3351 = vmatpush1.msra.mxu0 0.0
        %3352 = vmatprep.subr.mxu0 0.0
        %3353 = vmatpush1.msra.mxu0 0.0
        %3354 = vmatprep.subr.mxu0 0.0
        %3355 = vmatpush1.msra.mxu0 0.0
        %3356 = vmatprep.mubr.f32.mxu0 0.0
        %3357 = vmatmul.mubr.f32.gmra.mrb[0].mxu0 %v2509
        %v3358 = vpop.f32.mrb[0].mxu0
        %v3359 = vadd.f32 %v3288, %v3358
        %v3360 = vpop.f32.mrb[0].mxu0
        %v3361 = vadd.f32 %v3290, %v3360
        %3362 = vdwg.mxu0
        %3363 = vmatprep.subr.mxu0 %v1299
        %3364 = vmatpush1.msra.mxu0 %v1298
        %3365 = vmatprep.subr.mxu0 %v1306
        %3366 = vmatpush1.msra.mxu0 %v1305
        %3367 = vmatprep.subr.mxu0 %v1313
        %3368 = vmatpush1.msra.mxu0 %v1312
        %3369 = vmatprep.subr.mxu0 %v1320
        %3370 = vmatpush1.msra.mxu0 %v1319
        %3371 = vmatprep.subr.mxu0 %v1327
        %3372 = vmatpush1.msra.mxu0 %v1326
        %3373 = vmatprep.subr.mxu0 %v1334
        %3374 = vmatpush1.msra.mxu0 %v1333
        %3375 = vmatprep.subr.mxu0 %v1341
        %3376 = vmatpush1.msra.mxu0 %v1340
        %3377 = vmatprep.subr.mxu0 %v1348
        %3378 = vmatpush1.msra.mxu0 %v1347
        %3379 = vmatprep.subr.mxu0 %v1355
        %3380 = vmatpush1.msra.mxu0 %v1354
        %3381 = vmatprep.subr.mxu0 %v1362
        %3382 = vmatpush1.msra.mxu0 %v1361
        %3383 = vmatprep.subr.mxu0 %v1369
        %3384 = vmatpush1.msra.mxu0 %v1368
        %3385 = vmatprep.subr.mxu0 %v1376
        %3386 = vmatpush1.msra.mxu0 %v1375
        %3387 = vmatprep.subr.mxu0 %v1383
        %3388 = vmatpush1.msra.mxu0 %v1382
        %3389 = vmatprep.subr.mxu0 %v1390
        %3390 = vmatpush1.msra.mxu0 %v1389
        %3391 = vmatprep.subr.mxu0 %v1397
        %3392 = vmatpush1.msra.mxu0 %v1396
        %3393 = vmatprep.subr.mxu0 %v1404
        %3394 = vmatpush1.msra.mxu0 %v1403
        %3395 = vmatprep.subr.mxu0 %v1411
        %3396 = vmatpush1.msra.mxu0 %v1410
        %3397 = vmatprep.subr.mxu0 %v1418
        %3398 = vmatpush1.msra.mxu0 %v1417
        %3399 = vmatprep.subr.mxu0 %v1425
        %3400 = vmatpush1.msra.mxu0 %v1424
        %3401 = vmatprep.subr.mxu0 %v1432
        %3402 = vmatpush1.msra.mxu0 %v1431
        %3403 = vmatprep.subr.mxu0 %v1439
        %3404 = vmatpush1.msra.mxu0 %v1438
        %3405 = vmatprep.subr.mxu0 %v1446
        %3406 = vmatpush1.msra.mxu0 %v1445
        %3407 = vmatprep.subr.mxu0 %v1453
        %3408 = vmatpush1.msra.mxu0 %v1452
        %3409 = vmatprep.subr.mxu0 %v1460
        %3410 = vmatpush1.msra.mxu0 %v1459
        %3411 = vmatprep.subr.mxu0 %v1467
        %3412 = vmatpush1.msra.mxu0 %v1466
        %3413 = vmatprep.subr.mxu0 %v1474
        %3414 = vmatpush1.msra.mxu0 %v1473
        %3415 = vmatprep.subr.mxu0 %v1481
        %3416 = vmatpush1.msra.mxu0 %v1480
        %3417 = vmatprep.subr.mxu0 %v1488
        %3418 = vmatpush1.msra.mxu0 %v1487
        %3419 = vmatprep.subr.mxu0 %v1495
        %3420 = vmatpush1.msra.mxu0 %v1494
        %3421 = vmatprep.subr.mxu0 %v1502
        %3422 = vmatpush1.msra.mxu0 %v1501
        %3423 = vmatprep.subr.mxu0 %v1509
        %3424 = vmatpush1.msra.mxu0 %v1508
        %3425 = vmatprep.subr.mxu0 %v1516
        %3426 = vmatpush1.msra.mxu0 %v1515
        %3427 = vmatprep.mubr.f32.mxu0 %v1284
        %3428 = vmatmul.mubr.f32.gmra.mrb[0].mxu0 %v1283
        %v3429 = vpop.f32.mrb[0].mxu0
        %v3430 = vadd.f32 %v2491, %v3429
        %v3431 = vpop.f32.mrb[0].mxu0
        %v3432 = vadd.f32 %v2495, %v3431
        %3433 = vdwg.mxu0
        %3434 = vmatprep.subr.mxu0 %v1523
        %3435 = vmatpush1.msra.mxu0 %v1522
        %3436 = vmatprep.subr.mxu0 %v1530
        %3437 = vmatpush1.msra.mxu0 %v1529
        %3438 = vmatprep.subr.mxu0 %v1537
        %3439 = vmatpush1.msra.mxu0 %v1536
        %3440 = vmatprep.subr.mxu0 %v1544
        %3441 = vmatpush1.msra.mxu0 %v1543
        %3442 = vmatprep.subr.mxu0 %v1551
        %3443 = vmatpush1.msra.mxu0 %v1550
        %3444 = vmatprep.subr.mxu0 %v1558
        %3445 = vmatpush1.msra.mxu0 %v1557
        %3446 = vmatprep.subr.mxu0 %v1565
        %3447 = vmatpush1.msra.mxu0 %v1564
        %3448 = vmatprep.subr.mxu0 %v1572
        %3449 = vmatpush1.msra.mxu0 %v1571
        %3450 = vmatprep.subr.mxu0 %v1579
        %3451 = vmatpush1.msra.mxu0 %v1578
        %3452 = vmatprep.subr.mxu0 %v1586
        %3453 = vmatpush1.msra.mxu0 %v1585
        %3454 = vmatprep.subr.mxu0 %v1593
        %3455 = vmatpush1.msra.mxu0 %v1592
        %3456 = vmatprep.subr.mxu0 %v1600
        %3457 = vmatpush1.msra.mxu0 %v1599
        %3458 = vmatprep.subr.mxu0 %v1607
        %3459 = vmatpush1.msra.mxu0 %v1606
        %3460 = vmatprep.subr.mxu0 %v1614
        %3461 = vmatpush1.msra.mxu0 %v1613
        %3462 = vmatprep.subr.mxu0 %v1621
        %3463 = vmatpush1.msra.mxu0 %v1620
        %3464 = vmatprep.subr.mxu0 %v1628
        %3465 = vmatpush1.msra.mxu0 %v1627
        %3466 = vmatprep.subr.mxu0 %v1635
        %3467 = vmatpush1.msra.mxu0 %v1634
        %3468 = vmatprep.subr.mxu0 %v1642
        %3469 = vmatpush1.msra.mxu0 %v1641
        %3470 = vmatprep.subr.mxu0 %v1649
        %3471 = vmatpush1.msra.mxu0 %v1648
        %3472 = vmatprep.subr.mxu0 %v1656
        %3473 = vmatpush1.msra.mxu0 %v1655
        %3474 = vmatprep.subr.mxu0 %v1663
        %3475 = vmatpush1.msra.mxu0 %v1662
        %3476 = vmatprep.subr.mxu0 %v1670
        %3477 = vmatpush1.msra.mxu0 %v1669
        %3478 = vmatprep.subr.mxu0 %v1677
        %3479 = vmatpush1.msra.mxu0 %v1676
        %3480 = vmatprep.subr.mxu0 %v1684
        %3481 = vmatpush1.msra.mxu0 %v1683
        %3482 = vmatprep.subr.mxu0 %v1691
        %3483 = vmatpush1.msra.mxu0 %v1690
        %3484 = vmatprep.subr.mxu0 %v1698
        %3485 = vmatpush1.msra.mxu0 %v1697
        %3486 = vmatprep.subr.mxu0 %v1705
        %3487 = vmatpush1.msra.mxu0 %v1704
        %3488 = vmatprep.subr.mxu0 %v1712
        %3489 = vmatpush1.msra.mxu0 %v1711
        %3490 = vmatprep.subr.mxu0 %v1719
        %3491 = vmatpush1.msra.mxu0 %v1718
        %3492 = vmatprep.subr.mxu0 %v1726
        %3493 = vmatpush1.msra.mxu0 %v1725
        %3494 = vmatprep.subr.mxu0 %v1733
        %3495 = vmatpush1.msra.mxu0 %v1732
        %3496 = vmatprep.subr.mxu0 %v1740
        %3497 = vmatpush1.msra.mxu0 %v1739
        %3498 = vmatprep.mubr.f32.mxu0 %v1286
        %3499 = vmatmul.mubr.f32.gmra.mrb[0].mxu0 %v1285
        %v3500 = vpop.f32.mrb[0].mxu0
        %v3501 = vadd.f32 %v3430, %v3500
        %v3502 = vpop.f32.mrb[0].mxu0
        %v3503 = vadd.f32 %v3432, %v3502
        %3504 = vdwg.mxu0
        %3505 = vmatprep.subr.mxu0 %v1747
        %3506 = vmatpush1.msra.mxu0 %v1746
        %3507 = vmatprep.subr.mxu0 %v1754
        %3508 = vmatpush1.msra.mxu0 %v1753
        %3509 = vmatprep.subr.mxu0 %v1761
        %3510 = vmatpush1.msra.mxu0 %v1760
        %3511 = vmatprep.subr.mxu0 %v1768
        %3512 = vmatpush1.msra.mxu0 %v1767
        %3513 = vmatprep.subr.mxu0 %v1775
        %3514 = vmatpush1.msra.mxu0 %v1774
        %3515 = vmatprep.subr.mxu0 %v1782
        %3516 = vmatpush1.msra.mxu0 %v1781
        %3517 = vmatprep.subr.mxu0 %v1789
        %3518 = vmatpush1.msra.mxu0 %v1788
        %3519 = vmatprep.subr.mxu0 %v1796
        %3520 = vmatpush1.msra.mxu0 %v1795
        %3521 = vmatprep.subr.mxu0 %v1803
        %3522 = vmatpush1.msra.mxu0 %v1802
        %3523 = vmatprep.subr.mxu0 %v1810
        %3524 = vmatpush1.msra.mxu0 %v1809
        %3525 = vmatprep.subr.mxu0 %v1817
        %3526 = vmatpush1.msra.mxu0 %v1816
        %3527 = vmatprep.subr.mxu0 %v1824
        %3528 = vmatpush1.msra.mxu0 %v1823
        %3529 = vmatprep.subr.mxu0 %v1831
        %3530 = vmatpush1.msra.mxu0 %v1830
        %3531 = vmatprep.subr.mxu0 %v1838
        %3532 = vmatpush1.msra.mxu0 %v1837
        %3533 = vmatprep.subr.mxu0 %v1845
        %3534 = vmatpush1.msra.mxu0 %v1844
        %3535 = vmatprep.subr.mxu0 %v1852
        %3536 = vmatpush1.msra.mxu0 %v1851
        %3537 = vmatprep.subr.mxu0 %v1859
        %3538 = vmatpush1.msra.mxu0 %v1858
        %3539 = vmatprep.subr.mxu0 %v1866
        %3540 = vmatpush1.msra.mxu0 %v1865
        %3541 = vmatprep.subr.mxu0 %v1873
        %3542 = vmatpush1.msra.mxu0 %v1872
        %3543 = vmatprep.subr.mxu0 %v1880
        %3544 = vmatpush1.msra.mxu0 %v1879
        %3545 = vmatprep.subr.mxu0 %v1887
        %3546 = vmatpush1.msra.mxu0 %v1886
        %3547 = vmatprep.subr.mxu0 %v1894
        %3548 = vmatpush1.msra.mxu0 %v1893
        %3549 = vmatprep.subr.mxu0 %v1901
        %3550 = vmatpush1.msra.mxu0 %v1900
        %3551 = vmatprep.subr.mxu0 %v1908
        %3552 = vmatpush1.msra.mxu0 %v1907
        %3553 = vmatprep.subr.mxu0 %v1915
        %3554 = vmatpush1.msra.mxu0 %v1914
        %3555 = vmatprep.subr.mxu0 %v1922
        %3556 = vmatpush1.msra.mxu0 %v1921
        %3557 = vmatprep.subr.mxu0 %v1929
        %3558 = vmatpush1.msra.mxu0 %v1928
        %3559 = vmatprep.subr.mxu0 %v1936
        %3560 = vmatpush1.msra.mxu0 %v1935
        %3561 = vmatprep.subr.mxu0 %v1943
        %3562 = vmatpush1.msra.mxu0 %v1942
        %3563 = vmatprep.subr.mxu0 %v1950
        %3564 = vmatpush1.msra.mxu0 %v1949
        %3565 = vmatprep.subr.mxu0 %v1957
        %3566 = vmatpush1.msra.mxu0 %v1956
        %3567 = vmatprep.subr.mxu0 %v1964
        %3568 = vmatpush1.msra.mxu0 %v1963
        %3569 = vmatprep.mubr.f32.mxu0 %v1288
        %3570 = vmatmul.mubr.f32.gmra.mrb[0].mxu0 %v1287
        %v3571 = vpop.f32.mrb[0].mxu0
        %v3572 = vadd.f32 %v3501, %v3571
        %v3573 = vpop.f32.mrb[0].mxu0
        %v3574 = vadd.f32 %v3503, %v3573
        %3575 = vdwg.mxu0
        %3576 = vmatprep.subr.mxu0 %v1971
        %3577 = vmatpush1.msra.mxu0 %v1970
        %3578 = vmatprep.subr.mxu0 %v1978
        %3579 = vmatpush1.msra.mxu0 %v1977
        %3580 = vmatprep.subr.mxu0 %v1985
        %3581 = vmatpush1.msra.mxu0 %v1984
        %3582 = vmatprep.subr.mxu0 %v1992
        %3583 = vmatpush1.msra.mxu0 %v1991
        %3584 = vmatprep.subr.mxu0 %v1999
        %3585 = vmatpush1.msra.mxu0 %v1998
        %3586 = vmatprep.subr.mxu0 %v2006
        %3587 = vmatpush1.msra.mxu0 %v2005
        %3588 = vmatprep.subr.mxu0 %v2013
        %3589 = vmatpush1.msra.mxu0 %v2012
        %3590 = vmatprep.subr.mxu0 %v2020
        %3591 = vmatpush1.msra.mxu0 %v2019
        %3592 = vmatprep.subr.mxu0 %v2027
        %3593 = vmatpush1.msra.mxu0 %v2026
        %3594 = vmatprep.subr.mxu0 %v2034
        %3595 = vmatpush1.msra.mxu0 %v2033
        %3596 = vmatprep.subr.mxu0 %v2041
        %3597 = vmatpush1.msra.mxu0 %v2040
        %3598 = vmatprep.subr.mxu0 %v2048
        %3599 = vmatpush1.msra.mxu0 %v2047
        %3600 = vmatprep.subr.mxu0 %v2055
        %3601 = vmatpush1.msra.mxu0 %v2054
        %3602 = vmatprep.subr.mxu0 %v2062
        %3603 = vmatpush1.msra.mxu0 %v2061
        %3604 = vmatprep.subr.mxu0 %v2069
        %3605 = vmatpush1.msra.mxu0 %v2068
        %3606 = vmatprep.subr.mxu0 %v2076
        %3607 = vmatpush1.msra.mxu0 %v2075
        %3608 = vmatprep.subr.mxu0 %v2083
        %3609 = vmatpush1.msra.mxu0 %v2082
        %3610 = vmatprep.subr.mxu0 %v2090
        %3611 = vmatpush1.msra.mxu0 %v2089
        %3612 = vmatprep.subr.mxu0 %v2097
        %3613 = vmatpush1.msra.mxu0 %v2096
        %3614 = vmatprep.subr.mxu0 %v2104
        %3615 = vmatpush1.msra.mxu0 %v2103
        %3616 = vmatprep.subr.mxu0 %v2111
        %3617 = vmatpush1.msra.mxu0 %v2110
        %3618 = vmatprep.subr.mxu0 %v2118
        %3619 = vmatpush1.msra.mxu0 %v2117
        %3620 = vmatprep.subr.mxu0 %v2125
        %3621 = vmatpush1.msra.mxu0 %v2124
        %3622 = vmatprep.subr.mxu0 %v2132
        %3623 = vmatpush1.msra.mxu0 %v2131
        %3624 = vmatprep.subr.mxu0 %v2139
        %3625 = vmatpush1.msra.mxu0 %v2138
        %3626 = vmatprep.subr.mxu0 %v2146
        %3627 = vmatpush1.msra.mxu0 %v2145
        %3628 = vmatprep.subr.mxu0 %v2153
        %3629 = vmatpush1.msra.mxu0 %v2152
        %3630 = vmatprep.subr.mxu0 %v2160
        %3631 = vmatpush1.msra.mxu0 %v2159
        %3632 = vmatprep.subr.mxu0 %v2167
        %3633 = vmatpush1.msra.mxu0 %v2166
        %3634 = vmatprep.subr.mxu0 %v2174
        %3635 = vmatpush1.msra.mxu0 %v2173
        %3636 = vmatprep.subr.mxu0 %v2181
        %3637 = vmatpush1.msra.mxu0 %v2180
        %3638 = vmatprep.subr.mxu0 %v2188
        %3639 = vmatpush1.msra.mxu0 %v2187
        %3640 = vmatprep.mubr.f32.mxu0 %v1290
        %3641 = vmatmul.mubr.f32.gmra.mrb[0].mxu0 %v1289
        %v3642 = vpop.f32.mrb[0].mxu0
        %v3643 = vadd.f32 %v3572, %v3642
        %v3644 = vpop.f32.mrb[0].mxu0
        %v3645 = vadd.f32 %v3574, %v3644
        %3646 = vdwg.mxu0
        %3647 = vmatprep.subr.mxu0 %v2195
        %3648 = vmatpush1.msra.mxu0 %v2194
        %3649 = vmatprep.subr.mxu0 %v2202
        %3650 = vmatpush1.msra.mxu0 %v2201
        %3651 = vmatprep.subr.mxu0 %v2209
        %3652 = vmatpush1.msra.mxu0 %v2208
        %3653 = vmatprep.subr.mxu0 %v2216
        %3654 = vmatpush1.msra.mxu0 %v2215
        %3655 = vmatprep.subr.mxu0 %v2223
        %3656 = vmatpush1.msra.mxu0 %v2222
        %3657 = vmatprep.subr.mxu0 %v2230
        %3658 = vmatpush1.msra.mxu0 %v2229
        %3659 = vmatprep.subr.mxu0 %v2237
        %3660 = vmatpush1.msra.mxu0 %v2236
        %3661 = vmatprep.subr.mxu0 %v2244
        %3662 = vmatpush1.msra.mxu0 %v2243
        %3663 = vmatprep.subr.mxu0 %v2251
        %3664 = vmatpush1.msra.mxu0 %v2250
        %3665 = vmatprep.subr.mxu0 %v2258
        %3666 = vmatpush1.msra.mxu0 %v2257
        %3667 = vmatprep.subr.mxu0 %v2265
        %3668 = vmatpush1.msra.mxu0 %v2264
        %3669 = vmatprep.subr.mxu0 %v2272
        %3670 = vmatpush1.msra.mxu0 %v2271
        %3671 = vmatprep.subr.mxu0 %v2279
        %3672 = vmatpush1.msra.mxu0 %v2278
        %3673 = vmatprep.subr.mxu0 %v2286
        %3674 = vmatpush1.msra.mxu0 %v2285
        %3675 = vmatprep.subr.mxu0 %v2293
        %3676 = vmatpush1.msra.mxu0 %v2292
        %3677 = vmatprep.subr.mxu0 %v2300
        %3678 = vmatpush1.msra.mxu0 %v2299
        %3679 = vmatprep.subr.mxu0 %v2307
        %3680 = vmatpush1.msra.mxu0 %v2306
        %3681 = vmatprep.subr.mxu0 %v2314
        %3682 = vmatpush1.msra.mxu0 %v2313
        %3683 = vmatprep.subr.mxu0 %v2321
        %3684 = vmatpush1.msra.mxu0 %v2320
        %3685 = vmatprep.subr.mxu0 %v2328
        %3686 = vmatpush1.msra.mxu0 %v2327
        %3687 = vmatprep.subr.mxu0 %v2335
        %3688 = vmatpush1.msra.mxu0 %v2334
        %3689 = vmatprep.subr.mxu0 %v2342
        %3690 = vmatpush1.msra.mxu0 %v2341
        %3691 = vmatprep.subr.mxu0 %v2349
        %3692 = vmatpush1.msra.mxu0 %v2348
        %3693 = vmatprep.subr.mxu0 %v2356
        %3694 = vmatpush1.msra.mxu0 %v2355
        %3695 = vmatprep.subr.mxu0 %v2363
        %3696 = vmatpush1.msra.mxu0 %v2362
        %3697 = vmatprep.subr.mxu0 %v2370
        %3698 = vmatpush1.msra.mxu0 %v2369
        %3699 = vmatprep.subr.mxu0 %v2377
        %3700 = vmatpush1.msra.mxu0 %v2376
        %3701 = vmatprep.subr.mxu0 %v2384
        %3702 = vmatpush1.msra.mxu0 %v2383
        %3703 = vmatprep.subr.mxu0 %v2391
        %3704 = vmatpush1.msra.mxu0 %v2390
        %3705 = vmatprep.subr.mxu0 %v2398
        %3706 = vmatpush1.msra.mxu0 %v2397
        %3707 = vmatprep.subr.mxu0 %v2405
        %3708 = vmatpush1.msra.mxu0 %v2404
        %3709 = vmatprep.subr.mxu0 %v2412
        %3710 = vmatpush1.msra.mxu0 %v2411
        %3711 = vmatprep.mubr.f32.mxu0 %v1292
        %3712 = vmatmul.mubr.f32.gmra.mrb[0].mxu0 %v1291
        %v3713 = vpop.f32.mrb[0].mxu0
        %v3714 = vadd.f32 %v3643, %v3713
        %v3715 = vpop.f32.mrb[0].mxu0
        %v3716 = vadd.f32 %v3645, %v3715
        %3717 = vdwg.mxu0
        %3718 = vmatprep.subr.mxu0 %v2419
        %3719 = vmatpush1.msra.mxu0 %v2418
        %3720 = vmatprep.subr.mxu0 %v2426
        %3721 = vmatpush1.msra.mxu0 %v2425
        %3722 = vmatprep.subr.mxu0 %v2433
        %3723 = vmatpush1.msra.mxu0 %v2432
        %3724 = vmatprep.subr.mxu0 %v2440
        %3725 = vmatpush1.msra.mxu0 %v2439
        %3726 = vmatprep.subr.mxu0 %v2447
        %3727 = vmatpush1.msra.mxu0 %v2446
        %3728 = vmatprep.subr.mxu0 %v2454
        %3729 = vmatpush1.msra.mxu0 %v2453
        %3730 = vmatprep.subr.mxu0 %v2461
        %3731 = vmatpush1.msra.mxu0 %v2460
        %3732 = vmatprep.subr.mxu0 %v2468
        %3733 = vmatpush1.msra.mxu0 %v2467
        %3734 = vmatprep.subr.mxu0 0.0
        %3735 = vmatpush1.msra.mxu0 0.0
        %3736 = vmatprep.subr.mxu0 0.0
        %3737 = vmatpush1.msra.mxu0 0.0
        %3738 = vmatprep.subr.mxu0 0.0
        %3739 = vmatpush1.msra.mxu0 0.0
        %3740 = vmatprep.subr.mxu0 0.0
        %3741 = vmatpush1.msra.mxu0 0.0
        %3742 = vmatprep.subr.mxu0 0.0
        %3743 = vmatpush1.msra.mxu0 0.0
        %3744 = vmatprep.subr.mxu0 0.0
        %3745 = vmatpush1.msra.mxu0 0.0
        %3746 = vmatprep.subr.mxu0 0.0
        %3747 = vmatpush1.msra.mxu0 0.0
        %3748 = vmatprep.subr.mxu0 0.0
        %3749 = vmatpush1.msra.mxu0 0.0
        %3750 = vmatprep.subr.mxu0 0.0
        %3751 = vmatpush1.msra.mxu0 0.0
        %3752 = vmatprep.subr.mxu0 0.0
        %3753 = vmatpush1.msra.mxu0 0.0
        %3754 = vmatprep.subr.mxu0 0.0
        %3755 = vmatpush1.msra.mxu0 0.0
        %3756 = vmatprep.subr.mxu0 0.0
        %3757 = vmatpush1.msra.mxu0 0.0
        %3758 = vmatprep.subr.mxu0 0.0
        %3759 = vmatpush1.msra.mxu0 0.0
        %3760 = vmatprep.subr.mxu0 0.0
        %3761 = vmatpush1.msra.mxu0 0.0
        %3762 = vmatprep.subr.mxu0 0.0
        %3763 = vmatpush1.msra.mxu0 0.0
        %3764 = vmatprep.subr.mxu0 0.0
        %3765 = vmatpush1.msra.mxu0 0.0
        %3766 = vmatprep.subr.mxu0 0.0
        %3767 = vmatpush1.msra.mxu0 0.0
        %3768 = vmatprep.subr.mxu0 0.0
        %3769 = vmatpush1.msra.mxu0 0.0
        %3770 = vmatprep.subr.mxu0 0.0
        %3771 = vmatpush1.msra.mxu0 0.0
        %3772 = vmatprep.subr.mxu0 0.0
        %3773 = vmatpush1.msra.mxu0 0.0
        %3774 = vmatprep.subr.mxu0 0.0
        %3775 = vmatpush1.msra.mxu0 0.0
        %3776 = vmatprep.subr.mxu0 0.0
        %3777 = vmatpush1.msra.mxu0 0.0
        %3778 = vmatprep.subr.mxu0 0.0
        %3779 = vmatpush1.msra.mxu0 0.0
        %3780 = vmatprep.subr.mxu0 0.0
        %3781 = vmatpush1.msra.mxu0 0.0
        %3782 = vmatprep.mubr.f32.mxu0 0.0
        %3783 = vmatmul.mubr.f32.gmra.mrb[0].mxu0 %v2509
        %v3784 = vpop.f32.mrb[0].mxu0
        %v3785 = vadd.f32 %v3714, %v3784
        %v3786 = vpop.f32.mrb[0].mxu0
        %v3787 = vadd.f32 %v3716, %v3786
        %3788 = vdwg.mxu0
        %3789 = vmatprep.subr.mxu0 0.0
        %3790 = vmatpush1.msra.mxu0 %v1300
        %3791 = vmatprep.subr.mxu0 0.0
        %3792 = vmatpush1.msra.mxu0 %v1307
        %3793 = vmatprep.subr.mxu0 0.0
        %3794 = vmatpush1.msra.mxu0 %v1314
        %3795 = vmatprep.subr.mxu0 0.0
        %3796 = vmatpush1.msra.mxu0 %v1321
        %3797 = vmatprep.subr.mxu0 0.0
        %3798 = vmatpush1.msra.mxu0 %v1328
        %3799 = vmatprep.subr.mxu0 0.0
        %3800 = vmatpush1.msra.mxu0 %v1335
        %3801 = vmatprep.subr.mxu0 0.0
        %3802 = vmatpush1.msra.mxu0 %v1342
        %3803 = vmatprep.subr.mxu0 0.0
        %3804 = vmatpush1.msra.mxu0 %v1349
        %3805 = vmatprep.subr.mxu0 0.0
        %3806 = vmatpush1.msra.mxu0 %v1356
        %3807 = vmatprep.subr.mxu0 0.0
        %3808 = vmatpush1.msra.mxu0 %v1363
        %3809 = vmatprep.subr.mxu0 0.0
        %3810 = vmatpush1.msra.mxu0 %v1370
        %3811 = vmatprep.subr.mxu0 0.0
        %3812 = vmatpush1.msra.mxu0 %v1377
        %3813 = vmatprep.subr.mxu0 0.0
        %3814 = vmatpush1.msra.mxu0 %v1384
        %3815 = vmatprep.subr.mxu0 0.0
        %3816 = vmatpush1.msra.mxu0 %v1391
        %3817 = vmatprep.subr.mxu0 0.0
        %3818 = vmatpush1.msra.mxu0 %v1398
        %3819 = vmatprep.subr.mxu0 0.0
        %3820 = vmatpush1.msra.mxu0 %v1405
        %3821 = vmatprep.subr.mxu0 0.0
        %3822 = vmatpush1.msra.mxu0 %v1412
        %3823 = vmatprep.subr.mxu0 0.0
        %3824 = vmatpush1.msra.mxu0 %v1419
        %3825 = vmatprep.subr.mxu0 0.0
        %3826 = vmatpush1.msra.mxu0 %v1426
        %3827 = vmatprep.subr.mxu0 0.0
        %3828 = vmatpush1.msra.mxu0 %v1433
        %3829 = vmatprep.subr.mxu0 0.0
        %3830 = vmatpush1.msra.mxu0 %v1440
        %3831 = vmatprep.subr.mxu0 0.0
        %3832 = vmatpush1.msra.mxu0 %v1447
        %3833 = vmatprep.subr.mxu0 0.0
        %3834 = vmatpush1.msra.mxu0 %v1454
        %3835 = vmatprep.subr.mxu0 0.0
        %3836 = vmatpush1.msra.mxu0 %v1461
        %3837 = vmatprep.subr.mxu0 0.0
        %3838 = vmatpush1.msra.mxu0 %v1468
        %3839 = vmatprep.subr.mxu0 0.0
        %3840 = vmatpush1.msra.mxu0 %v1475
        %3841 = vmatprep.subr.mxu0 0.0
        %3842 = vmatpush1.msra.mxu0 %v1482
        %3843 = vmatprep.subr.mxu0 0.0
        %3844 = vmatpush1.msra.mxu0 %v1489
        %3845 = vmatprep.subr.mxu0 0.0
        %3846 = vmatpush1.msra.mxu0 %v1496
        %3847 = vmatprep.subr.mxu0 0.0
        %3848 = vmatpush1.msra.mxu0 %v1503
        %3849 = vmatprep.subr.mxu0 0.0
        %3850 = vmatpush1.msra.mxu0 %v1510
        %3851 = vmatprep.subr.mxu0 0.0
        %3852 = vmatpush1.msra.mxu0 %v1517
        %3853 = vmatprep.mubr.f32.mxu0 %v1284
        %3854 = vmatmul.mubr.f32.gmra.mrb[0].mxu0 %v1283
        %v3855 = vpop.f32.mrb[0].mxu0
        %v3856 = vadd.f32 %v2499, %v3855
        %v3857 = vpop.f32.mrb[0].mxu0
        %3858 = vdwg.mxu0
        %3859 = vmatprep.subr.mxu0 0.0
        %3860 = vmatpush1.msra.mxu0 %v1524
        %3861 = vmatprep.subr.mxu0 0.0
        %3862 = vmatpush1.msra.mxu0 %v1531
        %3863 = vmatprep.subr.mxu0 0.0
        %3864 = vmatpush1.msra.mxu0 %v1538
        %3865 = vmatprep.subr.mxu0 0.0
        %3866 = vmatpush1.msra.mxu0 %v1545
        %3867 = vmatprep.subr.mxu0 0.0
        %3868 = vmatpush1.msra.mxu0 %v1552
        %3869 = vmatprep.subr.mxu0 0.0
        %3870 = vmatpush1.msra.mxu0 %v1559
        %3871 = vmatprep.subr.mxu0 0.0
        %3872 = vmatpush1.msra.mxu0 %v1566
        %3873 = vmatprep.subr.mxu0 0.0
        %3874 = vmatpush1.msra.mxu0 %v1573
        %3875 = vmatprep.subr.mxu0 0.0
        %3876 = vmatpush1.msra.mxu0 %v1580
        %3877 = vmatprep.subr.mxu0 0.0
        %3878 = vmatpush1.msra.mxu0 %v1587
        %3879 = vmatprep.subr.mxu0 0.0
        %3880 = vmatpush1.msra.mxu0 %v1594
        %3881 = vmatprep.subr.mxu0 0.0
        %3882 = vmatpush1.msra.mxu0 %v1601
        %3883 = vmatprep.subr.mxu0 0.0
        %3884 = vmatpush1.msra.mxu0 %v1608
        %3885 = vmatprep.subr.mxu0 0.0
        %3886 = vmatpush1.msra.mxu0 %v1615
        %3887 = vmatprep.subr.mxu0 0.0
        %3888 = vmatpush1.msra.mxu0 %v1622
        %3889 = vmatprep.subr.mxu0 0.0
        %3890 = vmatpush1.msra.mxu0 %v1629
        %3891 = vmatprep.subr.mxu0 0.0
        %3892 = vmatpush1.msra.mxu0 %v1636
        %3893 = vmatprep.subr.mxu0 0.0
        %3894 = vmatpush1.msra.mxu0 %v1643
        %3895 = vmatprep.subr.mxu0 0.0
        %3896 = vmatpush1.msra.mxu0 %v1650
        %3897 = vmatprep.subr.mxu0 0.0
        %3898 = vmatpush1.msra.mxu0 %v1657
        %3899 = vmatprep.subr.mxu0 0.0
        %3900 = vmatpush1.msra.mxu0 %v1664
        %3901 = vmatprep.subr.mxu0 0.0
        %3902 = vmatpush1.msra.mxu0 %v1671
        %3903 = vmatprep.subr.mxu0 0.0
        %3904 = vmatpush1.msra.mxu0 %v1678
        %3905 = vmatprep.subr.mxu0 0.0
        %3906 = vmatpush1.msra.mxu0 %v1685
        %3907 = vmatprep.subr.mxu0 0.0
        %3908 = vmatpush1.msra.mxu0 %v1692
        %3909 = vmatprep.subr.mxu0 0.0
        %3910 = vmatpush1.msra.mxu0 %v1699
        %3911 = vmatprep.subr.mxu0 0.0
        %3912 = vmatpush1.msra.mxu0 %v1706
        %3913 = vmatprep.subr.mxu0 0.0
        %3914 = vmatpush1.msra.mxu0 %v1713
        %3915 = vmatprep.subr.mxu0 0.0
        %3916 = vmatpush1.msra.mxu0 %v1720
        %3917 = vmatprep.subr.mxu0 0.0
        %3918 = vmatpush1.msra.mxu0 %v1727
        %3919 = vmatprep.subr.mxu0 0.0
        %3920 = vmatpush1.msra.mxu0 %v1734
        %3921 = vmatprep.subr.mxu0 0.0
        %3922 = vmatpush1.msra.mxu0 %v1741
        %3923 = vmatprep.mubr.f32.mxu0 %v1286
        %3924 = vmatmul.mubr.f32.gmra.mrb[0].mxu0 %v1285
        %v3925 = vpop.f32.mrb[0].mxu0
        %v3926 = vadd.f32 %v3856, %v3925
        %v3927 = vpop.f32.mrb[0].mxu0
        %3928 = vdwg.mxu0
        %3929 = vmatprep.subr.mxu0 0.0
        %3930 = vmatpush1.msra.mxu0 %v1748
        %3931 = vmatprep.subr.mxu0 0.0
        %3932 = vmatpush1.msra.mxu0 %v1755
        %3933 = vmatprep.subr.mxu0 0.0
        %3934 = vmatpush1.msra.mxu0 %v1762
        %3935 = vmatprep.subr.mxu0 0.0
        %3936 = vmatpush1.msra.mxu0 %v1769
        %3937 = vmatprep.subr.mxu0 0.0
        %3938 = vmatpush1.msra.mxu0 %v1776
        %3939 = vmatprep.subr.mxu0 0.0
        %3940 = vmatpush1.msra.mxu0 %v1783
        %3941 = vmatprep.subr.mxu0 0.0
        %3942 = vmatpush1.msra.mxu0 %v1790
        %3943 = vmatprep.subr.mxu0 0.0
        %3944 = vmatpush1.msra.mxu0 %v1797
        %3945 = vmatprep.subr.mxu0 0.0
        %3946 = vmatpush1.msra.mxu0 %v1804
        %3947 = vmatprep.subr.mxu0 0.0
        %3948 = vmatpush1.msra.mxu0 %v1811
        %3949 = vmatprep.subr.mxu0 0.0
        %3950 = vmatpush1.msra.mxu0 %v1818
        %3951 = vmatprep.subr.mxu0 0.0
        %3952 = vmatpush1.msra.mxu0 %v1825
        %3953 = vmatprep.subr.mxu0 0.0
        %3954 = vmatpush1.msra.mxu0 %v1832
        %3955 = vmatprep.subr.mxu0 0.0
        %3956 = vmatpush1.msra.mxu0 %v1839
        %3957 = vmatprep.subr.mxu0 0.0
        %3958 = vmatpush1.msra.mxu0 %v1846
        %3959 = vmatprep.subr.mxu0 0.0
        %3960 = vmatpush1.msra.mxu0 %v1853
        %3961 = vmatprep.subr.mxu0 0.0
        %3962 = vmatpush1.msra.mxu0 %v1860
        %3963 = vmatprep.subr.mxu0 0.0
        %3964 = vmatpush1.msra.mxu0 %v1867
        %3965 = vmatprep.subr.mxu0 0.0
        %3966 = vmatpush1.msra.mxu0 %v1874
        %3967 = vmatprep.subr.mxu0 0.0
        %3968 = vmatpush1.msra.mxu0 %v1881
        %3969 = vmatprep.subr.mxu0 0.0
        %3970 = vmatpush1.msra.mxu0 %v1888
        %3971 = vmatprep.subr.mxu0 0.0
        %3972 = vmatpush1.msra.mxu0 %v1895
        %3973 = vmatprep.subr.mxu0 0.0
        %3974 = vmatpush1.msra.mxu0 %v1902
        %3975 = vmatprep.subr.mxu0 0.0
        %3976 = vmatpush1.msra.mxu0 %v1909
        %3977 = vmatprep.subr.mxu0 0.0
        %3978 = vmatpush1.msra.mxu0 %v1916
        %3979 = vmatprep.subr.mxu0 0.0
        %3980 = vmatpush1.msra.mxu0 %v1923
        %3981 = vmatprep.subr.mxu0 0.0
        %3982 = vmatpush1.msra.mxu0 %v1930
        %3983 = vmatprep.subr.mxu0 0.0
        %3984 = vmatpush1.msra.mxu0 %v1937
        %3985 = vmatprep.subr.mxu0 0.0
        %3986 = vmatpush1.msra.mxu0 %v1944
        %3987 = vmatprep.subr.mxu0 0.0
        %3988 = vmatpush1.msra.mxu0 %v1951
        %3989 = vmatprep.subr.mxu0 0.0
        %3990 = vmatpush1.msra.mxu0 %v1958
        %3991 = vmatprep.subr.mxu0 0.0
        %3992 = vmatpush1.msra.mxu0 %v1965
        %3993 = vmatprep.mubr.f32.mxu0 %v1288
        %3994 = vmatmul.mubr.f32.gmra.mrb[0].mxu0 %v1287
        %v3995 = vpop.f32.mrb[0].mxu0
        %v3996 = vadd.f32 %v3926, %v3995
        %v3997 = vpop.f32.mrb[0].mxu0
        %3998 = vdwg.mxu0
        %3999 = vmatprep.subr.mxu0 0.0
        %4000 = vmatpush1.msra.mxu0 %v1972
        %4001 = vmatprep.subr.mxu0 0.0
        %4002 = vmatpush1.msra.mxu0 %v1979
        %4003 = vmatprep.subr.mxu0 0.0
        %4004 = vmatpush1.msra.mxu0 %v1986
        %4005 = vmatprep.subr.mxu0 0.0
        %4006 = vmatpush1.msra.mxu0 %v1993
        %4007 = vmatprep.subr.mxu0 0.0
        %4008 = vmatpush1.msra.mxu0 %v2000
        %4009 = vmatprep.subr.mxu0 0.0
        %4010 = vmatpush1.msra.mxu0 %v2007
        %4011 = vmatprep.subr.mxu0 0.0
        %4012 = vmatpush1.msra.mxu0 %v2014
        %4013 = vmatprep.subr.mxu0 0.0
        %4014 = vmatpush1.msra.mxu0 %v2021
        %4015 = vmatprep.subr.mxu0 0.0
        %4016 = vmatpush1.msra.mxu0 %v2028
        %4017 = vmatprep.subr.mxu0 0.0
        %4018 = vmatpush1.msra.mxu0 %v2035
        %4019 = vmatprep.subr.mxu0 0.0
        %4020 = vmatpush1.msra.mxu0 %v2042
        %4021 = vmatprep.subr.mxu0 0.0
        %4022 = vmatpush1.msra.mxu0 %v2049
        %4023 = vmatprep.subr.mxu0 0.0
        %4024 = vmatpush1.msra.mxu0 %v2056
        %4025 = vmatprep.subr.mxu0 0.0
        %4026 = vmatpush1.msra.mxu0 %v2063
        %4027 = vmatprep.subr.mxu0 0.0
        %4028 = vmatpush1.msra.mxu0 %v2070
        %4029 = vmatprep.subr.mxu0 0.0
        %4030 = vmatpush1.msra.mxu0 %v2077
        %4031 = vmatprep.subr.mxu0 0.0
        %4032 = vmatpush1.msra.mxu0 %v2084
        %4033 = vmatprep.subr.mxu0 0.0
        %4034 = vmatpush1.msra.mxu0 %v2091
        %4035 = vmatprep.subr.mxu0 0.0
        %4036 = vmatpush1.msra.mxu0 %v2098
        %4037 = vmatprep.subr.mxu0 0.0
        %4038 = vmatpush1.msra.mxu0 %v2105
        %4039 = vmatprep.subr.mxu0 0.0
        %4040 = vmatpush1.msra.mxu0 %v2112
        %4041 = vmatprep.subr.mxu0 0.0
        %4042 = vmatpush1.msra.mxu0 %v2119
        %4043 = vmatprep.subr.mxu0 0.0
        %4044 = vmatpush1.msra.mxu0 %v2126
        %4045 = vmatprep.subr.mxu0 0.0
        %4046 = vmatpush1.msra.mxu0 %v2133
        %4047 = vmatprep.subr.mxu0 0.0
        %4048 = vmatpush1.msra.mxu0 %v2140
        %4049 = vmatprep.subr.mxu0 0.0
        %4050 = vmatpush1.msra.mxu0 %v2147
        %4051 = vmatprep.subr.mxu0 0.0
        %4052 = vmatpush1.msra.mxu0 %v2154
        %4053 = vmatprep.subr.mxu0 0.0
        %4054 = vmatpush1.msra.mxu0 %v2161
        %4055 = vmatprep.subr.mxu0 0.0
        %4056 = vmatpush1.msra.mxu0 %v2168
        %4057 = vmatprep.subr.mxu0 0.0
        %4058 = vmatpush1.msra.mxu0 %v2175
        %4059 = vmatprep.subr.mxu0 0.0
        %4060 = vmatpush1.msra.mxu0 %v2182
        %4061 = vmatprep.subr.mxu0 0.0
        %4062 = vmatpush1.msra.mxu0 %v2189
        %4063 = vmatprep.mubr.f32.mxu0 %v1290
        %4064 = vmatmul.mubr.f32.gmra.mrb[0].mxu0 %v1289
        %v4065 = vpop.f32.mrb[0].mxu0
        %v4066 = vadd.f32 %v3996, %v4065
        %v4067 = vpop.f32.mrb[0].mxu0
        %4068 = vdwg.mxu0
        %4069 = vmatprep.subr.mxu0 0.0
        %4070 = vmatpush1.msra.mxu0 %v2196
        %4071 = vmatprep.subr.mxu0 0.0
        %4072 = vmatpush1.msra.mxu0 %v2203
        %4073 = vmatprep.subr.mxu0 0.0
        %4074 = vmatpush1.msra.mxu0 %v2210
        %4075 = vmatprep.subr.mxu0 0.0
        %4076 = vmatpush1.msra.mxu0 %v2217
        %4077 = vmatprep.subr.mxu0 0.0
        %4078 = vmatpush1.msra.mxu0 %v2224
        %4079 = vmatprep.subr.mxu0 0.0
        %4080 = vmatpush1.msra.mxu0 %v2231
        %4081 = vmatprep.subr.mxu0 0.0
        %4082 = vmatpush1.msra.mxu0 %v2238
        %4083 = vmatprep.subr.mxu0 0.0
        %4084 = vmatpush1.msra.mxu0 %v2245
        %4085 = vmatprep.subr.mxu0 0.0
        %4086 = vmatpush1.msra.mxu0 %v2252
        %4087 = vmatprep.subr.mxu0 0.0
        %4088 = vmatpush1.msra.mxu0 %v2259
        %4089 = vmatprep.subr.mxu0 0.0
        %4090 = vmatpush1.msra.mxu0 %v2266
        %4091 = vmatprep.subr.mxu0 0.0
        %4092 = vmatpush1.msra.mxu0 %v2273
        %4093 = vmatprep.subr.mxu0 0.0
        %4094 = vmatpush1.msra.mxu0 %v2280
        %4095 = vmatprep.subr.mxu0 0.0
        %4096 = vmatpush1.msra.mxu0 %v2287
        %4097 = vmatprep.subr.mxu0 0.0
        %4098 = vmatpush1.msra.mxu0 %v2294
        %4099 = vmatprep.subr.mxu0 0.0
        %4100 = vmatpush1.msra.mxu0 %v2301
        %4101 = vmatprep.subr.mxu0 0.0
        %4102 = vmatpush1.msra.mxu0 %v2308
        %4103 = vmatprep.subr.mxu0 0.0
        %4104 = vmatpush1.msra.mxu0 %v2315
        %4105 = vmatprep.subr.mxu0 0.0
        %4106 = vmatpush1.msra.mxu0 %v2322
        %4107 = vmatprep.subr.mxu0 0.0
        %4108 = vmatpush1.msra.mxu0 %v2329
        %4109 = vmatprep.subr.mxu0 0.0
        %4110 = vmatpush1.msra.mxu0 %v2336
        %4111 = vmatprep.subr.mxu0 0.0
        %4112 = vmatpush1.msra.mxu0 %v2343
        %4113 = vmatprep.subr.mxu0 0.0
        %4114 = vmatpush1.msra.mxu0 %v2350
        %4115 = vmatprep.subr.mxu0 0.0
        %4116 = vmatpush1.msra.mxu0 %v2357
        %4117 = vmatprep.subr.mxu0 0.0
        %4118 = vmatpush1.msra.mxu0 %v2364
        %4119 = vmatprep.subr.mxu0 0.0
        %4120 = vmatpush1.msra.mxu0 %v2371
        %4121 = vmatprep.subr.mxu0 0.0
        %4122 = vmatpush1.msra.mxu0 %v2378
        %4123 = vmatprep.subr.mxu0 0.0
        %4124 = vmatpush1.msra.mxu0 %v2385
        %4125 = vmatprep.subr.mxu0 0.0
        %4126 = vmatpush1.msra.mxu0 %v2392
        %4127 = vmatprep.subr.mxu0 0.0
        %4128 = vmatpush1.msra.mxu0 %v2399
        %4129 = vmatprep.subr.mxu0 0.0
        %4130 = vmatpush1.msra.mxu0 %v2406
        %4131 = vmatprep.subr.mxu0 0.0
        %4132 = vmatpush1.msra.mxu0 %v2413
        %4133 = vmatprep.mubr.f32.mxu0 %v1292
        %4134 = vmatmul.mubr.f32.gmra.mrb[0].mxu0 %v1291
        %v4135 = vpop.f32.mrb[0].mxu0
        %v4136 = vadd.f32 %v4066, %v4135
        %v4137 = vpop.f32.mrb[0].mxu0
        %4138 = vdwg.mxu0
        %4139 = vmatprep.subr.mxu0 0.0
        %4140 = vmatpush1.msra.mxu0 %v2420
        %4141 = vmatprep.subr.mxu0 0.0
        %4142 = vmatpush1.msra.mxu0 %v2427
        %4143 = vmatprep.subr.mxu0 0.0
        %4144 = vmatpush1.msra.mxu0 %v2434
        %4145 = vmatprep.subr.mxu0 0.0
        %4146 = vmatpush1.msra.mxu0 %v2441
        %4147 = vmatprep.subr.mxu0 0.0
        %4148 = vmatpush1.msra.mxu0 %v2448
        %4149 = vmatprep.subr.mxu0 0.0
        %4150 = vmatpush1.msra.mxu0 %v2455
        %4151 = vmatprep.subr.mxu0 0.0
        %4152 = vmatpush1.msra.mxu0 %v2462
        %4153 = vmatprep.subr.mxu0 0.0
        %4154 = vmatpush1.msra.mxu0 %v2469
        %4155 = vmatprep.subr.mxu0 0.0
        %4156 = vmatpush1.msra.mxu0 0.0
        %4157 = vmatprep.subr.mxu0 0.0
        %4158 = vmatpush1.msra.mxu0 0.0
        %4159 = vmatprep.subr.mxu0 0.0
        %4160 = vmatpush1.msra.mxu0 0.0
        %4161 = vmatprep.subr.mxu0 0.0
        %4162 = vmatpush1.msra.mxu0 0.0
        %4163 = vmatprep.subr.mxu0 0.0
        %4164 = vmatpush1.msra.mxu0 0.0
        %4165 = vmatprep.subr.mxu0 0.0
        %4166 = vmatpush1.msra.mxu0 0.0
        %4167 = vmatprep.subr.mxu0 0.0
        %4168 = vmatpush1.msra.mxu0 0.0
        %4169 = vmatprep.subr.mxu0 0.0
        %4170 = vmatpush1.msra.mxu0 0.0
        %4171 = vmatprep.subr.mxu0 0.0
        %4172 = vmatpush1.msra.mxu0 0.0
        %4173 = vmatprep.subr.mxu0 0.0
        %4174 = vmatpush1.msra.mxu0 0.0
        %4175 = vmatprep.subr.mxu0 0.0
        %4176 = vmatpush1.msra.mxu0 0.0
        %4177 = vmatprep.subr.mxu0 0.0
        %4178 = vmatpush1.msra.mxu0 0.0
        %4179 = vmatprep.subr.mxu0 0.0
        %4180 = vmatpush1.msra.mxu0 0.0
        %4181 = vmatprep.subr.mxu0 0.0
        %4182 = vmatpush1.msra.mxu0 0.0
        %4183 = vmatprep.subr.mxu0 0.0
        %4184 = vmatpush1.msra.mxu0 0.0
        %4185 = vmatprep.subr.mxu0 0.0
        %4186 = vmatpush1.msra.mxu0 0.0
        %4187 = vmatprep.subr.mxu0 0.0
        %4188 = vmatpush1.msra.mxu0 0.0
        %4189 = vmatprep.subr.mxu0 0.0
        %4190 = vmatpush1.msra.mxu0 0.0
        %4191 = vmatprep.subr.mxu0 0.0
        %4192 = vmatpush1.msra.mxu0 0.0
        %4193 = vmatprep.subr.mxu0 0.0
        %4194 = vmatpush1.msra.mxu0 0.0
        %4195 = vmatprep.subr.mxu0 0.0
        %4196 = vmatpush1.msra.mxu0 0.0
        %4197 = vmatprep.subr.mxu0 0.0
        %4198 = vmatpush1.msra.mxu0 0.0
        %4199 = vmatprep.subr.mxu0 0.0
        %4200 = vmatpush1.msra.mxu0 0.0
        %4201 = vmatprep.subr.mxu0 0.0
        %4202 = vmatpush1.msra.mxu0 0.0
        %4203 = vmatprep.mubr.f32.mxu0 0.0
        %4204 = vmatmul.mubr.f32.gmra.mrb[0].mxu0 %v2509
        %v4205 = vpop.f32.mrb[0].mxu0
        %v4206 = vadd.f32 %v4136, %v4205
        %v4207 = vpop.f32.mrb[0].mxu0
        %4208 = vdwg.mxu0
        %v4209 = vmax.f32 %v2933, 0.0
        %v4210 = vmax.f32 %v2935, 0.0
        %v4211 = vmax.f32 %v3359, 0.0
        %v4212 = vmax.f32 %v3361, 0.0
        %v4213 = vmax.f32 %v3785, 0.0
        %v4214 = vmax.f32 %v3787, 0.0
        %v4215 = vmax.f32 %v4206, 0.0
        %v4216 = vld [vmem:[#allocation3] sm:$0xff]
        %v4217 = vld [vmem:[%s486] sm:$0xff]
        %v4218 = vld [vmem:[%s486 + $0x8] sm:$0xff]
        %v4219 = vld [vmem:[%s486 + $0x10] sm:$0xff]
        %v4220 = vld [vmem:[%s486 + $0x18] sm:$0xff]
        %v4221 = vld [vmem:[%s486 + $0x20] sm:$0xff]
        %v4222 = vld [vmem:[%s486 + $0x28] sm:$0xff]
        %v4223 = vld [vmem:[%s486 + $0x30] sm:$0xff]
        %v4224 = vld [vmem:[%s486 + $0x38] sm:$0xff]
        %v4225 = vld [vmem:[%s486 + $0x40] sm:$0xff]
        %v4226 = vld [vmem:[%s486 + $0x48] sm:$0xff]
        %v4227 = vld [vmem:[%s486 + $0x50] sm:$0xff]
        %v4228 = vld [vmem:[%s486 + $0x58] sm:$0xff]
        %v4229 = vld [vmem:[%s486 + $0x60] sm:$0xff]
        %v4230 = vld [vmem:[%s486 + $0x68] sm:$0xff]
        %v4231 = vld [vmem:[%s486 + $0x70] sm:$0xff]
        %v4232 = vld [vmem:[%s486 + $0x78] sm:$0xff]
        %v4233 = vld [vmem:[%s486 + $0x80] sm:$0xff]
        %v4234 = vld [vmem:[%s486 + $0x88] sm:$0xff]
        %v4235 = vld [vmem:[%s486 + $0x90] sm:$0xff]
        %v4236 = vld [vmem:[%s486 + $0x98] sm:$0xff]
        %v4237 = vld [vmem:[%s486 + $0xa0] sm:$0xff]
        %v4238 = vld [vmem:[%s486 + $0xa8] sm:$0xff]
        %v4239 = vld [vmem:[%s486 + $0xb0] sm:$0xff]
        %v4240 = vld [vmem:[%s486 + $0xb8] sm:$0xff]
        %v4241 = vld [vmem:[%s486 + $0xc0] sm:$0xff]
        %v4242 = vld [vmem:[%s486 + $0xc8] sm:$0xff]
        %v4243 = vld [vmem:[%s486 + $0xd0] sm:$0xff]
        %v4244 = vld [vmem:[%s486 + $0xd8] sm:$0xff]
        %v4245 = vld [vmem:[%s486 + $0xe0] sm:$0xff]
        %v4246 = vld [vmem:[%s486 + $0xe8] sm:$0xff]
        %v4247 = vld [vmem:[%s486 + $0xf0] sm:$0xff]
        %v4248 = vld [vmem:[%s486 + $0xf8] sm:$0xff]
        %v4249 = vld [vmem:[%s486 + $0x100] sm:$0xff]
        %v4250 = vld [vmem:[%s486 + $0x108] sm:$0xff]
        %v4251 = vld [vmem:[%s486 + $0x110] sm:$0xff]
        %v4252 = vld [vmem:[%s486 + $0x118] sm:$0xff]
        %v4253 = vld [vmem:[%s486 + $0x120] sm:$0xff]
        %v4254 = vld [vmem:[%s486 + $0x128] sm:$0xff]
        %v4255 = vld [vmem:[%s486 + $0x130] sm:$0xff]
        %v4256 = vld [vmem:[%s486 + $0x138] sm:$0xff]
        %v4257 = vld [vmem:[%s486 + $0x140] sm:$0xff]
        %v4258 = vld [vmem:[%s486 + $0x148] sm:$0xff]
        %v4259 = vld [vmem:[%s486 + $0x150] sm:$0xff]
        %v4260 = vld [vmem:[%s486 + $0x158] sm:$0xff]
        %v4261 = vld [vmem:[%s486 + $0x160] sm:$0xff]
        %v4262 = vld [vmem:[%s486 + $0x168] sm:$0xff]
        %v4263 = vld [vmem:[%s486 + $0x170] sm:$0xff]
        %v4264 = vld [vmem:[%s486 + $0x178] sm:$0xff]
        %v4265 = vld [vmem:[%s486 + $0x180] sm:$0xff]
        %v4266 = vld [vmem:[%s486 + $0x188] sm:$0xff]
        %v4267 = vld [vmem:[%s486 + $0x190] sm:$0xff]
        %v4268 = vld [vmem:[%s486 + $0x198] sm:$0xff]
        %v4269 = vld [vmem:[%s486 + $0x1a0] sm:$0xff]
        %v4270 = vld [vmem:[%s486 + $0x1a8] sm:$0xff]
        %v4271 = vld [vmem:[%s486 + $0x1b0] sm:$0xff]
        %v4272 = vld [vmem:[%s486 + $0x1b8] sm:$0xff]
        %v4273 = vld [vmem:[%s486 + $0x1c0] sm:$0xff]
        %v4274 = vld [vmem:[%s486 + $0x1c8] sm:$0xff]
        %v4275 = vld [vmem:[%s486 + $0x1d0] sm:$0xff]
        %v4276 = vld [vmem:[%s486 + $0x1d8] sm:$0xff]
        %v4277 = vld [vmem:[%s486 + $0x1e0] sm:$0xff]
        %v4278 = vld [vmem:[%s486 + $0x1e8] sm:$0xff]
        %v4279 = vld [vmem:[%s486 + $0x1f0] sm:$0xff]
        %v4280 = vld [vmem:[%s486 + $0x1f8] sm:$0xff]
        %v4281 = vld [vmem:[%s486 + $0x200] sm:$0xff]
        %v4282 = vld [vmem:[%s486 + $0x208] sm:$0xff]
        %v4283 = vld [vmem:[%s486 + $0x210] sm:$0xff]
        %v4284 = vld [vmem:[%s486 + $0x218] sm:$0xff]
        %v4285 = vld [vmem:[%s486 + $0x220] sm:$0xff]
        %v4286 = vld [vmem:[%s486 + $0x228] sm:$0xff]
        %v4287 = vld [vmem:[%s486 + $0x230] sm:$0xff]
        %v4288 = vld [vmem:[%s486 + $0x238] sm:$0xff]
        %v4289 = vld [vmem:[%s486 + $0x240] sm:$0xff]
        %v4290 = vld [vmem:[%s486 + $0x248] sm:$0xff]
        %v4291 = vld [vmem:[%s486 + $0x250] sm:$0xff]
        %v4292 = vld [vmem:[%s486 + $0x258] sm:$0xff]
        %v4293 = vld [vmem:[%s486 + $0x260] sm:$0xff]
        %v4294 = vld [vmem:[%s486 + $0x268] sm:$0xff]
        %v4295 = vld [vmem:[%s486 + $0x270] sm:$0xff]
        %v4296 = vld [vmem:[%s486 + $0x278] sm:$0xff]
        %v4297 = vld [vmem:[%s486 + $0x280] sm:$0xff]
        %v4298 = vld [vmem:[%s486 + $0x288] sm:$0xff]
        %v4299 = vld [vmem:[%s486 + $0x290] sm:$0xff]
        %v4300 = vld [vmem:[%s486 + $0x298] sm:$0xff]
        %v4301 = vld [vmem:[%s486 + $0x2a0] sm:$0xff]
        %v4302 = vld [vmem:[%s486 + $0x2a8] sm:$0xff]
        %v4303 = vld [vmem:[%s486 + $0x2b0] sm:$0xff]
        %v4304 = vld [vmem:[%s486 + $0x2b8] sm:$0xff]
        %v4305 = vld [vmem:[%s486 + $0x2c0] sm:$0xff]
        %v4306 = vld [vmem:[%s486 + $0x2c8] sm:$0xff]
        %v4307 = vld [vmem:[%s486 + $0x2d0] sm:$0xff]
        %v4308 = vld [vmem:[%s486 + $0x2d8] sm:$0xff]
        %v4309 = vld [vmem:[%s486 + $0x2e0] sm:$0xff]
        %v4310 = vld [vmem:[%s486 + $0x2e8] sm:$0xff]
        %v4311 = vld [vmem:[%s486 + $0x2f0] sm:$0xff]
        %v4312 = vld [vmem:[%s486 + $0x2f8] sm:$0xff]
        %v4313 = vld [vmem:[%s486 + $0x300] sm:$0xff]
        %v4314 = vld [vmem:[%s486 + $0x308] sm:$0xff]
        %v4315 = vld [vmem:[%s486 + $0x310] sm:$0xff]
        %v4316 = vld [vmem:[%s486 + $0x318] sm:$0xff]
        %v4317 = vld [vmem:[%s486 + $0x320] sm:$0xff]
        %v4318 = vld [vmem:[%s486 + $0x328] sm:$0xff]
        %v4319 = vld [vmem:[%s486 + $0x330] sm:$0xff]
        %v4320 = vld [vmem:[%s486 + $0x338] sm:$0xff]
        %v4321 = vld [vmem:[%s486 + $0x340] sm:$0xff]
        %v4322 = vld [vmem:[%s486 + $0x348] sm:$0xff]
        %v4323 = vld [vmem:[%s486 + $0x350] sm:$0xff]
        %v4324 = vld [vmem:[%s486 + $0x358] sm:$0xff]
        %v4325 = vld [vmem:[%s486 + $0x360] sm:$0xff]
        %v4326 = vld [vmem:[%s486 + $0x368] sm:$0xff]
        %v4327 = vld [vmem:[%s486 + $0x370] sm:$0xff]
        %v4328 = vld [vmem:[%s486 + $0x378] sm:$0xff]
        %4329 = vmatprep.subr.mxu0 0.0
        %4330 = vmatpush1.msra.mxu0 %v4217
        %4331 = vmatprep.subr.mxu0 0.0
        %4332 = vmatpush1.msra.mxu0 %v4218
        %4333 = vmatprep.subr.mxu0 0.0
        %4334 = vmatpush1.msra.mxu0 %v4219
        %4335 = vmatprep.subr.mxu0 0.0
        %4336 = vmatpush1.msra.mxu0 %v4220
        %4337 = vmatprep.subr.mxu0 0.0
        %4338 = vmatpush1.msra.mxu0 %v4221
        %4339 = vmatprep.subr.mxu0 0.0
        %4340 = vmatpush1.msra.mxu0 %v4222
        %4341 = vmatprep.subr.mxu0 0.0
        %4342 = vmatpush1.msra.mxu0 %v4223
        %4343 = vmatprep.subr.mxu0 0.0
        %4344 = vmatpush1.msra.mxu0 %v4224
        %4345 = vmatprep.subr.mxu0 0.0
        %4346 = vmatpush1.msra.mxu0 %v4225
        %4347 = vmatprep.subr.mxu0 0.0
        %4348 = vmatpush1.msra.mxu0 %v4226
        %4349 = vmatprep.subr.mxu0 0.0
        %4350 = vmatpush1.msra.mxu0 %v4227
        %4351 = vmatprep.subr.mxu0 0.0
        %4352 = vmatpush1.msra.mxu0 %v4228
        %4353 = vmatprep.subr.mxu0 0.0
        %4354 = vmatpush1.msra.mxu0 %v4229
        %4355 = vmatprep.subr.mxu0 0.0
        %4356 = vmatpush1.msra.mxu0 %v4230
        %4357 = vmatprep.subr.mxu0 0.0
        %4358 = vmatpush1.msra.mxu0 %v4231
        %4359 = vmatprep.subr.mxu0 0.0
        %4360 = vmatpush1.msra.mxu0 %v4232
        %4361 = vmatprep.subr.mxu0 0.0
        %4362 = vmatpush1.msra.mxu0 %v4233
        %4363 = vmatprep.subr.mxu0 0.0
        %4364 = vmatpush1.msra.mxu0 %v4234
        %4365 = vmatprep.subr.mxu0 0.0
        %4366 = vmatpush1.msra.mxu0 %v4235
        %4367 = vmatprep.subr.mxu0 0.0
        %4368 = vmatpush1.msra.mxu0 %v4236
        %4369 = vmatprep.subr.mxu0 0.0
        %4370 = vmatpush1.msra.mxu0 %v4237
        %4371 = vmatprep.subr.mxu0 0.0
        %4372 = vmatpush1.msra.mxu0 %v4238
        %4373 = vmatprep.subr.mxu0 0.0
        %4374 = vmatpush1.msra.mxu0 %v4239
        %4375 = vmatprep.subr.mxu0 0.0
        %4376 = vmatpush1.msra.mxu0 %v4240
        %4377 = vmatprep.subr.mxu0 0.0
        %4378 = vmatpush1.msra.mxu0 %v4241
        %4379 = vmatprep.subr.mxu0 0.0
        %4380 = vmatpush1.msra.mxu0 %v4242
        %4381 = vmatprep.subr.mxu0 0.0
        %4382 = vmatpush1.msra.mxu0 %v4243
        %4383 = vmatprep.subr.mxu0 0.0
        %4384 = vmatpush1.msra.mxu0 %v4244
        %4385 = vmatprep.subr.mxu0 0.0
        %4386 = vmatpush1.msra.mxu0 %v4245
        %4387 = vmatprep.subr.mxu0 0.0
        %4388 = vmatpush1.msra.mxu0 %v4246
        %4389 = vmatprep.subr.mxu0 0.0
        %4390 = vmatpush1.msra.mxu0 %v4247
        %4391 = vmatprep.subr.mxu0 0.0
        %4392 = vmatpush1.msra.mxu0 %v4248
        %4393 = vmatprep.mubr.f32.mxu0 %v4210
        %4394 = vmatmul.mubr.f32.gmra.mrb[0].mxu0 %v4209
        %v4395 = vpop.f32.mrb[0].mxu0
        %v4396 = vadd.f32 0.0, %v4395
        %v4397 = vpop.f32.mrb[0].mxu0
        %4398 = vdwg.mxu0
        %4399 = vmatprep.subr.mxu0 0.0
        %4400 = vmatpush1.msra.mxu0 %v4249
        %4401 = vmatprep.subr.mxu0 0.0
        %4402 = vmatpush1.msra.mxu0 %v4250
        %4403 = vmatprep.subr.mxu0 0.0
        %4404 = vmatpush1.msra.mxu0 %v4251
        %4405 = vmatprep.subr.mxu0 0.0
        %4406 = vmatpush1.msra.mxu0 %v4252
        %4407 = vmatprep.subr.mxu0 0.0
        %4408 = vmatpush1.msra.mxu0 %v4253
        %4409 = vmatprep.subr.mxu0 0.0
        %4410 = vmatpush1.msra.mxu0 %v4254
        %4411 = vmatprep.subr.mxu0 0.0
        %4412 = vmatpush1.msra.mxu0 %v4255
        %4413 = vmatprep.subr.mxu0 0.0
        %4414 = vmatpush1.msra.mxu0 %v4256
        %4415 = vmatprep.subr.mxu0 0.0
        %4416 = vmatpush1.msra.mxu0 %v4257
        %4417 = vmatprep.subr.mxu0 0.0
        %4418 = vmatpush1.msra.mxu0 %v4258
        %4419 = vmatprep.subr.mxu0 0.0
        %4420 = vmatpush1.msra.mxu0 %v4259
        %4421 = vmatprep.subr.mxu0 0.0
        %4422 = vmatpush1.msra.mxu0 %v4260
        %4423 = vmatprep.subr.mxu0 0.0
        %4424 = vmatpush1.msra.mxu0 %v4261
        %4425 = vmatprep.subr.mxu0 0.0
        %4426 = vmatpush1.msra.mxu0 %v4262
        %4427 = vmatprep.subr.mxu0 0.0
        %4428 = vmatpush1.msra.mxu0 %v4263
        %4429 = vmatprep.subr.mxu0 0.0
        %4430 = vmatpush1.msra.mxu0 %v4264
        %4431 = vmatprep.subr.mxu0 0.0
        %4432 = vmatpush1.msra.mxu0 %v4265
        %4433 = vmatprep.subr.mxu0 0.0
        %4434 = vmatpush1.msra.mxu0 %v4266
        %4435 = vmatprep.subr.mxu0 0.0
        %4436 = vmatpush1.msra.mxu0 %v4267
        %4437 = vmatprep.subr.mxu0 0.0
        %4438 = vmatpush1.msra.mxu0 %v4268
        %4439 = vmatprep.subr.mxu0 0.0
        %4440 = vmatpush1.msra.mxu0 %v4269
        %4441 = vmatprep.subr.mxu0 0.0
        %4442 = vmatpush1.msra.mxu0 %v4270
        %4443 = vmatprep.subr.mxu0 0.0
        %4444 = vmatpush1.msra.mxu0 %v4271
        %4445 = vmatprep.subr.mxu0 0.0
        %4446 = vmatpush1.msra.mxu0 %v4272
        %4447 = vmatprep.subr.mxu0 0.0
        %4448 = vmatpush1.msra.mxu0 %v4273
        %4449 = vmatprep.subr.mxu0 0.0
        %4450 = vmatpush1.msra.mxu0 %v4274
        %4451 = vmatprep.subr.mxu0 0.0
        %4452 = vmatpush1.msra.mxu0 %v4275
        %4453 = vmatprep.subr.mxu0 0.0
        %4454 = vmatpush1.msra.mxu0 %v4276
        %4455 = vmatprep.subr.mxu0 0.0
        %4456 = vmatpush1.msra.mxu0 %v4277
        %4457 = vmatprep.subr.mxu0 0.0
        %4458 = vmatpush1.msra.mxu0 %v4278
        %4459 = vmatprep.subr.mxu0 0.0
        %4460 = vmatpush1.msra.mxu0 %v4279
        %4461 = vmatprep.subr.mxu0 0.0
        %4462 = vmatpush1.msra.mxu0 %v4280
        %4463 = vmatprep.mubr.f32.mxu0 %v4212
        %4464 = vmatmul.mubr.f32.gmra.mrb[0].mxu0 %v4211
        %v4465 = vpop.f32.mrb[0].mxu0
        %v4466 = vadd.f32 %v4396, %v4465
        %v4467 = vpop.f32.mrb[0].mxu0
        %4468 = vdwg.mxu0
        %4469 = vmatprep.subr.mxu0 0.0
        %4470 = vmatpush1.msra.mxu0 %v4281
        %4471 = vmatprep.subr.mxu0 0.0
        %4472 = vmatpush1.msra.mxu0 %v4282
        %4473 = vmatprep.subr.mxu0 0.0
        %4474 = vmatpush1.msra.mxu0 %v4283
        %4475 = vmatprep.subr.mxu0 0.0
        %4476 = vmatpush1.msra.mxu0 %v4284
        %4477 = vmatprep.subr.mxu0 0.0
        %4478 = vmatpush1.msra.mxu0 %v4285
        %4479 = vmatprep.subr.mxu0 0.0
        %4480 = vmatpush1.msra.mxu0 %v4286
        %4481 = vmatprep.subr.mxu0 0.0
        %4482 = vmatpush1.msra.mxu0 %v4287
        %4483 = vmatprep.subr.mxu0 0.0
        %4484 = vmatpush1.msra.mxu0 %v4288
        %4485 = vmatprep.subr.mxu0 0.0
        %4486 = vmatpush1.msra.mxu0 %v4289
        %4487 = vmatprep.subr.mxu0 0.0
        %4488 = vmatpush1.msra.mxu0 %v4290
        %4489 = vmatprep.subr.mxu0 0.0
        %4490 = vmatpush1.msra.mxu0 %v4291
        %4491 = vmatprep.subr.mxu0 0.0
        %4492 = vmatpush1.msra.mxu0 %v4292
        %4493 = vmatprep.subr.mxu0 0.0
        %4494 = vmatpush1.msra.mxu0 %v4293
        %4495 = vmatprep.subr.mxu0 0.0
        %4496 = vmatpush1.msra.mxu0 %v4294
        %4497 = vmatprep.subr.mxu0 0.0
        %4498 = vmatpush1.msra.mxu0 %v4295
        %4499 = vmatprep.subr.mxu0 0.0
        %4500 = vmatpush1.msra.mxu0 %v4296
        %4501 = vmatprep.subr.mxu0 0.0
        %4502 = vmatpush1.msra.mxu0 %v4297
        %4503 = vmatprep.subr.mxu0 0.0
        %4504 = vmatpush1.msra.mxu0 %v4298
        %4505 = vmatprep.subr.mxu0 0.0
        %4506 = vmatpush1.msra.mxu0 %v4299
        %4507 = vmatprep.subr.mxu0 0.0
        %4508 = vmatpush1.msra.mxu0 %v4300
        %4509 = vmatprep.subr.mxu0 0.0
        %4510 = vmatpush1.msra.mxu0 %v4301
        %4511 = vmatprep.subr.mxu0 0.0
        %4512 = vmatpush1.msra.mxu0 %v4302
        %4513 = vmatprep.subr.mxu0 0.0
        %4514 = vmatpush1.msra.mxu0 %v4303
        %4515 = vmatprep.subr.mxu0 0.0
        %4516 = vmatpush1.msra.mxu0 %v4304
        %4517 = vmatprep.subr.mxu0 0.0
        %4518 = vmatpush1.msra.mxu0 %v4305
        %4519 = vmatprep.subr.mxu0 0.0
        %4520 = vmatpush1.msra.mxu0 %v4306
        %4521 = vmatprep.subr.mxu0 0.0
        %4522 = vmatpush1.msra.mxu0 %v4307
        %4523 = vmatprep.subr.mxu0 0.0
        %4524 = vmatpush1.msra.mxu0 %v4308
        %4525 = vmatprep.subr.mxu0 0.0
        %4526 = vmatpush1.msra.mxu0 %v4309
        %4527 = vmatprep.subr.mxu0 0.0
        %4528 = vmatpush1.msra.mxu0 %v4310
        %4529 = vmatprep.subr.mxu0 0.0
        %4530 = vmatpush1.msra.mxu0 %v4311
        %4531 = vmatprep.subr.mxu0 0.0
        %4532 = vmatpush1.msra.mxu0 %v4312
        %4533 = vmatprep.mubr.f32.mxu0 %v4214
        %4534 = vmatmul.mubr.f32.gmra.mrb[0].mxu0 %v4213
        %v4535 = vpop.f32.mrb[0].mxu0
        %v4536 = vadd.f32 %v4466, %v4535
        %v4537 = vpop.f32.mrb[0].mxu0
        %4538 = vdwg.mxu0
        %4539 = vmatprep.subr.mxu0 0.0
        %4540 = vmatpush1.msra.mxu0 %v4313
        %4541 = vmatprep.subr.mxu0 0.0
        %4542 = vmatpush1.msra.mxu0 %v4314
        %4543 = vmatprep.subr.mxu0 0.0
        %4544 = vmatpush1.msra.mxu0 %v4315
        %4545 = vmatprep.subr.mxu0 0.0
        %4546 = vmatpush1.msra.mxu0 %v4316
        %4547 = vmatprep.subr.mxu0 0.0
        %4548 = vmatpush1.msra.mxu0 %v4317
        %4549 = vmatprep.subr.mxu0 0.0
        %4550 = vmatpush1.msra.mxu0 %v4318
        %4551 = vmatprep.subr.mxu0 0.0
        %4552 = vmatpush1.msra.mxu0 %v4319
        %4553 = vmatprep.subr.mxu0 0.0
        %4554 = vmatpush1.msra.mxu0 %v4320
        %4555 = vmatprep.subr.mxu0 0.0
        %4556 = vmatpush1.msra.mxu0 %v4321
        %4557 = vmatprep.subr.mxu0 0.0
        %4558 = vmatpush1.msra.mxu0 %v4322
        %4559 = vmatprep.subr.mxu0 0.0
        %4560 = vmatpush1.msra.mxu0 %v4323
        %4561 = vmatprep.subr.mxu0 0.0
        %4562 = vmatpush1.msra.mxu0 %v4324
        %4563 = vmatprep.subr.mxu0 0.0
        %4564 = vmatpush1.msra.mxu0 %v4325
        %4565 = vmatprep.subr.mxu0 0.0
        %4566 = vmatpush1.msra.mxu0 %v4326
        %4567 = vmatprep.subr.mxu0 0.0
        %4568 = vmatpush1.msra.mxu0 %v4327
        %4569 = vmatprep.subr.mxu0 0.0
        %4570 = vmatpush1.msra.mxu0 %v4328
        %4571 = vmatprep.subr.mxu0 0.0
        %4572 = vmatpush1.msra.mxu0 0.0
        %4573 = vmatprep.subr.mxu0 0.0
        %4574 = vmatpush1.msra.mxu0 0.0
        %4575 = vmatprep.subr.mxu0 0.0
        %4576 = vmatpush1.msra.mxu0 0.0
        %4577 = vmatprep.subr.mxu0 0.0
        %4578 = vmatpush1.msra.mxu0 0.0
        %4579 = vmatprep.subr.mxu0 0.0
        %4580 = vmatpush1.msra.mxu0 0.0
        %4581 = vmatprep.subr.mxu0 0.0
        %4582 = vmatpush1.msra.mxu0 0.0
        %4583 = vmatprep.subr.mxu0 0.0
        %4584 = vmatpush1.msra.mxu0 0.0
        %4585 = vmatprep.subr.mxu0 0.0
        %4586 = vmatpush1.msra.mxu0 0.0
        %4587 = vmatprep.subr.mxu0 0.0
        %4588 = vmatpush1.msra.mxu0 0.0
        %4589 = vmatprep.subr.mxu0 0.0
        %4590 = vmatpush1.msra.mxu0 0.0
        %4591 = vmatprep.subr.mxu0 0.0
        %4592 = vmatpush1.msra.mxu0 0.0
        %4593 = vmatprep.subr.mxu0 0.0
        %4594 = vmatpush1.msra.mxu0 0.0
        %4595 = vmatprep.subr.mxu0 0.0
        %4596 = vmatpush1.msra.mxu0 0.0
        %4597 = vmatprep.subr.mxu0 0.0
        %4598 = vmatpush1.msra.mxu0 0.0
        %4599 = vmatprep.subr.mxu0 0.0
        %4600 = vmatpush1.msra.mxu0 0.0
        %4601 = vmatprep.subr.mxu0 0.0
        %4602 = vmatpush1.msra.mxu0 0.0
        %4603 = vmatprep.mubr.f32.mxu0 0.0
        %4604 = vmatmul.mubr.f32.gmra.mrb[0].mxu0 %v4215
        %v4605 = vpop.f32.mrb[0].mxu0
        %v4606 = vadd.f32 %v4536, %v4605
        %v4607 = vpop.f32.mrb[0].mxu0
        %4608 = vdwg.mxu0
        %v4609 = vadd.f32 %v4216, %v4606
        %4610 = vst [vmem:[#allocation3] sm:$0xff] %v4609
        %p4611 = scmp.eq.s32.totalorder %s37, 2
        // Predicated region
        $region97: #{tpu_custom_call.1} parent=59 // pred_check
          %p4612 = pneg %p4611
        $region98: #{tpu_custom_call.1} parent=59 // pred_check_branch
          %4614 = sbr.rel (%p4612) target = $region100
        $region99: #{tpu_custom_call.1} parent=59 // pred_region
          %v4615 = vld [vmem:[#allocation3] sm:$0xff]
          %v4616 = vmax.f32 %v4615, 0.0
          %v4617 = vld [vmem:[#allocation16] sm:$0x1]
          %v4619 = vlaneseq
          %v4620 = vshrl.u32 %v4619, 7
          %v4621 = vsub.s32 0, %v4620
          %v4622 = vrot.slane %v4617, %v4621
          %v4624 = vmul.f32 %v4616, %v4622
          %4625 = vadd.xlane.f32.xlu0 %v4624
          %v4626 = vpop.xlane.xlu0 %4625
          %v4627 = vld [vmem:[#allocation4] sm:$0x1]
          %v4629 = vlaneseq
          %v4630 = vshrl.u32 %v4629, 7
          %v4631 = vsub.s32 0, %v4630
          %v4632 = vrot.slane %v4627, %v4631
          %v4634 = vadd.f32 %v4626, %v4632
          %vm4635 = vcmask 7168
          %4636 = vst.msk [vmem:[%s546] sm:$0xff] %vm4635, %v4634
        $region100: #{tpu_custom_call.1} parent=59 // pred_fallthru
          _
        %p4637 = scmp.lt.s32.totalorder %s36, 0
        %s4638 = scalar_select %p4637, %s36, 0
        %s4639 = smul.addr %s4638, 8
        %s4640 = scalar_lea.vmem %s10, %s4639
        // Predicated region
        $region101: #{tpu_custom_call.1} parent=59 // pred_check
          %p4641 = pneg %p297
        $region102: #{tpu_custom_call.1} parent=59 // pred_check_branch
          %4643 = sbr.rel (%p4641) target = $region104
        $region103: #{tpu_custom_call.1} parent=59 // pred_region
          _
        $region104: #{tpu_custom_call.1} parent=59 // pred_fallthru
          _
        // Predicated region
        $region105: #{tpu_custom_call.1} parent=59 // pred_check
          %p4644 = pneg %p297
        $region106: #{tpu_custom_call.1} parent=59 // pred_check_branch
          %4646 = sbr.rel (%p4644) target = $region108
        $region107: #{tpu_custom_call.1} parent=59 // pred_region
          %p4647 = scmp.lt.s32.totalorder %s36, 0
          %s4648 = scalar_select %p4647, %s36, 0
          %s4649 = smul.addr %s4648, 8
          %s4650 = scalar_lea.vmem %s10, %s4649
        $region108: #{tpu_custom_call.1} parent=59 // pred_fallthru
          _
      $region60: #{tpu_custom_call.1} parent=5 // pred_fallthru
        _
      %p4651 = scmp.le.s32.totalorder 2, %s27
      // Predicated region
      $region109: #{tpu_custom_call.1} parent=5 // pred_check
        %p4652 = pneg %p4651
      $region110: #{tpu_custom_call.1} parent=5 // pred_check_branch
        %4654 = sbr.rel (%p4652) target = $region112
      $region111: #{tpu_custom_call.1} parent=5 // pred_region
        %s4655 = ssub.s32 %s27, 2
      $region112: #{tpu_custom_call.1} parent=5 // pred_fallthru
        _
    $region6: #{tpu_custom_call.1} parent=1 // loop_footer
      %s31 = sadd.s32 1, %s27
    $region7: #{tpu_custom_call.1} parent=1 // loop_footer_branch
      %26 = sbr.rel target = $region3
    $region8: #{tpu_custom_call.1} parent=1 // loop_exit
      _
    %4656 = vsyncpa [#allocation6], 1
    %s4657 = scalar_lea.sflag [#allocation6], 1
    %4658 = vsyncpa %s4657, 1
    %4659 = vsyncpa [#allocation8], 1
    %4660 = vsyncpa [#allocation11], 1
    %s4661 = scalar_lea.sflag [#allocation11], 1
    %4662 = vsyncpa %s4661, 1
    %4663 = vsyncpa [#allocation14], 1
    %s4664 = scalar_lea.sflag [#allocation14], 1
    %4665 = vsyncpa %s4664, 1
    %4666 = vsyncpa [#allocation17], 1

</llo_original>
